<compile_context>
chip_gen: v7x
topology: tpu7x:2x2x1
jax: 0.10.0
libtpu: 0.0.40
codegen_flags: <defaults>
</compile_context>

<pallas_src>
import functools

import jax
import jax.numpy as jnp
from jax.experimental import pallas as pl
from jax.experimental.pallas import tpu as pltpu

NUM_CLASSES = 18
FEAT_DIM = 2048          # Linear(2048, num_classes) => trunk output channels
PADDED_CLASSES = 128     # lane-dense output width


def gap_fc_kernel(x_ref, w_ref, b_ref, o_ref, *, inv_hw):
    # x_ref: (BT, C, HW)   trunk features, NCHW layout with HW flattened
    # w_ref: (C, NP)       fc weight, pre-transposed + zero-padded to NP lanes
    # b_ref: (1, NP)       fc bias, zero-padded
    # o_ref: (BT, NP)      padded logits
    x = x_ref[...].astype(jnp.float32)
    feats = jnp.sum(x, axis=2) * inv_hw                      # GAP -> (BT, C)
    o_ref[...] = (
        jnp.dot(feats, w_ref[...], preferred_element_type=jnp.float32)
        + b_ref[...]
    ).astype(o_ref.dtype)


def _vmem_plan():
    """(per-input-buffer budget, scoped VMEM limit), sized per TPU generation."""
    try:
        cap = pltpu.get_tpu_info().vmem_capacity_bytes
    except Exception:
        cap = 64 << 20                       # conservative (v7x-like) fallback
    if cap >= (96 << 20):                    # v5e / v6e: 128 MiB VMEM
        return 24 << 20, 80 << 20
    return 8 << 20, 32 << 20                 # v7x: 64 MiB physical, keep headroom


def baseline_resnet_head(feat_nchw, fc_w, fc_b):
    """feat_nchw: (B, 2048, H, W) trunk features (NCHW, like PyTorch).
    fc_w: (num_classes, 2048), fc_b: (num_classes,)  -- PyTorch Linear layout.
    Returns logits (B, num_classes)."""
    B, C, H, W = feat_nchw.shape
    assert C == FEAT_DIM
    HW = H * W
    NP = PADDED_CLASSES

    # Free view (no data movement): NCHW -> (B, C, HW).
    x = feat_nchw.reshape(B, C, HW)

    # Tiny parameter plumbing: weight -> (C, NP), bias -> (1, NP), zero-padded.
    w_pad = jnp.pad(jnp.transpose(fc_w).astype(jnp.float32),
                    ((0, 0), (0, NP - NUM_CLASSES)))
    b_pad = jnp.pad(fc_b.astype(jnp.float32).reshape(1, NUM_CLASSES),
                    ((0, 0), (0, NP - NUM_CLASSES)))

    # Batch tile size: double-buffered feature tiles must fit the VMEM budget.
    budget, vmem_limit = _vmem_plan()
    itemsize = jnp.dtype(x.dtype).itemsize
    lane_hw = pl.cdiv(HW, 128) * 128                       # VMEM lane padding
    row_bytes = C * lane_hw * itemsize                     # one batch row in VMEM
    bt = max(1, budget // (2 * row_bytes))                 # 2 = double buffering
    if bt >= B:
        bt = B                                             # whole batch per block
    else:
        bt = min(B, max(8, (bt // 8) * 8))                 # keep out-block tileable
    grid = (pl.cdiv(B, bt),)

    cost = pl.CostEstimate(
        flops=2 * B * C * NP + B * C * HW,
        transcendentals=0,
        bytes_accessed=B * C * HW * itemsize + C * NP * 4 + (1 + B) * NP * 4,
    )

    out_padded = pl.pallas_call(
        functools.partial(gap_fc_kernel, inv_hw=1.0 / HW),
        out_shape=jax.ShapeDtypeStruct((B, NP), jnp.float32),
        grid=grid,
        in_specs=[
            pl.BlockSpec((bt, C, HW), lambda i: (i, 0, 0)),
            pl.BlockSpec((C, NP), lambda i: (0, 0)),       # constant block: fetched once
            pl.BlockSpec((1, NP), lambda i: (0, 0)),
        ],
        out_specs=pl.BlockSpec((bt, NP), lambda i: (i, 0)),
        compiler_params=pltpu.CompilerParams(
            dimension_semantics=("parallel",),
            vmem_limit_bytes=vmem_limit,
        ),
        cost_estimate=cost,
    )(x, w_pad, b_pad)

    return out_padded[:, :NUM_CLASSES]


if __name__ == "__main__":
    key = jax.random.PRNGKey(0)
    k_feat, k_w, k_b = jax.random.split(key, 3)

    # Small shapes consistent with the module: trunk features (B, 2048, H, W)
    B, H, W = 2, 4, 4
    feats = jax.random.normal(k_feat, (B, FEAT_DIM, H, W), dtype=jnp.float32)

    # Deterministic synthetic parameters for fc = Linear(2048, 18)
    fc_w = jax.random.normal(k_w, (NUM_CLASSES, FEAT_DIM), dtype=jnp.float32) * 0.02
    fc_b = jax.random.normal(k_b, (NUM_CLASSES,), dtype=jnp.float32) * 0.02

    out = baseline_resnet_head(feats, fc_w, fc_b)
    out = jax.block_until_ready(out)

    # Pure-JAX reference of the same head (GAP + Linear), for correctness
    ref = feats.mean(axis=(2, 3)) @ fc_w.T + fc_b
    assert out.shape == (B, NUM_CLASSES)
    assert jnp.allclose(out, ref, atol=1e-3, rtol=1e-3), "mismatch vs reference"

    print("KERNEL_OK")
</pallas_src>

<mosaic_0001>
module attributes {stable_mosaic.version = 11 : i64} {
  func.func @gap_fc_kernel(%arg0: i32, %arg1: memref<2x2048x16xf32, #tpu.memory_space<vmem>>, %arg2: memref<2048x128xf32, #tpu.memory_space<vmem>>, %arg3: memref<1x128xf32, #tpu.memory_space<vmem>>, %arg4: memref<2x128xf32, #tpu.memory_space<vmem>>) attributes {dimension_semantics = [#tpu.dimension_semantics<parallel>], iteration_bounds = array<i64: 1>, scalar_prefetch = 0 : i64, scratch_operands = 0 : i64, tpu.core_type = #tpu.core_type<tc>, window_params = [{transform_indices = @transform_0, window_bounds = array<i64: 2, 2048, 16>}, {pipeline_mode = #tpu.pipeline_mode<synchronous>, transform_indices = @transform_1, window_bounds = array<i64: 2048, 128>}, {pipeline_mode = #tpu.pipeline_mode<synchronous>, transform_indices = @transform_2, window_bounds = array<i64: 1, 128>}, {transform_indices = @transform_3, window_bounds = array<i64: 2, 128>}]} {
    %c0 = arith.constant 0 : index
    %c0_0 = arith.constant 0 : index
    %c0_1 = arith.constant 0 : index
    %0 = vector.load %arg1[%c0, %c0_0, %c0_1] : memref<2x2048x16xf32, #tpu.memory_space<vmem>>, vector<2x2048x16xf32>
    %cst = arith.constant dense<0.000000e+00> : vector<2x2048xf32>
    %1 = vector.multi_reduction <add>, %0, %cst [2] : vector<2x2048x16xf32> to vector<2x2048xf32>
    %cst_2 = arith.constant 6.250000e-02 : f32
    %2 = vector.broadcast %cst_2 : f32 to vector<2x2048xf32>
    %3 = arith.mulf %1, %2 : vector<2x2048xf32>
    %c0_3 = arith.constant 0 : index
    %c0_4 = arith.constant 0 : index
    %4 = vector.load %arg2[%c0_3, %c0_4] : memref<2048x128xf32, #tpu.memory_space<vmem>>, vector<2048x128xf32>
    %cst_5 = arith.constant dense<0.000000e+00> : vector<2x128xf32>
    %5 = tpu.matmul %3, %4, %cst_5 {dimension_numbers = #tpu.dot_dimension_numbers<[1], [0], [0], [1], [0, 0, 1, 1], [], []>} : vector<2x2048xf32>, vector<2048x128xf32>, vector<2x128xf32> -> vector<2x128xf32>
    %c0_6 = arith.constant 0 : index
    %c0_7 = arith.constant 0 : index
    %6 = vector.load %arg3[%c0_6, %c0_7] : memref<1x128xf32, #tpu.memory_space<vmem>>, vector<1x128xf32>
    %7 = vector.broadcast %6 : vector<1x128xf32> to vector<2x128xf32>
    %8 = arith.addf %5, %7 : vector<2x128xf32>
    %c0_8 = arith.constant 0 : index
    %c0_9 = arith.constant 0 : index
    %9 = vector.load %arg4[%c0_8, %c0_9] : memref<2x128xf32, #tpu.memory_space<vmem>>, vector<2x128xf32>
    tpu.vector_store %arg4[%c0_8, %c0_9], %8 {strides = array<i32>} : memref<2x128xf32, #tpu.memory_space<vmem>>, vector<2x128xf32>,
    return
  }
  func.func @transform_0(%arg0: i32) -> (i32, i32, i32) {
    %c0_i32 = arith.constant 0 : i32
    %c0_i32_0 = arith.constant 0 : i32
    %c0_i32_1 = arith.constant 0 : i32
    return %arg0, %c0_i32, %c0_i32_0 : i32, i32, i32
  }
  func.func @transform_1(%arg0: i32) -> (i32, i32) {
    %c0_i32 = arith.constant 0 : i32
    %c0_i32_0 = arith.constant 0 : i32
    %c0_i32_1 = arith.constant 0 : i32
    return %c0_i32, %c0_i32_0 : i32, i32
  }
  func.func @transform_2(%arg0: i32) -> (i32, i32) {
    %c0_i32 = arith.constant 0 : i32
    %c0_i32_0 = arith.constant 0 : i32
    %c0_i32_1 = arith.constant 0 : i32
    return %c0_i32, %c0_i32_0 : i32, i32
  }
  func.func @transform_3(%arg0: i32) -> (i32, i32) {
    %c0_i32 = arith.constant 0 : i32
    %c0_i32_0 = arith.constant 0 : i32
    return %arg0, %c0_i32 : i32, i32
  }
}

</mosaic_0001>

<llo_original>
// kernel: tpu_custom_call.1
$region0: #{tpu_custom_call.1}
  #allocation0 [shape = 'u32[]', space=smem, size = 0x4, offset = 0x4, fixed_abs, tag = 'smem constant byte address 0x4 - core index']
  #allocation1 [shape = 'u32[144,128]{1,0:T(1,128)}', space=vmem, size = 0x12000, scoped, tag = 'internal scratch']
  %s0 = inlined_call_operand.vmem [shape: f32[2,2048,16], index: 0, kind: input, shape index: {}]
  %s1 = inlined_call_operand.vmem [shape: f32[2048,128], index: 1, kind: input, shape index: {}]
  %s2 = inlined_call_operand.vmem [shape: f32[1,128], index: 2, kind: input, shape index: {}]
  %s3 = inlined_call_operand.hbm [shape: f32[2,128], index: 3, kind: output, shape index: {}]
  %s4 = sld [smem:[#allocation0]]
  $region22: #{tpu_custom_call.1} parent=0
    _
  %s6 = ssub.s32 1, %s4
  %s7 = scalar_select 0, %s6, %s4
  $region1: #{tpu_custom_call.1} parent=0
    #allocation2 [shape = 'u8[1024]{0}', space=vmem, size = 0x400, scoped, tag = 'output window, operand 0, single buffered']
    #allocation3 [shape = 's32[1]{0}', space=sflag, size = 0x4, scoped, tag = 'scoped memory for tpu_custom_call.1']
    %8 = vsyncpa [#allocation3], 0
    // Predicated region
    $region2: #{tpu_custom_call.1} parent=1 // pred_check
      _
    $region3: #{tpu_custom_call.1} parent=1 // pred_check_branch
      %10 = sbr.rel (0) target = $region5
    $region4: #{tpu_custom_call.1} parent=1 // pred_region
      _
    $region5: #{tpu_custom_call.1} parent=1 // pred_fallthru
      _
    // Predicated region
    $region6: #{tpu_custom_call.1} parent=1 // pred_check
      _
    $region7: #{tpu_custom_call.1} parent=1 // pred_check_branch
      %12 = sbr.rel (0) target = $region9
    $region8: #{tpu_custom_call.1} parent=1 // pred_region
      _
    $region9: #{tpu_custom_call.1} parent=1 // pred_fallthru
      _
    // Predicated region
    $region10: #{tpu_custom_call.1} parent=1 // pred_check
      _
    $region11: #{tpu_custom_call.1} parent=1 // pred_check_branch
      %14 = sbr.rel (0) target = $region13
    $region12: #{tpu_custom_call.1} parent=1 // pred_region
      _
    $region13: #{tpu_custom_call.1} parent=1 // pred_fallthru
      _
    %v15 = vld [vmem:[%s0] sm:$0xff]
    %v16 = vld [vmem:[%s0 + $0x8] sm:$0xff]
    %v17 = vld [vmem:[%s0 + $0x10] sm:$0xff]
    %v18 = vld [vmem:[%s0 + $0x18] sm:$0xff]
    %v19 = vld [vmem:[%s0 + $0x20] sm:$0xff]
    %v20 = vld [vmem:[%s0 + $0x28] sm:$0xff]
    %v21 = vld [vmem:[%s0 + $0x30] sm:$0xff]
    %v22 = vld [vmem:[%s0 + $0x38] sm:$0xff]
    %v23 = vld [vmem:[%s0 + $0x40] sm:$0xff]
    %v24 = vld [vmem:[%s0 + $0x48] sm:$0xff]
    %v25 = vld [vmem:[%s0 + $0x50] sm:$0xff]
    %v26 = vld [vmem:[%s0 + $0x58] sm:$0xff]
    %v27 = vld [vmem:[%s0 + $0x60] sm:$0xff]
    %v28 = vld [vmem:[%s0 + $0x68] sm:$0xff]
    %v29 = vld [vmem:[%s0 + $0x70] sm:$0xff]
    %v30 = vld [vmem:[%s0 + $0x78] sm:$0xff]
    %v31 = vld [vmem:[%s0 + $0x80] sm:$0xff]
    %v32 = vld [vmem:[%s0 + $0x88] sm:$0xff]
    %v33 = vld [vmem:[%s0 + $0x90] sm:$0xff]
    %v34 = vld [vmem:[%s0 + $0x98] sm:$0xff]
    %v35 = vld [vmem:[%s0 + $0xa0] sm:$0xff]
    %v36 = vld [vmem:[%s0 + $0xa8] sm:$0xff]
    %v37 = vld [vmem:[%s0 + $0xb0] sm:$0xff]
    %v38 = vld [vmem:[%s0 + $0xb8] sm:$0xff]
    %v39 = vld [vmem:[%s0 + $0xc0] sm:$0xff]
    %v40 = vld [vmem:[%s0 + $0xc8] sm:$0xff]
    %v41 = vld [vmem:[%s0 + $0xd0] sm:$0xff]
    %v42 = vld [vmem:[%s0 + $0xd8] sm:$0xff]
    %v43 = vld [vmem:[%s0 + $0xe0] sm:$0xff]
    %v44 = vld [vmem:[%s0 + $0xe8] sm:$0xff]
    %v45 = vld [vmem:[%s0 + $0xf0] sm:$0xff]
    %v46 = vld [vmem:[%s0 + $0xf8] sm:$0xff]
    %v47 = vld [vmem:[%s0 + $0x100] sm:$0xff]
    %v48 = vld [vmem:[%s0 + $0x108] sm:$0xff]
    %v49 = vld [vmem:[%s0 + $0x110] sm:$0xff]
    %v50 = vld [vmem:[%s0 + $0x118] sm:$0xff]
    %v51 = vld [vmem:[%s0 + $0x120] sm:$0xff]
    %v52 = vld [vmem:[%s0 + $0x128] sm:$0xff]
    %v53 = vld [vmem:[%s0 + $0x130] sm:$0xff]
    %v54 = vld [vmem:[%s0 + $0x138] sm:$0xff]
    %v55 = vld [vmem:[%s0 + $0x140] sm:$0xff]
    %v56 = vld [vmem:[%s0 + $0x148] sm:$0xff]
    %v57 = vld [vmem:[%s0 + $0x150] sm:$0xff]
    %v58 = vld [vmem:[%s0 + $0x158] sm:$0xff]
    %v59 = vld [vmem:[%s0 + $0x160] sm:$0xff]
    %v60 = vld [vmem:[%s0 + $0x168] sm:$0xff]
    %v61 = vld [vmem:[%s0 + $0x170] sm:$0xff]
    %v62 = vld [vmem:[%s0 + $0x178] sm:$0xff]
    %v63 = vld [vmem:[%s0 + $0x180] sm:$0xff]
    %v64 = vld [vmem:[%s0 + $0x188] sm:$0xff]
    %v65 = vld [vmem:[%s0 + $0x190] sm:$0xff]
    %v66 = vld [vmem:[%s0 + $0x198] sm:$0xff]
    %v67 = vld [vmem:[%s0 + $0x1a0] sm:$0xff]
    %v68 = vld [vmem:[%s0 + $0x1a8] sm:$0xff]
    %v69 = vld [vmem:[%s0 + $0x1b0] sm:$0xff]
    %v70 = vld [vmem:[%s0 + $0x1b8] sm:$0xff]
    %v71 = vld [vmem:[%s0 + $0x1c0] sm:$0xff]
    %v72 = vld [vmem:[%s0 + $0x1c8] sm:$0xff]
    %v73 = vld [vmem:[%s0 + $0x1d0] sm:$0xff]
    %v74 = vld [vmem:[%s0 + $0x1d8] sm:$0xff]
    %v75 = vld [vmem:[%s0 + $0x1e0] sm:$0xff]
    %v76 = vld [vmem:[%s0 + $0x1e8] sm:$0xff]
    %v77 = vld [vmem:[%s0 + $0x1f0] sm:$0xff]
    %v78 = vld [vmem:[%s0 + $0x1f8] sm:$0xff]
    %v79 = vld [vmem:[%s0 + $0x200] sm:$0xff]
    %v80 = vld [vmem:[%s0 + $0x208] sm:$0xff]
    %v81 = vld [vmem:[%s0 + $0x210] sm:$0xff]
    %v82 = vld [vmem:[%s0 + $0x218] sm:$0xff]
    %v83 = vld [vmem:[%s0 + $0x220] sm:$0xff]
    %v84 = vld [vmem:[%s0 + $0x228] sm:$0xff]
    %v85 = vld [vmem:[%s0 + $0x230] sm:$0xff]
    %v86 = vld [vmem:[%s0 + $0x238] sm:$0xff]
    %v87 = vld [vmem:[%s0 + $0x240] sm:$0xff]
    %v88 = vld [vmem:[%s0 + $0x248] sm:$0xff]
    %v89 = vld [vmem:[%s0 + $0x250] sm:$0xff]
    %v90 = vld [vmem:[%s0 + $0x258] sm:$0xff]
    %v91 = vld [vmem:[%s0 + $0x260] sm:$0xff]
    %v92 = vld [vmem:[%s0 + $0x268] sm:$0xff]
    %v93 = vld [vmem:[%s0 + $0x270] sm:$0xff]
    %v94 = vld [vmem:[%s0 + $0x278] sm:$0xff]
    %v95 = vld [vmem:[%s0 + $0x280] sm:$0xff]
    %v96 = vld [vmem:[%s0 + $0x288] sm:$0xff]
    %v97 = vld [vmem:[%s0 + $0x290] sm:$0xff]
    %v98 = vld [vmem:[%s0 + $0x298] sm:$0xff]
    %v99 = vld [vmem:[%s0 + $0x2a0] sm:$0xff]
    %v100 = vld [vmem:[%s0 + $0x2a8] sm:$0xff]
    %v101 = vld [vmem:[%s0 + $0x2b0] sm:$0xff]
    %v102 = vld [vmem:[%s0 + $0x2b8] sm:$0xff]
    %v103 = vld [vmem:[%s0 + $0x2c0] sm:$0xff]
    %v104 = vld [vmem:[%s0 + $0x2c8] sm:$0xff]
    %v105 = vld [vmem:[%s0 + $0x2d0] sm:$0xff]
    %v106 = vld [vmem:[%s0 + $0x2d8] sm:$0xff]
    %v107 = vld [vmem:[%s0 + $0x2e0] sm:$0xff]
    %v108 = vld [vmem:[%s0 + $0x2e8] sm:$0xff]
    %v109 = vld [vmem:[%s0 + $0x2f0] sm:$0xff]
    %v110 = vld [vmem:[%s0 + $0x2f8] sm:$0xff]
    %v111 = vld [vmem:[%s0 + $0x300] sm:$0xff]
    %v112 = vld [vmem:[%s0 + $0x308] sm:$0xff]
    %v113 = vld [vmem:[%s0 + $0x310] sm:$0xff]
    %v114 = vld [vmem:[%s0 + $0x318] sm:$0xff]
    %v115 = vld [vmem:[%s0 + $0x320] sm:$0xff]
    %v116 = vld [vmem:[%s0 + $0x328] sm:$0xff]
    %v117 = vld [vmem:[%s0 + $0x330] sm:$0xff]
    %v118 = vld [vmem:[%s0 + $0x338] sm:$0xff]
    %v119 = vld [vmem:[%s0 + $0x340] sm:$0xff]
    %v120 = vld [vmem:[%s0 + $0x348] sm:$0xff]
    %v121 = vld [vmem:[%s0 + $0x350] sm:$0xff]
    %v122 = vld [vmem:[%s0 + $0x358] sm:$0xff]
    %v123 = vld [vmem:[%s0 + $0x360] sm:$0xff]
    %v124 = vld [vmem:[%s0 + $0x368] sm:$0xff]
    %v125 = vld [vmem:[%s0 + $0x370] sm:$0xff]
    %v126 = vld [vmem:[%s0 + $0x378] sm:$0xff]
    %v127 = vld [vmem:[%s0 + $0x380] sm:$0xff]
    %v128 = vld [vmem:[%s0 + $0x388] sm:$0xff]
    %v129 = vld [vmem:[%s0 + $0x390] sm:$0xff]
    %v130 = vld [vmem:[%s0 + $0x398] sm:$0xff]
    %v131 = vld [vmem:[%s0 + $0x3a0] sm:$0xff]
    %v132 = vld [vmem:[%s0 + $0x3a8] sm:$0xff]
    %v133 = vld [vmem:[%s0 + $0x3b0] sm:$0xff]
    %v134 = vld [vmem:[%s0 + $0x3b8] sm:$0xff]
    %v135 = vld [vmem:[%s0 + $0x3c0] sm:$0xff]
    %v136 = vld [vmem:[%s0 + $0x3c8] sm:$0xff]
    %v137 = vld [vmem:[%s0 + $0x3d0] sm:$0xff]
    %v138 = vld [vmem:[%s0 + $0x3d8] sm:$0xff]
    %v139 = vld [vmem:[%s0 + $0x3e0] sm:$0xff]
    %v140 = vld [vmem:[%s0 + $0x3e8] sm:$0xff]
    %v141 = vld [vmem:[%s0 + $0x3f0] sm:$0xff]
    %v142 = vld [vmem:[%s0 + $0x3f8] sm:$0xff]
    %v143 = vld [vmem:[%s0 + $0x400] sm:$0xff]
    %v144 = vld [vmem:[%s0 + $0x408] sm:$0xff]
    %v145 = vld [vmem:[%s0 + $0x410] sm:$0xff]
    %v146 = vld [vmem:[%s0 + $0x418] sm:$0xff]
    %v147 = vld [vmem:[%s0 + $0x420] sm:$0xff]
    %v148 = vld [vmem:[%s0 + $0x428] sm:$0xff]
    %v149 = vld [vmem:[%s0 + $0x430] sm:$0xff]
    %v150 = vld [vmem:[%s0 + $0x438] sm:$0xff]
    %v151 = vld [vmem:[%s0 + $0x440] sm:$0xff]
    %v152 = vld [vmem:[%s0 + $0x448] sm:$0xff]
    %v153 = vld [vmem:[%s0 + $0x450] sm:$0xff]
    %v154 = vld [vmem:[%s0 + $0x458] sm:$0xff]
    %v155 = vld [vmem:[%s0 + $0x460] sm:$0xff]
    %v156 = vld [vmem:[%s0 + $0x468] sm:$0xff]
    %v157 = vld [vmem:[%s0 + $0x470] sm:$0xff]
    %v158 = vld [vmem:[%s0 + $0x478] sm:$0xff]
    %v159 = vld [vmem:[%s0 + $0x480] sm:$0xff]
    %v160 = vld [vmem:[%s0 + $0x488] sm:$0xff]
    %v161 = vld [vmem:[%s0 + $0x490] sm:$0xff]
    %v162 = vld [vmem:[%s0 + $0x498] sm:$0xff]
    %v163 = vld [vmem:[%s0 + $0x4a0] sm:$0xff]
    %v164 = vld [vmem:[%s0 + $0x4a8] sm:$0xff]
    %v165 = vld [vmem:[%s0 + $0x4b0] sm:$0xff]
    %v166 = vld [vmem:[%s0 + $0x4b8] sm:$0xff]
    %v167 = vld [vmem:[%s0 + $0x4c0] sm:$0xff]
    %v168 = vld [vmem:[%s0 + $0x4c8] sm:$0xff]
    %v169 = vld [vmem:[%s0 + $0x4d0] sm:$0xff]
    %v170 = vld [vmem:[%s0 + $0x4d8] sm:$0xff]
    %v171 = vld [vmem:[%s0 + $0x4e0] sm:$0xff]
    %v172 = vld [vmem:[%s0 + $0x4e8] sm:$0xff]
    %v173 = vld [vmem:[%s0 + $0x4f0] sm:$0xff]
    %v174 = vld [vmem:[%s0 + $0x4f8] sm:$0xff]
    %v175 = vld [vmem:[%s0 + $0x500] sm:$0xff]
    %v176 = vld [vmem:[%s0 + $0x508] sm:$0xff]
    %v177 = vld [vmem:[%s0 + $0x510] sm:$0xff]
    %v178 = vld [vmem:[%s0 + $0x518] sm:$0xff]
    %v179 = vld [vmem:[%s0 + $0x520] sm:$0xff]
    %v180 = vld [vmem:[%s0 + $0x528] sm:$0xff]
    %v181 = vld [vmem:[%s0 + $0x530] sm:$0xff]
    %v182 = vld [vmem:[%s0 + $0x538] sm:$0xff]
    %v183 = vld [vmem:[%s0 + $0x540] sm:$0xff]
    %v184 = vld [vmem:[%s0 + $0x548] sm:$0xff]
    %v185 = vld [vmem:[%s0 + $0x550] sm:$0xff]
    %v186 = vld [vmem:[%s0 + $0x558] sm:$0xff]
    %v187 = vld [vmem:[%s0 + $0x560] sm:$0xff]
    %v188 = vld [vmem:[%s0 + $0x568] sm:$0xff]
    %v189 = vld [vmem:[%s0 + $0x570] sm:$0xff]
    %v190 = vld [vmem:[%s0 + $0x578] sm:$0xff]
    %v191 = vld [vmem:[%s0 + $0x580] sm:$0xff]
    %v192 = vld [vmem:[%s0 + $0x588] sm:$0xff]
    %v193 = vld [vmem:[%s0 + $0x590] sm:$0xff]
    %v194 = vld [vmem:[%s0 + $0x598] sm:$0xff]
    %v195 = vld [vmem:[%s0 + $0x5a0] sm:$0xff]
    %v196 = vld [vmem:[%s0 + $0x5a8] sm:$0xff]
    %v197 = vld [vmem:[%s0 + $0x5b0] sm:$0xff]
    %v198 = vld [vmem:[%s0 + $0x5b8] sm:$0xff]
    %v199 = vld [vmem:[%s0 + $0x5c0] sm:$0xff]
    %v200 = vld [vmem:[%s0 + $0x5c8] sm:$0xff]
    %v201 = vld [vmem:[%s0 + $0x5d0] sm:$0xff]
    %v202 = vld [vmem:[%s0 + $0x5d8] sm:$0xff]
    %v203 = vld [vmem:[%s0 + $0x5e0] sm:$0xff]
    %v204 = vld [vmem:[%s0 + $0x5e8] sm:$0xff]
    %v205 = vld [vmem:[%s0 + $0x5f0] sm:$0xff]
    %v206 = vld [vmem:[%s0 + $0x5f8] sm:$0xff]
    %v207 = vld [vmem:[%s0 + $0x600] sm:$0xff]
    %v208 = vld [vmem:[%s0 + $0x608] sm:$0xff]
    %v209 = vld [vmem:[%s0 + $0x610] sm:$0xff]
    %v210 = vld [vmem:[%s0 + $0x618] sm:$0xff]
    %v211 = vld [vmem:[%s0 + $0x620] sm:$0xff]
    %v212 = vld [vmem:[%s0 + $0x628] sm:$0xff]
    %v213 = vld [vmem:[%s0 + $0x630] sm:$0xff]
    %v214 = vld [vmem:[%s0 + $0x638] sm:$0xff]
    %v215 = vld [vmem:[%s0 + $0x640] sm:$0xff]
    %v216 = vld [vmem:[%s0 + $0x648] sm:$0xff]
    %v217 = vld [vmem:[%s0 + $0x650] sm:$0xff]
    %v218 = vld [vmem:[%s0 + $0x658] sm:$0xff]
    %v219 = vld [vmem:[%s0 + $0x660] sm:$0xff]
    %v220 = vld [vmem:[%s0 + $0x668] sm:$0xff]
    %v221 = vld [vmem:[%s0 + $0x670] sm:$0xff]
    %v222 = vld [vmem:[%s0 + $0x678] sm:$0xff]
    %v223 = vld [vmem:[%s0 + $0x680] sm:$0xff]
    %v224 = vld [vmem:[%s0 + $0x688] sm:$0xff]
    %v225 = vld [vmem:[%s0 + $0x690] sm:$0xff]
    %v226 = vld [vmem:[%s0 + $0x698] sm:$0xff]
    %v227 = vld [vmem:[%s0 + $0x6a0] sm:$0xff]
    %v228 = vld [vmem:[%s0 + $0x6a8] sm:$0xff]
    %v229 = vld [vmem:[%s0 + $0x6b0] sm:$0xff]
    %v230 = vld [vmem:[%s0 + $0x6b8] sm:$0xff]
    %v231 = vld [vmem:[%s0 + $0x6c0] sm:$0xff]
    %v232 = vld [vmem:[%s0 + $0x6c8] sm:$0xff]
    %v233 = vld [vmem:[%s0 + $0x6d0] sm:$0xff]
    %v234 = vld [vmem:[%s0 + $0x6d8] sm:$0xff]
    %v235 = vld [vmem:[%s0 + $0x6e0] sm:$0xff]
    %v236 = vld [vmem:[%s0 + $0x6e8] sm:$0xff]
    %v237 = vld [vmem:[%s0 + $0x6f0] sm:$0xff]
    %v238 = vld [vmem:[%s0 + $0x6f8] sm:$0xff]
    %v239 = vld [vmem:[%s0 + $0x700] sm:$0xff]
    %v240 = vld [vmem:[%s0 + $0x708] sm:$0xff]
    %v241 = vld [vmem:[%s0 + $0x710] sm:$0xff]
    %v242 = vld [vmem:[%s0 + $0x718] sm:$0xff]
    %v243 = vld [vmem:[%s0 + $0x720] sm:$0xff]
    %v244 = vld [vmem:[%s0 + $0x728] sm:$0xff]
    %v245 = vld [vmem:[%s0 + $0x730] sm:$0xff]
    %v246 = vld [vmem:[%s0 + $0x738] sm:$0xff]
    %v247 = vld [vmem:[%s0 + $0x740] sm:$0xff]
    %v248 = vld [vmem:[%s0 + $0x748] sm:$0xff]
    %v249 = vld [vmem:[%s0 + $0x750] sm:$0xff]
    %v250 = vld [vmem:[%s0 + $0x758] sm:$0xff]
    %v251 = vld [vmem:[%s0 + $0x760] sm:$0xff]
    %v252 = vld [vmem:[%s0 + $0x768] sm:$0xff]
    %v253 = vld [vmem:[%s0 + $0x770] sm:$0xff]
    %v254 = vld [vmem:[%s0 + $0x778] sm:$0xff]
    %v255 = vld [vmem:[%s0 + $0x780] sm:$0xff]
    %v256 = vld [vmem:[%s0 + $0x788] sm:$0xff]
    %v257 = vld [vmem:[%s0 + $0x790] sm:$0xff]
    %v258 = vld [vmem:[%s0 + $0x798] sm:$0xff]
    %v259 = vld [vmem:[%s0 + $0x7a0] sm:$0xff]
    %v260 = vld [vmem:[%s0 + $0x7a8] sm:$0xff]
    %v261 = vld [vmem:[%s0 + $0x7b0] sm:$0xff]
    %v262 = vld [vmem:[%s0 + $0x7b8] sm:$0xff]
    %v263 = vld [vmem:[%s0 + $0x7c0] sm:$0xff]
    %v264 = vld [vmem:[%s0 + $0x7c8] sm:$0xff]
    %v265 = vld [vmem:[%s0 + $0x7d0] sm:$0xff]
    %v266 = vld [vmem:[%s0 + $0x7d8] sm:$0xff]
    %v267 = vld [vmem:[%s0 + $0x7e0] sm:$0xff]
    %v268 = vld [vmem:[%s0 + $0x7e8] sm:$0xff]
    %v269 = vld [vmem:[%s0 + $0x7f0] sm:$0xff]
    %v270 = vld [vmem:[%s0 + $0x7f8] sm:$0xff]
    %v271 = vld [vmem:[%s0 + $0x800] sm:$0xff]
    %v272 = vld [vmem:[%s0 + $0x808] sm:$0xff]
    %v273 = vld [vmem:[%s0 + $0x810] sm:$0xff]
    %v274 = vld [vmem:[%s0 + $0x818] sm:$0xff]
    %v275 = vld [vmem:[%s0 + $0x820] sm:$0xff]
    %v276 = vld [vmem:[%s0 + $0x828] sm:$0xff]
    %v277 = vld [vmem:[%s0 + $0x830] sm:$0xff]
    %v278 = vld [vmem:[%s0 + $0x838] sm:$0xff]
    %v279 = vld [vmem:[%s0 + $0x840] sm:$0xff]
    %v280 = vld [vmem:[%s0 + $0x848] sm:$0xff]
    %v281 = vld [vmem:[%s0 + $0x850] sm:$0xff]
    %v282 = vld [vmem:[%s0 + $0x858] sm:$0xff]
    %v283 = vld [vmem:[%s0 + $0x860] sm:$0xff]
    %v284 = vld [vmem:[%s0 + $0x868] sm:$0xff]
    %v285 = vld [vmem:[%s0 + $0x870] sm:$0xff]
    %v286 = vld [vmem:[%s0 + $0x878] sm:$0xff]
    %v287 = vld [vmem:[%s0 + $0x880] sm:$0xff]
    %v288 = vld [vmem:[%s0 + $0x888] sm:$0xff]
    %v289 = vld [vmem:[%s0 + $0x890] sm:$0xff]
    %v290 = vld [vmem:[%s0 + $0x898] sm:$0xff]
    %v291 = vld [vmem:[%s0 + $0x8a0] sm:$0xff]
    %v292 = vld [vmem:[%s0 + $0x8a8] sm:$0xff]
    %v293 = vld [vmem:[%s0 + $0x8b0] sm:$0xff]
    %v294 = vld [vmem:[%s0 + $0x8b8] sm:$0xff]
    %v295 = vld [vmem:[%s0 + $0x8c0] sm:$0xff]
    %v296 = vld [vmem:[%s0 + $0x8c8] sm:$0xff]
    %v297 = vld [vmem:[%s0 + $0x8d0] sm:$0xff]
    %v298 = vld [vmem:[%s0 + $0x8d8] sm:$0xff]
    %v299 = vld [vmem:[%s0 + $0x8e0] sm:$0xff]
    %v300 = vld [vmem:[%s0 + $0x8e8] sm:$0xff]
    %v301 = vld [vmem:[%s0 + $0x8f0] sm:$0xff]
    %v302 = vld [vmem:[%s0 + $0x8f8] sm:$0xff]
    %v303 = vld [vmem:[%s0 + $0x900] sm:$0xff]
    %v304 = vld [vmem:[%s0 + $0x908] sm:$0xff]
    %v305 = vld [vmem:[%s0 + $0x910] sm:$0xff]
    %v306 = vld [vmem:[%s0 + $0x918] sm:$0xff]
    %v307 = vld [vmem:[%s0 + $0x920] sm:$0xff]
    %v308 = vld [vmem:[%s0 + $0x928] sm:$0xff]
    %v309 = vld [vmem:[%s0 + $0x930] sm:$0xff]
    %v310 = vld [vmem:[%s0 + $0x938] sm:$0xff]
    %v311 = vld [vmem:[%s0 + $0x940] sm:$0xff]
    %v312 = vld [vmem:[%s0 + $0x948] sm:$0xff]
    %v313 = vld [vmem:[%s0 + $0x950] sm:$0xff]
    %v314 = vld [vmem:[%s0 + $0x958] sm:$0xff]
    %v315 = vld [vmem:[%s0 + $0x960] sm:$0xff]
    %v316 = vld [vmem:[%s0 + $0x968] sm:$0xff]
    %v317 = vld [vmem:[%s0 + $0x970] sm:$0xff]
    %v318 = vld [vmem:[%s0 + $0x978] sm:$0xff]
    %v319 = vld [vmem:[%s0 + $0x980] sm:$0xff]
    %v320 = vld [vmem:[%s0 + $0x988] sm:$0xff]
    %v321 = vld [vmem:[%s0 + $0x990] sm:$0xff]
    %v322 = vld [vmem:[%s0 + $0x998] sm:$0xff]
    %v323 = vld [vmem:[%s0 + $0x9a0] sm:$0xff]
    %v324 = vld [vmem:[%s0 + $0x9a8] sm:$0xff]
    %v325 = vld [vmem:[%s0 + $0x9b0] sm:$0xff]
    %v326 = vld [vmem:[%s0 + $0x9b8] sm:$0xff]
    %v327 = vld [vmem:[%s0 + $0x9c0] sm:$0xff]
    %v328 = vld [vmem:[%s0 + $0x9c8] sm:$0xff]
    %v329 = vld [vmem:[%s0 + $0x9d0] sm:$0xff]
    %v330 = vld [vmem:[%s0 + $0x9d8] sm:$0xff]
    %v331 = vld [vmem:[%s0 + $0x9e0] sm:$0xff]
    %v332 = vld [vmem:[%s0 + $0x9e8] sm:$0xff]
    %v333 = vld [vmem:[%s0 + $0x9f0] sm:$0xff]
    %v334 = vld [vmem:[%s0 + $0x9f8] sm:$0xff]
    %v335 = vld [vmem:[%s0 + $0xa00] sm:$0xff]
    %v336 = vld [vmem:[%s0 + $0xa08] sm:$0xff]
    %v337 = vld [vmem:[%s0 + $0xa10] sm:$0xff]
    %v338 = vld [vmem:[%s0 + $0xa18] sm:$0xff]
    %v339 = vld [vmem:[%s0 + $0xa20] sm:$0xff]
    %v340 = vld [vmem:[%s0 + $0xa28] sm:$0xff]
    %v341 = vld [vmem:[%s0 + $0xa30] sm:$0xff]
    %v342 = vld [vmem:[%s0 + $0xa38] sm:$0xff]
    %v343 = vld [vmem:[%s0 + $0xa40] sm:$0xff]
    %v344 = vld [vmem:[%s0 + $0xa48] sm:$0xff]
    %v345 = vld [vmem:[%s0 + $0xa50] sm:$0xff]
    %v346 = vld [vmem:[%s0 + $0xa58] sm:$0xff]
    %v347 = vld [vmem:[%s0 + $0xa60] sm:$0xff]
    %v348 = vld [vmem:[%s0 + $0xa68] sm:$0xff]
    %v349 = vld [vmem:[%s0 + $0xa70] sm:$0xff]
    %v350 = vld [vmem:[%s0 + $0xa78] sm:$0xff]
    %v351 = vld [vmem:[%s0 + $0xa80] sm:$0xff]
    %v352 = vld [vmem:[%s0 + $0xa88] sm:$0xff]
    %v353 = vld [vmem:[%s0 + $0xa90] sm:$0xff]
    %v354 = vld [vmem:[%s0 + $0xa98] sm:$0xff]
    %v355 = vld [vmem:[%s0 + $0xaa0] sm:$0xff]
    %v356 = vld [vmem:[%s0 + $0xaa8] sm:$0xff]
    %v357 = vld [vmem:[%s0 + $0xab0] sm:$0xff]
    %v358 = vld [vmem:[%s0 + $0xab8] sm:$0xff]
    %v359 = vld [vmem:[%s0 + $0xac0] sm:$0xff]
    %v360 = vld [vmem:[%s0 + $0xac8] sm:$0xff]
    %v361 = vld [vmem:[%s0 + $0xad0] sm:$0xff]
    %v362 = vld [vmem:[%s0 + $0xad8] sm:$0xff]
    %v363 = vld [vmem:[%s0 + $0xae0] sm:$0xff]
    %v364 = vld [vmem:[%s0 + $0xae8] sm:$0xff]
    %v365 = vld [vmem:[%s0 + $0xaf0] sm:$0xff]
    %v366 = vld [vmem:[%s0 + $0xaf8] sm:$0xff]
    %v367 = vld [vmem:[%s0 + $0xb00] sm:$0xff]
    %v368 = vld [vmem:[%s0 + $0xb08] sm:$0xff]
    %v369 = vld [vmem:[%s0 + $0xb10] sm:$0xff]
    %v370 = vld [vmem:[%s0 + $0xb18] sm:$0xff]
    %v371 = vld [vmem:[%s0 + $0xb20] sm:$0xff]
    %v372 = vld [vmem:[%s0 + $0xb28] sm:$0xff]
    %v373 = vld [vmem:[%s0 + $0xb30] sm:$0xff]
    %v374 = vld [vmem:[%s0 + $0xb38] sm:$0xff]
    %v375 = vld [vmem:[%s0 + $0xb40] sm:$0xff]
    %v376 = vld [vmem:[%s0 + $0xb48] sm:$0xff]
    %v377 = vld [vmem:[%s0 + $0xb50] sm:$0xff]
    %v378 = vld [vmem:[%s0 + $0xb58] sm:$0xff]
    %v379 = vld [vmem:[%s0 + $0xb60] sm:$0xff]
    %v380 = vld [vmem:[%s0 + $0xb68] sm:$0xff]
    %v381 = vld [vmem:[%s0 + $0xb70] sm:$0xff]
    %v382 = vld [vmem:[%s0 + $0xb78] sm:$0xff]
    %v383 = vld [vmem:[%s0 + $0xb80] sm:$0xff]
    %v384 = vld [vmem:[%s0 + $0xb88] sm:$0xff]
    %v385 = vld [vmem:[%s0 + $0xb90] sm:$0xff]
    %v386 = vld [vmem:[%s0 + $0xb98] sm:$0xff]
    %v387 = vld [vmem:[%s0 + $0xba0] sm:$0xff]
    %v388 = vld [vmem:[%s0 + $0xba8] sm:$0xff]
    %v389 = vld [vmem:[%s0 + $0xbb0] sm:$0xff]
    %v390 = vld [vmem:[%s0 + $0xbb8] sm:$0xff]
    %v391 = vld [vmem:[%s0 + $0xbc0] sm:$0xff]
    %v392 = vld [vmem:[%s0 + $0xbc8] sm:$0xff]
    %v393 = vld [vmem:[%s0 + $0xbd0] sm:$0xff]
    %v394 = vld [vmem:[%s0 + $0xbd8] sm:$0xff]
    %v395 = vld [vmem:[%s0 + $0xbe0] sm:$0xff]
    %v396 = vld [vmem:[%s0 + $0xbe8] sm:$0xff]
    %v397 = vld [vmem:[%s0 + $0xbf0] sm:$0xff]
    %v398 = vld [vmem:[%s0 + $0xbf8] sm:$0xff]
    %v399 = vld [vmem:[%s0 + $0xc00] sm:$0xff]
    %v400 = vld [vmem:[%s0 + $0xc08] sm:$0xff]
    %v401 = vld [vmem:[%s0 + $0xc10] sm:$0xff]
    %v402 = vld [vmem:[%s0 + $0xc18] sm:$0xff]
    %v403 = vld [vmem:[%s0 + $0xc20] sm:$0xff]
    %v404 = vld [vmem:[%s0 + $0xc28] sm:$0xff]
    %v405 = vld [vmem:[%s0 + $0xc30] sm:$0xff]
    %v406 = vld [vmem:[%s0 + $0xc38] sm:$0xff]
    %v407 = vld [vmem:[%s0 + $0xc40] sm:$0xff]
    %v408 = vld [vmem:[%s0 + $0xc48] sm:$0xff]
    %v409 = vld [vmem:[%s0 + $0xc50] sm:$0xff]
    %v410 = vld [vmem:[%s0 + $0xc58] sm:$0xff]
    %v411 = vld [vmem:[%s0 + $0xc60] sm:$0xff]
    %v412 = vld [vmem:[%s0 + $0xc68] sm:$0xff]
    %v413 = vld [vmem:[%s0 + $0xc70] sm:$0xff]
    %v414 = vld [vmem:[%s0 + $0xc78] sm:$0xff]
    %v415 = vld [vmem:[%s0 + $0xc80] sm:$0xff]
    %v416 = vld [vmem:[%s0 + $0xc88] sm:$0xff]
    %v417 = vld [vmem:[%s0 + $0xc90] sm:$0xff]
    %v418 = vld [vmem:[%s0 + $0xc98] sm:$0xff]
    %v419 = vld [vmem:[%s0 + $0xca0] sm:$0xff]
    %v420 = vld [vmem:[%s0 + $0xca8] sm:$0xff]
    %v421 = vld [vmem:[%s0 + $0xcb0] sm:$0xff]
    %v422 = vld [vmem:[%s0 + $0xcb8] sm:$0xff]
    %v423 = vld [vmem:[%s0 + $0xcc0] sm:$0xff]
    %v424 = vld [vmem:[%s0 + $0xcc8] sm:$0xff]
    %v425 = vld [vmem:[%s0 + $0xcd0] sm:$0xff]
    %v426 = vld [vmem:[%s0 + $0xcd8] sm:$0xff]
    %v427 = vld [vmem:[%s0 + $0xce0] sm:$0xff]
    %v428 = vld [vmem:[%s0 + $0xce8] sm:$0xff]
    %v429 = vld [vmem:[%s0 + $0xcf0] sm:$0xff]
    %v430 = vld [vmem:[%s0 + $0xcf8] sm:$0xff]
    %v431 = vld [vmem:[%s0 + $0xd00] sm:$0xff]
    %v432 = vld [vmem:[%s0 + $0xd08] sm:$0xff]
    %v433 = vld [vmem:[%s0 + $0xd10] sm:$0xff]
    %v434 = vld [vmem:[%s0 + $0xd18] sm:$0xff]
    %v435 = vld [vmem:[%s0 + $0xd20] sm:$0xff]
    %v436 = vld [vmem:[%s0 + $0xd28] sm:$0xff]
    %v437 = vld [vmem:[%s0 + $0xd30] sm:$0xff]
    %v438 = vld [vmem:[%s0 + $0xd38] sm:$0xff]
    %v439 = vld [vmem:[%s0 + $0xd40] sm:$0xff]
    %v440 = vld [vmem:[%s0 + $0xd48] sm:$0xff]
    %v441 = vld [vmem:[%s0 + $0xd50] sm:$0xff]
    %v442 = vld [vmem:[%s0 + $0xd58] sm:$0xff]
    %v443 = vld [vmem:[%s0 + $0xd60] sm:$0xff]
    %v444 = vld [vmem:[%s0 + $0xd68] sm:$0xff]
    %v445 = vld [vmem:[%s0 + $0xd70] sm:$0xff]
    %v446 = vld [vmem:[%s0 + $0xd78] sm:$0xff]
    %v447 = vld [vmem:[%s0 + $0xd80] sm:$0xff]
    %v448 = vld [vmem:[%s0 + $0xd88] sm:$0xff]
    %v449 = vld [vmem:[%s0 + $0xd90] sm:$0xff]
    %v450 = vld [vmem:[%s0 + $0xd98] sm:$0xff]
    %v451 = vld [vmem:[%s0 + $0xda0] sm:$0xff]
    %v452 = vld [vmem:[%s0 + $0xda8] sm:$0xff]
    %v453 = vld [vmem:[%s0 + $0xdb0] sm:$0xff]
    %v454 = vld [vmem:[%s0 + $0xdb8] sm:$0xff]
    %v455 = vld [vmem:[%s0 + $0xdc0] sm:$0xff]
    %v456 = vld [vmem:[%s0 + $0xdc8] sm:$0xff]
    %v457 = vld [vmem:[%s0 + $0xdd0] sm:$0xff]
    %v458 = vld [vmem:[%s0 + $0xdd8] sm:$0xff]
    %v459 = vld [vmem:[%s0 + $0xde0] sm:$0xff]
    %v460 = vld [vmem:[%s0 + $0xde8] sm:$0xff]
    %v461 = vld [vmem:[%s0 + $0xdf0] sm:$0xff]
    %v462 = vld [vmem:[%s0 + $0xdf8] sm:$0xff]
    %v463 = vld [vmem:[%s0 + $0xe00] sm:$0xff]
    %v464 = vld [vmem:[%s0 + $0xe08] sm:$0xff]
    %v465 = vld [vmem:[%s0 + $0xe10] sm:$0xff]
    %v466 = vld [vmem:[%s0 + $0xe18] sm:$0xff]
    %v467 = vld [vmem:[%s0 + $0xe20] sm:$0xff]
    %v468 = vld [vmem:[%s0 + $0xe28] sm:$0xff]
    %v469 = vld [vmem:[%s0 + $0xe30] sm:$0xff]
    %v470 = vld [vmem:[%s0 + $0xe38] sm:$0xff]
    %v471 = vld [vmem:[%s0 + $0xe40] sm:$0xff]
    %v472 = vld [vmem:[%s0 + $0xe48] sm:$0xff]
    %v473 = vld [vmem:[%s0 + $0xe50] sm:$0xff]
    %v474 = vld [vmem:[%s0 + $0xe58] sm:$0xff]
    %v475 = vld [vmem:[%s0 + $0xe60] sm:$0xff]
    %v476 = vld [vmem:[%s0 + $0xe68] sm:$0xff]
    %v477 = vld [vmem:[%s0 + $0xe70] sm:$0xff]
    %v478 = vld [vmem:[%s0 + $0xe78] sm:$0xff]
    %v479 = vld [vmem:[%s0 + $0xe80] sm:$0xff]
    %v480 = vld [vmem:[%s0 + $0xe88] sm:$0xff]
    %v481 = vld [vmem:[%s0 + $0xe90] sm:$0xff]
    %v482 = vld [vmem:[%s0 + $0xe98] sm:$0xff]
    %v483 = vld [vmem:[%s0 + $0xea0] sm:$0xff]
    %v484 = vld [vmem:[%s0 + $0xea8] sm:$0xff]
    %v485 = vld [vmem:[%s0 + $0xeb0] sm:$0xff]
    %v486 = vld [vmem:[%s0 + $0xeb8] sm:$0xff]
    %v487 = vld [vmem:[%s0 + $0xec0] sm:$0xff]
    %v488 = vld [vmem:[%s0 + $0xec8] sm:$0xff]
    %v489 = vld [vmem:[%s0 + $0xed0] sm:$0xff]
    %v490 = vld [vmem:[%s0 + $0xed8] sm:$0xff]
    %v491 = vld [vmem:[%s0 + $0xee0] sm:$0xff]
    %v492 = vld [vmem:[%s0 + $0xee8] sm:$0xff]
    %v493 = vld [vmem:[%s0 + $0xef0] sm:$0xff]
    %v494 = vld [vmem:[%s0 + $0xef8] sm:$0xff]
    %v495 = vld [vmem:[%s0 + $0xf00] sm:$0xff]
    %v496 = vld [vmem:[%s0 + $0xf08] sm:$0xff]
    %v497 = vld [vmem:[%s0 + $0xf10] sm:$0xff]
    %v498 = vld [vmem:[%s0 + $0xf18] sm:$0xff]
    %v499 = vld [vmem:[%s0 + $0xf20] sm:$0xff]
    %v500 = vld [vmem:[%s0 + $0xf28] sm:$0xff]
    %v501 = vld [vmem:[%s0 + $0xf30] sm:$0xff]
    %v502 = vld [vmem:[%s0 + $0xf38] sm:$0xff]
    %v503 = vld [vmem:[%s0 + $0xf40] sm:$0xff]
    %v504 = vld [vmem:[%s0 + $0xf48] sm:$0xff]
    %v505 = vld [vmem:[%s0 + $0xf50] sm:$0xff]
    %v506 = vld [vmem:[%s0 + $0xf58] sm:$0xff]
    %v507 = vld [vmem:[%s0 + $0xf60] sm:$0xff]
    %v508 = vld [vmem:[%s0 + $0xf68] sm:$0xff]
    %v509 = vld [vmem:[%s0 + $0xf70] sm:$0xff]
    %v510 = vld [vmem:[%s0 + $0xf78] sm:$0xff]
    %v511 = vld [vmem:[%s0 + $0xf80] sm:$0xff]
    %v512 = vld [vmem:[%s0 + $0xf88] sm:$0xff]
    %v513 = vld [vmem:[%s0 + $0xf90] sm:$0xff]
    %v514 = vld [vmem:[%s0 + $0xf98] sm:$0xff]
    %v515 = vld [vmem:[%s0 + $0xfa0] sm:$0xff]
    %v516 = vld [vmem:[%s0 + $0xfa8] sm:$0xff]
    %v517 = vld [vmem:[%s0 + $0xfb0] sm:$0xff]
    %v518 = vld [vmem:[%s0 + $0xfb8] sm:$0xff]
    %v519 = vld [vmem:[%s0 + $0xfc0] sm:$0xff]
    %v520 = vld [vmem:[%s0 + $0xfc8] sm:$0xff]
    %v521 = vld [vmem:[%s0 + $0xfd0] sm:$0xff]
    %v522 = vld [vmem:[%s0 + $0xfd8] sm:$0xff]
    %v523 = vld [vmem:[%s0 + $0xfe0] sm:$0xff]
    %v524 = vld [vmem:[%s0 + $0xfe8] sm:$0xff]
    %v525 = vld [vmem:[%s0 + $0xff0] sm:$0xff]
    %v526 = vld [vmem:[%s0 + $0xff8] sm:$0xff]
    %vm527 = vcmask 130048
    %v528 = vsel %vm527, %v15, 0.0
    %529 = vadd.xlane.f32.xlu0 %v528
    %v530 = vpop.xlane.xlu0 %529
    %v531 = vsel %vm527, %v16, 0.0
    %532 = vadd.xlane.f32.xlu0 %v531
    %v533 = vpop.xlane.xlu0 %532
    %v534 = vsel %vm527, %v17, 0.0
    %535 = vadd.xlane.f32.xlu0 %v534
    %v536 = vpop.xlane.xlu0 %535
    %v537 = vsel %vm527, %v18, 0.0
    %538 = vadd.xlane.f32.xlu0 %v537
    %v539 = vpop.xlane.xlu0 %538
    %v540 = vsel %vm527, %v19, 0.0
    %541 = vadd.xlane.f32.xlu0 %v540
    %v542 = vpop.xlane.xlu0 %541
    %v543 = vsel %vm527, %v20, 0.0
    %544 = vadd.xlane.f32.xlu0 %v543
    %v545 = vpop.xlane.xlu0 %544
    %v546 = vsel %vm527, %v21, 0.0
    %547 = vadd.xlane.f32.xlu0 %v546
    %v548 = vpop.xlane.xlu0 %547
    %v549 = vsel %vm527, %v22, 0.0
    %550 = vadd.xlane.f32.xlu0 %v549
    %v551 = vpop.xlane.xlu0 %550
    %v552 = vsel %vm527, %v23, 0.0
    %553 = vadd.xlane.f32.xlu0 %v552
    %v554 = vpop.xlane.xlu0 %553
    %v555 = vsel %vm527, %v24, 0.0
    %556 = vadd.xlane.f32.xlu0 %v555
    %v557 = vpop.xlane.xlu0 %556
    %v558 = vsel %vm527, %v25, 0.0
    %559 = vadd.xlane.f32.xlu0 %v558
    %v560 = vpop.xlane.xlu0 %559
    %v561 = vsel %vm527, %v26, 0.0
    %562 = vadd.xlane.f32.xlu0 %v561
    %v563 = vpop.xlane.xlu0 %562
    %v564 = vsel %vm527, %v27, 0.0
    %565 = vadd.xlane.f32.xlu0 %v564
    %v566 = vpop.xlane.xlu0 %565
    %v567 = vsel %vm527, %v28, 0.0
    %568 = vadd.xlane.f32.xlu0 %v567
    %v569 = vpop.xlane.xlu0 %568
    %v570 = vsel %vm527, %v29, 0.0
    %571 = vadd.xlane.f32.xlu0 %v570
    %v572 = vpop.xlane.xlu0 %571
    %v573 = vsel %vm527, %v30, 0.0
    %574 = vadd.xlane.f32.xlu0 %v573
    %v575 = vpop.xlane.xlu0 %574
    %v576 = vsel %vm527, %v31, 0.0
    %577 = vadd.xlane.f32.xlu0 %v576
    %v578 = vpop.xlane.xlu0 %577
    %v579 = vsel %vm527, %v32, 0.0
    %580 = vadd.xlane.f32.xlu0 %v579
    %v581 = vpop.xlane.xlu0 %580
    %v582 = vsel %vm527, %v33, 0.0
    %583 = vadd.xlane.f32.xlu0 %v582
    %v584 = vpop.xlane.xlu0 %583
    %v585 = vsel %vm527, %v34, 0.0
    %586 = vadd.xlane.f32.xlu0 %v585
    %v587 = vpop.xlane.xlu0 %586
    %v588 = vsel %vm527, %v35, 0.0
    %589 = vadd.xlane.f32.xlu0 %v588
    %v590 = vpop.xlane.xlu0 %589
    %v591 = vsel %vm527, %v36, 0.0
    %592 = vadd.xlane.f32.xlu0 %v591
    %v593 = vpop.xlane.xlu0 %592
    %v594 = vsel %vm527, %v37, 0.0
    %595 = vadd.xlane.f32.xlu0 %v594
    %v596 = vpop.xlane.xlu0 %595
    %v597 = vsel %vm527, %v38, 0.0
    %598 = vadd.xlane.f32.xlu0 %v597
    %v599 = vpop.xlane.xlu0 %598
    %v600 = vsel %vm527, %v39, 0.0
    %601 = vadd.xlane.f32.xlu0 %v600
    %v602 = vpop.xlane.xlu0 %601
    %v603 = vsel %vm527, %v40, 0.0
    %604 = vadd.xlane.f32.xlu0 %v603
    %v605 = vpop.xlane.xlu0 %604
    %v606 = vsel %vm527, %v41, 0.0
    %607 = vadd.xlane.f32.xlu0 %v606
    %v608 = vpop.xlane.xlu0 %607
    %v609 = vsel %vm527, %v42, 0.0
    %610 = vadd.xlane.f32.xlu0 %v609
    %v611 = vpop.xlane.xlu0 %610
    %v612 = vsel %vm527, %v43, 0.0
    %613 = vadd.xlane.f32.xlu0 %v612
    %v614 = vpop.xlane.xlu0 %613
    %v615 = vsel %vm527, %v44, 0.0
    %616 = vadd.xlane.f32.xlu0 %v615
    %v617 = vpop.xlane.xlu0 %616
    %v618 = vsel %vm527, %v45, 0.0
    %619 = vadd.xlane.f32.xlu0 %v618
    %v620 = vpop.xlane.xlu0 %619
    %v621 = vsel %vm527, %v46, 0.0
    %622 = vadd.xlane.f32.xlu0 %v621
    %v623 = vpop.xlane.xlu0 %622
    %v624 = vsel %vm527, %v47, 0.0
    %625 = vadd.xlane.f32.xlu0 %v624
    %v626 = vpop.xlane.xlu0 %625
    %v627 = vsel %vm527, %v48, 0.0
    %628 = vadd.xlane.f32.xlu0 %v627
    %v629 = vpop.xlane.xlu0 %628
    %v630 = vsel %vm527, %v49, 0.0
    %631 = vadd.xlane.f32.xlu0 %v630
    %v632 = vpop.xlane.xlu0 %631
    %v633 = vsel %vm527, %v50, 0.0
    %634 = vadd.xlane.f32.xlu0 %v633
    %v635 = vpop.xlane.xlu0 %634
    %v636 = vsel %vm527, %v51, 0.0
    %637 = vadd.xlane.f32.xlu0 %v636
    %v638 = vpop.xlane.xlu0 %637
    %v639 = vsel %vm527, %v52, 0.0
    %640 = vadd.xlane.f32.xlu0 %v639
    %v641 = vpop.xlane.xlu0 %640
    %v642 = vsel %vm527, %v53, 0.0
    %643 = vadd.xlane.f32.xlu0 %v642
    %v644 = vpop.xlane.xlu0 %643
    %v645 = vsel %vm527, %v54, 0.0
    %646 = vadd.xlane.f32.xlu0 %v645
    %v647 = vpop.xlane.xlu0 %646
    %v648 = vsel %vm527, %v55, 0.0
    %649 = vadd.xlane.f32.xlu0 %v648
    %v650 = vpop.xlane.xlu0 %649
    %v651 = vsel %vm527, %v56, 0.0
    %652 = vadd.xlane.f32.xlu0 %v651
    %v653 = vpop.xlane.xlu0 %652
    %v654 = vsel %vm527, %v57, 0.0
    %655 = vadd.xlane.f32.xlu0 %v654
    %v656 = vpop.xlane.xlu0 %655
    %v657 = vsel %vm527, %v58, 0.0
    %658 = vadd.xlane.f32.xlu0 %v657
    %v659 = vpop.xlane.xlu0 %658
    %v660 = vsel %vm527, %v59, 0.0
    %661 = vadd.xlane.f32.xlu0 %v660
    %v662 = vpop.xlane.xlu0 %661
    %v663 = vsel %vm527, %v60, 0.0
    %664 = vadd.xlane.f32.xlu0 %v663
    %v665 = vpop.xlane.xlu0 %664
    %v666 = vsel %vm527, %v61, 0.0
    %667 = vadd.xlane.f32.xlu0 %v666
    %v668 = vpop.xlane.xlu0 %667
    %v669 = vsel %vm527, %v62, 0.0
    %670 = vadd.xlane.f32.xlu0 %v669
    %v671 = vpop.xlane.xlu0 %670
    %v672 = vsel %vm527, %v63, 0.0
    %673 = vadd.xlane.f32.xlu0 %v672
    %v674 = vpop.xlane.xlu0 %673
    %v675 = vsel %vm527, %v64, 0.0
    %676 = vadd.xlane.f32.xlu0 %v675
    %v677 = vpop.xlane.xlu0 %676
    %v678 = vsel %vm527, %v65, 0.0
    %679 = vadd.xlane.f32.xlu0 %v678
    %v680 = vpop.xlane.xlu0 %679
    %v681 = vsel %vm527, %v66, 0.0
    %682 = vadd.xlane.f32.xlu0 %v681
    %v683 = vpop.xlane.xlu0 %682
    %v684 = vsel %vm527, %v67, 0.0
    %685 = vadd.xlane.f32.xlu0 %v684
    %v686 = vpop.xlane.xlu0 %685
    %v687 = vsel %vm527, %v68, 0.0
    %688 = vadd.xlane.f32.xlu0 %v687
    %v689 = vpop.xlane.xlu0 %688
    %v690 = vsel %vm527, %v69, 0.0
    %691 = vadd.xlane.f32.xlu0 %v690
    %v692 = vpop.xlane.xlu0 %691
    %v693 = vsel %vm527, %v70, 0.0
    %694 = vadd.xlane.f32.xlu0 %v693
    %v695 = vpop.xlane.xlu0 %694
    %v696 = vsel %vm527, %v71, 0.0
    %697 = vadd.xlane.f32.xlu0 %v696
    %v698 = vpop.xlane.xlu0 %697
    %v699 = vsel %vm527, %v72, 0.0
    %700 = vadd.xlane.f32.xlu0 %v699
    %v701 = vpop.xlane.xlu0 %700
    %v702 = vsel %vm527, %v73, 0.0
    %703 = vadd.xlane.f32.xlu0 %v702
    %v704 = vpop.xlane.xlu0 %703
    %v705 = vsel %vm527, %v74, 0.0
    %706 = vadd.xlane.f32.xlu0 %v705
    %v707 = vpop.xlane.xlu0 %706
    %v708 = vsel %vm527, %v75, 0.0
    %709 = vadd.xlane.f32.xlu0 %v708
    %v710 = vpop.xlane.xlu0 %709
    %v711 = vsel %vm527, %v76, 0.0
    %712 = vadd.xlane.f32.xlu0 %v711
    %v713 = vpop.xlane.xlu0 %712
    %v714 = vsel %vm527, %v77, 0.0
    %715 = vadd.xlane.f32.xlu0 %v714
    %v716 = vpop.xlane.xlu0 %715
    %v717 = vsel %vm527, %v78, 0.0
    %718 = vadd.xlane.f32.xlu0 %v717
    %v719 = vpop.xlane.xlu0 %718
    %v720 = vsel %vm527, %v79, 0.0
    %721 = vadd.xlane.f32.xlu0 %v720
    %v722 = vpop.xlane.xlu0 %721
    %v723 = vsel %vm527, %v80, 0.0
    %724 = vadd.xlane.f32.xlu0 %v723
    %v725 = vpop.xlane.xlu0 %724
    %v726 = vsel %vm527, %v81, 0.0
    %727 = vadd.xlane.f32.xlu0 %v726
    %v728 = vpop.xlane.xlu0 %727
    %v729 = vsel %vm527, %v82, 0.0
    %730 = vadd.xlane.f32.xlu0 %v729
    %v731 = vpop.xlane.xlu0 %730
    %v732 = vsel %vm527, %v83, 0.0
    %733 = vadd.xlane.f32.xlu0 %v732
    %v734 = vpop.xlane.xlu0 %733
    %v735 = vsel %vm527, %v84, 0.0
    %736 = vadd.xlane.f32.xlu0 %v735
    %v737 = vpop.xlane.xlu0 %736
    %v738 = vsel %vm527, %v85, 0.0
    %739 = vadd.xlane.f32.xlu0 %v738
    %v740 = vpop.xlane.xlu0 %739
    %v741 = vsel %vm527, %v86, 0.0
    %742 = vadd.xlane.f32.xlu0 %v741
    %v743 = vpop.xlane.xlu0 %742
    %v744 = vsel %vm527, %v87, 0.0
    %745 = vadd.xlane.f32.xlu0 %v744
    %v746 = vpop.xlane.xlu0 %745
    %v747 = vsel %vm527, %v88, 0.0
    %748 = vadd.xlane.f32.xlu0 %v747
    %v749 = vpop.xlane.xlu0 %748
    %v750 = vsel %vm527, %v89, 0.0
    %751 = vadd.xlane.f32.xlu0 %v750
    %v752 = vpop.xlane.xlu0 %751
    %v753 = vsel %vm527, %v90, 0.0
    %754 = vadd.xlane.f32.xlu0 %v753
    %v755 = vpop.xlane.xlu0 %754
    %v756 = vsel %vm527, %v91, 0.0
    %757 = vadd.xlane.f32.xlu0 %v756
    %v758 = vpop.xlane.xlu0 %757
    %v759 = vsel %vm527, %v92, 0.0
    %760 = vadd.xlane.f32.xlu0 %v759
    %v761 = vpop.xlane.xlu0 %760
    %v762 = vsel %vm527, %v93, 0.0
    %763 = vadd.xlane.f32.xlu0 %v762
    %v764 = vpop.xlane.xlu0 %763
    %v765 = vsel %vm527, %v94, 0.0
    %766 = vadd.xlane.f32.xlu0 %v765
    %v767 = vpop.xlane.xlu0 %766
    %v768 = vsel %vm527, %v95, 0.0
    %769 = vadd.xlane.f32.xlu0 %v768
    %v770 = vpop.xlane.xlu0 %769
    %v771 = vsel %vm527, %v96, 0.0
    %772 = vadd.xlane.f32.xlu0 %v771
    %v773 = vpop.xlane.xlu0 %772
    %v774 = vsel %vm527, %v97, 0.0
    %775 = vadd.xlane.f32.xlu0 %v774
    %v776 = vpop.xlane.xlu0 %775
    %v777 = vsel %vm527, %v98, 0.0
    %778 = vadd.xlane.f32.xlu0 %v777
    %v779 = vpop.xlane.xlu0 %778
    %v780 = vsel %vm527, %v99, 0.0
    %781 = vadd.xlane.f32.xlu0 %v780
    %v782 = vpop.xlane.xlu0 %781
    %v783 = vsel %vm527, %v100, 0.0
    %784 = vadd.xlane.f32.xlu0 %v783
    %v785 = vpop.xlane.xlu0 %784
    %v786 = vsel %vm527, %v101, 0.0
    %787 = vadd.xlane.f32.xlu0 %v786
    %v788 = vpop.xlane.xlu0 %787
    %v789 = vsel %vm527, %v102, 0.0
    %790 = vadd.xlane.f32.xlu0 %v789
    %v791 = vpop.xlane.xlu0 %790
    %v792 = vsel %vm527, %v103, 0.0
    %793 = vadd.xlane.f32.xlu0 %v792
    %v794 = vpop.xlane.xlu0 %793
    %v795 = vsel %vm527, %v104, 0.0
    %796 = vadd.xlane.f32.xlu0 %v795
    %v797 = vpop.xlane.xlu0 %796
    %v798 = vsel %vm527, %v105, 0.0
    %799 = vadd.xlane.f32.xlu0 %v798
    %v800 = vpop.xlane.xlu0 %799
    %v801 = vsel %vm527, %v106, 0.0
    %802 = vadd.xlane.f32.xlu0 %v801
    %v803 = vpop.xlane.xlu0 %802
    %v804 = vsel %vm527, %v107, 0.0
    %805 = vadd.xlane.f32.xlu0 %v804
    %v806 = vpop.xlane.xlu0 %805
    %v807 = vsel %vm527, %v108, 0.0
    %808 = vadd.xlane.f32.xlu0 %v807
    %v809 = vpop.xlane.xlu0 %808
    %v810 = vsel %vm527, %v109, 0.0
    %811 = vadd.xlane.f32.xlu0 %v810
    %v812 = vpop.xlane.xlu0 %811
    %v813 = vsel %vm527, %v110, 0.0
    %814 = vadd.xlane.f32.xlu0 %v813
    %v815 = vpop.xlane.xlu0 %814
    %v816 = vsel %vm527, %v111, 0.0
    %817 = vadd.xlane.f32.xlu0 %v816
    %v818 = vpop.xlane.xlu0 %817
    %v819 = vsel %vm527, %v112, 0.0
    %820 = vadd.xlane.f32.xlu0 %v819
    %v821 = vpop.xlane.xlu0 %820
    %v822 = vsel %vm527, %v113, 0.0
    %823 = vadd.xlane.f32.xlu0 %v822
    %v824 = vpop.xlane.xlu0 %823
    %v825 = vsel %vm527, %v114, 0.0
    %826 = vadd.xlane.f32.xlu0 %v825
    %v827 = vpop.xlane.xlu0 %826
    %v828 = vsel %vm527, %v115, 0.0
    %829 = vadd.xlane.f32.xlu0 %v828
    %v830 = vpop.xlane.xlu0 %829
    %v831 = vsel %vm527, %v116, 0.0
    %832 = vadd.xlane.f32.xlu0 %v831
    %v833 = vpop.xlane.xlu0 %832
    %v834 = vsel %vm527, %v117, 0.0
    %835 = vadd.xlane.f32.xlu0 %v834
    %v836 = vpop.xlane.xlu0 %835
    %v837 = vsel %vm527, %v118, 0.0
    %838 = vadd.xlane.f32.xlu0 %v837
    %v839 = vpop.xlane.xlu0 %838
    %v840 = vsel %vm527, %v119, 0.0
    %841 = vadd.xlane.f32.xlu0 %v840
    %v842 = vpop.xlane.xlu0 %841
    %v843 = vsel %vm527, %v120, 0.0
    %844 = vadd.xlane.f32.xlu0 %v843
    %v845 = vpop.xlane.xlu0 %844
    %v846 = vsel %vm527, %v121, 0.0
    %847 = vadd.xlane.f32.xlu0 %v846
    %v848 = vpop.xlane.xlu0 %847
    %v849 = vsel %vm527, %v122, 0.0
    %850 = vadd.xlane.f32.xlu0 %v849
    %v851 = vpop.xlane.xlu0 %850
    %v852 = vsel %vm527, %v123, 0.0
    %853 = vadd.xlane.f32.xlu0 %v852
    %v854 = vpop.xlane.xlu0 %853
    %v855 = vsel %vm527, %v124, 0.0
    %856 = vadd.xlane.f32.xlu0 %v855
    %v857 = vpop.xlane.xlu0 %856
    %v858 = vsel %vm527, %v125, 0.0
    %859 = vadd.xlane.f32.xlu0 %v858
    %v860 = vpop.xlane.xlu0 %859
    %v861 = vsel %vm527, %v126, 0.0
    %862 = vadd.xlane.f32.xlu0 %v861
    %v863 = vpop.xlane.xlu0 %862
    %v864 = vsel %vm527, %v127, 0.0
    %865 = vadd.xlane.f32.xlu0 %v864
    %v866 = vpop.xlane.xlu0 %865
    %v867 = vsel %vm527, %v128, 0.0
    %868 = vadd.xlane.f32.xlu0 %v867
    %v869 = vpop.xlane.xlu0 %868
    %v870 = vsel %vm527, %v129, 0.0
    %871 = vadd.xlane.f32.xlu0 %v870
    %v872 = vpop.xlane.xlu0 %871
    %v873 = vsel %vm527, %v130, 0.0
    %874 = vadd.xlane.f32.xlu0 %v873
    %v875 = vpop.xlane.xlu0 %874
    %v876 = vsel %vm527, %v131, 0.0
    %877 = vadd.xlane.f32.xlu0 %v876
    %v878 = vpop.xlane.xlu0 %877
    %v879 = vsel %vm527, %v132, 0.0
    %880 = vadd.xlane.f32.xlu0 %v879
    %v881 = vpop.xlane.xlu0 %880
    %v882 = vsel %vm527, %v133, 0.0
    %883 = vadd.xlane.f32.xlu0 %v882
    %v884 = vpop.xlane.xlu0 %883
    %v885 = vsel %vm527, %v134, 0.0
    %886 = vadd.xlane.f32.xlu0 %v885
    %v887 = vpop.xlane.xlu0 %886
    %v888 = vsel %vm527, %v135, 0.0
    %889 = vadd.xlane.f32.xlu0 %v888
    %v890 = vpop.xlane.xlu0 %889
    %v891 = vsel %vm527, %v136, 0.0
    %892 = vadd.xlane.f32.xlu0 %v891
    %v893 = vpop.xlane.xlu0 %892
    %v894 = vsel %vm527, %v137, 0.0
    %895 = vadd.xlane.f32.xlu0 %v894
    %v896 = vpop.xlane.xlu0 %895
    %v897 = vsel %vm527, %v138, 0.0
    %898 = vadd.xlane.f32.xlu0 %v897
    %v899 = vpop.xlane.xlu0 %898
    %v900 = vsel %vm527, %v139, 0.0
    %901 = vadd.xlane.f32.xlu0 %v900
    %v902 = vpop.xlane.xlu0 %901
    %v903 = vsel %vm527, %v140, 0.0
    %904 = vadd.xlane.f32.xlu0 %v903
    %v905 = vpop.xlane.xlu0 %904
    %v906 = vsel %vm527, %v141, 0.0
    %907 = vadd.xlane.f32.xlu0 %v906
    %v908 = vpop.xlane.xlu0 %907
    %v909 = vsel %vm527, %v142, 0.0
    %910 = vadd.xlane.f32.xlu0 %v909
    %v911 = vpop.xlane.xlu0 %910
    %v912 = vsel %vm527, %v143, 0.0
    %913 = vadd.xlane.f32.xlu0 %v912
    %v914 = vpop.xlane.xlu0 %913
    %v915 = vsel %vm527, %v144, 0.0
    %916 = vadd.xlane.f32.xlu0 %v915
    %v917 = vpop.xlane.xlu0 %916
    %v918 = vsel %vm527, %v145, 0.0
    %919 = vadd.xlane.f32.xlu0 %v918
    %v920 = vpop.xlane.xlu0 %919
    %v921 = vsel %vm527, %v146, 0.0
    %922 = vadd.xlane.f32.xlu0 %v921
    %v923 = vpop.xlane.xlu0 %922
    %v924 = vsel %vm527, %v147, 0.0
    %925 = vadd.xlane.f32.xlu0 %v924
    %v926 = vpop.xlane.xlu0 %925
    %v927 = vsel %vm527, %v148, 0.0
    %928 = vadd.xlane.f32.xlu0 %v927
    %v929 = vpop.xlane.xlu0 %928
    %v930 = vsel %vm527, %v149, 0.0
    %931 = vadd.xlane.f32.xlu0 %v930
    %v932 = vpop.xlane.xlu0 %931
    %v933 = vsel %vm527, %v150, 0.0
    %934 = vadd.xlane.f32.xlu0 %v933
    %v935 = vpop.xlane.xlu0 %934
    %v936 = vsel %vm527, %v151, 0.0
    %937 = vadd.xlane.f32.xlu0 %v936
    %v938 = vpop.xlane.xlu0 %937
    %v939 = vsel %vm527, %v152, 0.0
    %940 = vadd.xlane.f32.xlu0 %v939
    %v941 = vpop.xlane.xlu0 %940
    %v942 = vsel %vm527, %v153, 0.0
    %943 = vadd.xlane.f32.xlu0 %v942
    %v944 = vpop.xlane.xlu0 %943
    %v945 = vsel %vm527, %v154, 0.0
    %946 = vadd.xlane.f32.xlu0 %v945
    %v947 = vpop.xlane.xlu0 %946
    %v948 = vsel %vm527, %v155, 0.0
    %949 = vadd.xlane.f32.xlu0 %v948
    %v950 = vpop.xlane.xlu0 %949
    %v951 = vsel %vm527, %v156, 0.0
    %952 = vadd.xlane.f32.xlu0 %v951
    %v953 = vpop.xlane.xlu0 %952
    %v954 = vsel %vm527, %v157, 0.0
    %955 = vadd.xlane.f32.xlu0 %v954
    %v956 = vpop.xlane.xlu0 %955
    %v957 = vsel %vm527, %v158, 0.0
    %958 = vadd.xlane.f32.xlu0 %v957
    %v959 = vpop.xlane.xlu0 %958
    %v960 = vsel %vm527, %v159, 0.0
    %961 = vadd.xlane.f32.xlu0 %v960
    %v962 = vpop.xlane.xlu0 %961
    %v963 = vsel %vm527, %v160, 0.0
    %964 = vadd.xlane.f32.xlu0 %v963
    %v965 = vpop.xlane.xlu0 %964
    %v966 = vsel %vm527, %v161, 0.0
    %967 = vadd.xlane.f32.xlu0 %v966
    %v968 = vpop.xlane.xlu0 %967
    %v969 = vsel %vm527, %v162, 0.0
    %970 = vadd.xlane.f32.xlu0 %v969
    %v971 = vpop.xlane.xlu0 %970
    %v972 = vsel %vm527, %v163, 0.0
    %973 = vadd.xlane.f32.xlu0 %v972
    %v974 = vpop.xlane.xlu0 %973
    %v975 = vsel %vm527, %v164, 0.0
    %976 = vadd.xlane.f32.xlu0 %v975
    %v977 = vpop.xlane.xlu0 %976
    %v978 = vsel %vm527, %v165, 0.0
    %979 = vadd.xlane.f32.xlu0 %v978
    %v980 = vpop.xlane.xlu0 %979
    %v981 = vsel %vm527, %v166, 0.0
    %982 = vadd.xlane.f32.xlu0 %v981
    %v983 = vpop.xlane.xlu0 %982
    %v984 = vsel %vm527, %v167, 0.0
    %985 = vadd.xlane.f32.xlu0 %v984
    %v986 = vpop.xlane.xlu0 %985
    %v987 = vsel %vm527, %v168, 0.0
    %988 = vadd.xlane.f32.xlu0 %v987
    %v989 = vpop.xlane.xlu0 %988
    %v990 = vsel %vm527, %v169, 0.0
    %991 = vadd.xlane.f32.xlu0 %v990
    %v992 = vpop.xlane.xlu0 %991
    %v993 = vsel %vm527, %v170, 0.0
    %994 = vadd.xlane.f32.xlu0 %v993
    %v995 = vpop.xlane.xlu0 %994
    %v996 = vsel %vm527, %v171, 0.0
    %997 = vadd.xlane.f32.xlu0 %v996
    %v998 = vpop.xlane.xlu0 %997
    %v999 = vsel %vm527, %v172, 0.0
    %1000 = vadd.xlane.f32.xlu0 %v999
    %v1001 = vpop.xlane.xlu0 %1000
    %v1002 = vsel %vm527, %v173, 0.0
    %1003 = vadd.xlane.f32.xlu0 %v1002
    %v1004 = vpop.xlane.xlu0 %1003
    %v1005 = vsel %vm527, %v174, 0.0
    %1006 = vadd.xlane.f32.xlu0 %v1005
    %v1007 = vpop.xlane.xlu0 %1006
    %v1008 = vsel %vm527, %v175, 0.0
    %1009 = vadd.xlane.f32.xlu0 %v1008
    %v1010 = vpop.xlane.xlu0 %1009
    %v1011 = vsel %vm527, %v176, 0.0
    %1012 = vadd.xlane.f32.xlu0 %v1011
    %v1013 = vpop.xlane.xlu0 %1012
    %v1014 = vsel %vm527, %v177, 0.0
    %1015 = vadd.xlane.f32.xlu0 %v1014
    %v1016 = vpop.xlane.xlu0 %1015
    %v1017 = vsel %vm527, %v178, 0.0
    %1018 = vadd.xlane.f32.xlu0 %v1017
    %v1019 = vpop.xlane.xlu0 %1018
    %v1020 = vsel %vm527, %v179, 0.0
    %1021 = vadd.xlane.f32.xlu0 %v1020
    %v1022 = vpop.xlane.xlu0 %1021
    %v1023 = vsel %vm527, %v180, 0.0
    %1024 = vadd.xlane.f32.xlu0 %v1023
    %v1025 = vpop.xlane.xlu0 %1024
    %v1026 = vsel %vm527, %v181, 0.0
    %1027 = vadd.xlane.f32.xlu0 %v1026
    %v1028 = vpop.xlane.xlu0 %1027
    %v1029 = vsel %vm527, %v182, 0.0
    %1030 = vadd.xlane.f32.xlu0 %v1029
    %v1031 = vpop.xlane.xlu0 %1030
    %v1032 = vsel %vm527, %v183, 0.0
    %1033 = vadd.xlane.f32.xlu0 %v1032
    %v1034 = vpop.xlane.xlu0 %1033
    %v1035 = vsel %vm527, %v184, 0.0
    %1036 = vadd.xlane.f32.xlu0 %v1035
    %v1037 = vpop.xlane.xlu0 %1036
    %v1038 = vsel %vm527, %v185, 0.0
    %1039 = vadd.xlane.f32.xlu0 %v1038
    %v1040 = vpop.xlane.xlu0 %1039
    %v1041 = vsel %vm527, %v186, 0.0
    %1042 = vadd.xlane.f32.xlu0 %v1041
    %v1043 = vpop.xlane.xlu0 %1042
    %v1044 = vsel %vm527, %v187, 0.0
    %1045 = vadd.xlane.f32.xlu0 %v1044
    %v1046 = vpop.xlane.xlu0 %1045
    %v1047 = vsel %vm527, %v188, 0.0
    %1048 = vadd.xlane.f32.xlu0 %v1047
    %v1049 = vpop.xlane.xlu0 %1048
    %v1050 = vsel %vm527, %v189, 0.0
    %1051 = vadd.xlane.f32.xlu0 %v1050
    %v1052 = vpop.xlane.xlu0 %1051
    %v1053 = vsel %vm527, %v190, 0.0
    %1054 = vadd.xlane.f32.xlu0 %v1053
    %v1055 = vpop.xlane.xlu0 %1054
    %v1056 = vsel %vm527, %v191, 0.0
    %1057 = vadd.xlane.f32.xlu0 %v1056
    %v1058 = vpop.xlane.xlu0 %1057
    %v1059 = vsel %vm527, %v192, 0.0
    %1060 = vadd.xlane.f32.xlu0 %v1059
    %v1061 = vpop.xlane.xlu0 %1060
    %v1062 = vsel %vm527, %v193, 0.0
    %1063 = vadd.xlane.f32.xlu0 %v1062
    %v1064 = vpop.xlane.xlu0 %1063
    %v1065 = vsel %vm527, %v194, 0.0
    %1066 = vadd.xlane.f32.xlu0 %v1065
    %v1067 = vpop.xlane.xlu0 %1066
    %v1068 = vsel %vm527, %v195, 0.0
    %1069 = vadd.xlane.f32.xlu0 %v1068
    %v1070 = vpop.xlane.xlu0 %1069
    %v1071 = vsel %vm527, %v196, 0.0
    %1072 = vadd.xlane.f32.xlu0 %v1071
    %v1073 = vpop.xlane.xlu0 %1072
    %v1074 = vsel %vm527, %v197, 0.0
    %1075 = vadd.xlane.f32.xlu0 %v1074
    %v1076 = vpop.xlane.xlu0 %1075
    %v1077 = vsel %vm527, %v198, 0.0
    %1078 = vadd.xlane.f32.xlu0 %v1077
    %v1079 = vpop.xlane.xlu0 %1078
    %v1080 = vsel %vm527, %v199, 0.0
    %1081 = vadd.xlane.f32.xlu0 %v1080
    %v1082 = vpop.xlane.xlu0 %1081
    %v1083 = vsel %vm527, %v200, 0.0
    %1084 = vadd.xlane.f32.xlu0 %v1083
    %v1085 = vpop.xlane.xlu0 %1084
    %v1086 = vsel %vm527, %v201, 0.0
    %1087 = vadd.xlane.f32.xlu0 %v1086
    %v1088 = vpop.xlane.xlu0 %1087
    %v1089 = vsel %vm527, %v202, 0.0
    %1090 = vadd.xlane.f32.xlu0 %v1089
    %v1091 = vpop.xlane.xlu0 %1090
    %v1092 = vsel %vm527, %v203, 0.0
    %1093 = vadd.xlane.f32.xlu0 %v1092
    %v1094 = vpop.xlane.xlu0 %1093
    %v1095 = vsel %vm527, %v204, 0.0
    %1096 = vadd.xlane.f32.xlu0 %v1095
    %v1097 = vpop.xlane.xlu0 %1096
    %v1098 = vsel %vm527, %v205, 0.0
    %1099 = vadd.xlane.f32.xlu0 %v1098
    %v1100 = vpop.xlane.xlu0 %1099
    %v1101 = vsel %vm527, %v206, 0.0
    %1102 = vadd.xlane.f32.xlu0 %v1101
    %v1103 = vpop.xlane.xlu0 %1102
    %v1104 = vsel %vm527, %v207, 0.0
    %1105 = vadd.xlane.f32.xlu0 %v1104
    %v1106 = vpop.xlane.xlu0 %1105
    %v1107 = vsel %vm527, %v208, 0.0
    %1108 = vadd.xlane.f32.xlu0 %v1107
    %v1109 = vpop.xlane.xlu0 %1108
    %v1110 = vsel %vm527, %v209, 0.0
    %1111 = vadd.xlane.f32.xlu0 %v1110
    %v1112 = vpop.xlane.xlu0 %1111
    %v1113 = vsel %vm527, %v210, 0.0
    %1114 = vadd.xlane.f32.xlu0 %v1113
    %v1115 = vpop.xlane.xlu0 %1114
    %v1116 = vsel %vm527, %v211, 0.0
    %1117 = vadd.xlane.f32.xlu0 %v1116
    %v1118 = vpop.xlane.xlu0 %1117
    %v1119 = vsel %vm527, %v212, 0.0
    %1120 = vadd.xlane.f32.xlu0 %v1119
    %v1121 = vpop.xlane.xlu0 %1120
    %v1122 = vsel %vm527, %v213, 0.0
    %1123 = vadd.xlane.f32.xlu0 %v1122
    %v1124 = vpop.xlane.xlu0 %1123
    %v1125 = vsel %vm527, %v214, 0.0
    %1126 = vadd.xlane.f32.xlu0 %v1125
    %v1127 = vpop.xlane.xlu0 %1126
    %v1128 = vsel %vm527, %v215, 0.0
    %1129 = vadd.xlane.f32.xlu0 %v1128
    %v1130 = vpop.xlane.xlu0 %1129
    %v1131 = vsel %vm527, %v216, 0.0
    %1132 = vadd.xlane.f32.xlu0 %v1131
    %v1133 = vpop.xlane.xlu0 %1132
    %v1134 = vsel %vm527, %v217, 0.0
    %1135 = vadd.xlane.f32.xlu0 %v1134
    %v1136 = vpop.xlane.xlu0 %1135
    %v1137 = vsel %vm527, %v218, 0.0
    %1138 = vadd.xlane.f32.xlu0 %v1137
    %v1139 = vpop.xlane.xlu0 %1138
    %v1140 = vsel %vm527, %v219, 0.0
    %1141 = vadd.xlane.f32.xlu0 %v1140
    %v1142 = vpop.xlane.xlu0 %1141
    %v1143 = vsel %vm527, %v220, 0.0
    %1144 = vadd.xlane.f32.xlu0 %v1143
    %v1145 = vpop.xlane.xlu0 %1144
    %v1146 = vsel %vm527, %v221, 0.0
    %1147 = vadd.xlane.f32.xlu0 %v1146
    %v1148 = vpop.xlane.xlu0 %1147
    %v1149 = vsel %vm527, %v222, 0.0
    %1150 = vadd.xlane.f32.xlu0 %v1149
    %v1151 = vpop.xlane.xlu0 %1150
    %v1152 = vsel %vm527, %v223, 0.0
    %1153 = vadd.xlane.f32.xlu0 %v1152
    %v1154 = vpop.xlane.xlu0 %1153
    %v1155 = vsel %vm527, %v224, 0.0
    %1156 = vadd.xlane.f32.xlu0 %v1155
    %v1157 = vpop.xlane.xlu0 %1156
    %v1158 = vsel %vm527, %v225, 0.0
    %1159 = vadd.xlane.f32.xlu0 %v1158
    %v1160 = vpop.xlane.xlu0 %1159
    %v1161 = vsel %vm527, %v226, 0.0
    %1162 = vadd.xlane.f32.xlu0 %v1161
    %v1163 = vpop.xlane.xlu0 %1162
    %v1164 = vsel %vm527, %v227, 0.0
    %1165 = vadd.xlane.f32.xlu0 %v1164
    %v1166 = vpop.xlane.xlu0 %1165
    %v1167 = vsel %vm527, %v228, 0.0
    %1168 = vadd.xlane.f32.xlu0 %v1167
    %v1169 = vpop.xlane.xlu0 %1168
    %v1170 = vsel %vm527, %v229, 0.0
    %1171 = vadd.xlane.f32.xlu0 %v1170
    %v1172 = vpop.xlane.xlu0 %1171
    %v1173 = vsel %vm527, %v230, 0.0
    %1174 = vadd.xlane.f32.xlu0 %v1173
    %v1175 = vpop.xlane.xlu0 %1174
    %v1176 = vsel %vm527, %v231, 0.0
    %1177 = vadd.xlane.f32.xlu0 %v1176
    %v1178 = vpop.xlane.xlu0 %1177
    %v1179 = vsel %vm527, %v232, 0.0
    %1180 = vadd.xlane.f32.xlu0 %v1179
    %v1181 = vpop.xlane.xlu0 %1180
    %v1182 = vsel %vm527, %v233, 0.0
    %1183 = vadd.xlane.f32.xlu0 %v1182
    %v1184 = vpop.xlane.xlu0 %1183
    %v1185 = vsel %vm527, %v234, 0.0
    %1186 = vadd.xlane.f32.xlu0 %v1185
    %v1187 = vpop.xlane.xlu0 %1186
    %v1188 = vsel %vm527, %v235, 0.0
    %1189 = vadd.xlane.f32.xlu0 %v1188
    %v1190 = vpop.xlane.xlu0 %1189
    %v1191 = vsel %vm527, %v236, 0.0
    %1192 = vadd.xlane.f32.xlu0 %v1191
    %v1193 = vpop.xlane.xlu0 %1192
    %v1194 = vsel %vm527, %v237, 0.0
    %1195 = vadd.xlane.f32.xlu0 %v1194
    %v1196 = vpop.xlane.xlu0 %1195
    %v1197 = vsel %vm527, %v238, 0.0
    %1198 = vadd.xlane.f32.xlu0 %v1197
    %v1199 = vpop.xlane.xlu0 %1198
    %v1200 = vsel %vm527, %v239, 0.0
    %1201 = vadd.xlane.f32.xlu0 %v1200
    %v1202 = vpop.xlane.xlu0 %1201
    %v1203 = vsel %vm527, %v240, 0.0
    %1204 = vadd.xlane.f32.xlu0 %v1203
    %v1205 = vpop.xlane.xlu0 %1204
    %v1206 = vsel %vm527, %v241, 0.0
    %1207 = vadd.xlane.f32.xlu0 %v1206
    %v1208 = vpop.xlane.xlu0 %1207
    %v1209 = vsel %vm527, %v242, 0.0
    %1210 = vadd.xlane.f32.xlu0 %v1209
    %v1211 = vpop.xlane.xlu0 %1210
    %v1212 = vsel %vm527, %v243, 0.0
    %1213 = vadd.xlane.f32.xlu0 %v1212
    %v1214 = vpop.xlane.xlu0 %1213
    %v1215 = vsel %vm527, %v244, 0.0
    %1216 = vadd.xlane.f32.xlu0 %v1215
    %v1217 = vpop.xlane.xlu0 %1216
    %v1218 = vsel %vm527, %v245, 0.0
    %1219 = vadd.xlane.f32.xlu0 %v1218
    %v1220 = vpop.xlane.xlu0 %1219
    %v1221 = vsel %vm527, %v246, 0.0
    %1222 = vadd.xlane.f32.xlu0 %v1221
    %v1223 = vpop.xlane.xlu0 %1222
    %v1224 = vsel %vm527, %v247, 0.0
    %1225 = vadd.xlane.f32.xlu0 %v1224
    %v1226 = vpop.xlane.xlu0 %1225
    %v1227 = vsel %vm527, %v248, 0.0
    %1228 = vadd.xlane.f32.xlu0 %v1227
    %v1229 = vpop.xlane.xlu0 %1228
    %v1230 = vsel %vm527, %v249, 0.0
    %1231 = vadd.xlane.f32.xlu0 %v1230
    %v1232 = vpop.xlane.xlu0 %1231
    %v1233 = vsel %vm527, %v250, 0.0
    %1234 = vadd.xlane.f32.xlu0 %v1233
    %v1235 = vpop.xlane.xlu0 %1234
    %v1236 = vsel %vm527, %v251, 0.0
    %1237 = vadd.xlane.f32.xlu0 %v1236
    %v1238 = vpop.xlane.xlu0 %1237
    %v1239 = vsel %vm527, %v252, 0.0
    %1240 = vadd.xlane.f32.xlu0 %v1239
    %v1241 = vpop.xlane.xlu0 %1240
    %v1242 = vsel %vm527, %v253, 0.0
    %1243 = vadd.xlane.f32.xlu0 %v1242
    %v1244 = vpop.xlane.xlu0 %1243
    %v1245 = vsel %vm527, %v254, 0.0
    %1246 = vadd.xlane.f32.xlu0 %v1245
    %v1247 = vpop.xlane.xlu0 %1246
    %v1248 = vsel %vm527, %v255, 0.0
    %1249 = vadd.xlane.f32.xlu0 %v1248
    %v1250 = vpop.xlane.xlu0 %1249
    %v1251 = vsel %vm527, %v256, 0.0
    %1252 = vadd.xlane.f32.xlu0 %v1251
    %v1253 = vpop.xlane.xlu0 %1252
    %v1254 = vsel %vm527, %v257, 0.0
    %1255 = vadd.xlane.f32.xlu0 %v1254
    %v1256 = vpop.xlane.xlu0 %1255
    %v1257 = vsel %vm527, %v258, 0.0
    %1258 = vadd.xlane.f32.xlu0 %v1257
    %v1259 = vpop.xlane.xlu0 %1258
    %v1260 = vsel %vm527, %v259, 0.0
    %1261 = vadd.xlane.f32.xlu0 %v1260
    %v1262 = vpop.xlane.xlu0 %1261
    %v1263 = vsel %vm527, %v260, 0.0
    %1264 = vadd.xlane.f32.xlu0 %v1263
    %v1265 = vpop.xlane.xlu0 %1264
    %v1266 = vsel %vm527, %v261, 0.0
    %1267 = vadd.xlane.f32.xlu0 %v1266
    %v1268 = vpop.xlane.xlu0 %1267
    %v1269 = vsel %vm527, %v262, 0.0
    %1270 = vadd.xlane.f32.xlu0 %v1269
    %v1271 = vpop.xlane.xlu0 %1270
    %v1272 = vsel %vm527, %v263, 0.0
    %1273 = vadd.xlane.f32.xlu0 %v1272
    %v1274 = vpop.xlane.xlu0 %1273
    %v1275 = vsel %vm527, %v264, 0.0
    %1276 = vadd.xlane.f32.xlu0 %v1275
    %v1277 = vpop.xlane.xlu0 %1276
    %v1278 = vsel %vm527, %v265, 0.0
    %1279 = vadd.xlane.f32.xlu0 %v1278
    %v1280 = vpop.xlane.xlu0 %1279
    %v1281 = vsel %vm527, %v266, 0.0
    %1282 = vadd.xlane.f32.xlu0 %v1281
    %v1283 = vpop.xlane.xlu0 %1282
    %v1284 = vsel %vm527, %v267, 0.0
    %1285 = vadd.xlane.f32.xlu0 %v1284
    %v1286 = vpop.xlane.xlu0 %1285
    %v1287 = vsel %vm527, %v268, 0.0
    %1288 = vadd.xlane.f32.xlu0 %v1287
    %v1289 = vpop.xlane.xlu0 %1288
    %v1290 = vsel %vm527, %v269, 0.0
    %1291 = vadd.xlane.f32.xlu0 %v1290
    %v1292 = vpop.xlane.xlu0 %1291
    %v1293 = vsel %vm527, %v270, 0.0
    %1294 = vadd.xlane.f32.xlu0 %v1293
    %v1295 = vpop.xlane.xlu0 %1294
    %v1296 = vsel %vm527, %v271, 0.0
    %1297 = vadd.xlane.f32.xlu0 %v1296
    %v1298 = vpop.xlane.xlu0 %1297
    %v1299 = vsel %vm527, %v272, 0.0
    %1300 = vadd.xlane.f32.xlu0 %v1299
    %v1301 = vpop.xlane.xlu0 %1300
    %v1302 = vsel %vm527, %v273, 0.0
    %1303 = vadd.xlane.f32.xlu0 %v1302
    %v1304 = vpop.xlane.xlu0 %1303
    %v1305 = vsel %vm527, %v274, 0.0
    %1306 = vadd.xlane.f32.xlu0 %v1305
    %v1307 = vpop.xlane.xlu0 %1306
    %v1308 = vsel %vm527, %v275, 0.0
    %1309 = vadd.xlane.f32.xlu0 %v1308
    %v1310 = vpop.xlane.xlu0 %1309
    %v1311 = vsel %vm527, %v276, 0.0
    %1312 = vadd.xlane.f32.xlu0 %v1311
    %v1313 = vpop.xlane.xlu0 %1312
    %v1314 = vsel %vm527, %v277, 0.0
    %1315 = vadd.xlane.f32.xlu0 %v1314
    %v1316 = vpop.xlane.xlu0 %1315
    %v1317 = vsel %vm527, %v278, 0.0
    %1318 = vadd.xlane.f32.xlu0 %v1317
    %v1319 = vpop.xlane.xlu0 %1318
    %v1320 = vsel %vm527, %v279, 0.0
    %1321 = vadd.xlane.f32.xlu0 %v1320
    %v1322 = vpop.xlane.xlu0 %1321
    %v1323 = vsel %vm527, %v280, 0.0
    %1324 = vadd.xlane.f32.xlu0 %v1323
    %v1325 = vpop.xlane.xlu0 %1324
    %v1326 = vsel %vm527, %v281, 0.0
    %1327 = vadd.xlane.f32.xlu0 %v1326
    %v1328 = vpop.xlane.xlu0 %1327
    %v1329 = vsel %vm527, %v282, 0.0
    %1330 = vadd.xlane.f32.xlu0 %v1329
    %v1331 = vpop.xlane.xlu0 %1330
    %v1332 = vsel %vm527, %v283, 0.0
    %1333 = vadd.xlane.f32.xlu0 %v1332
    %v1334 = vpop.xlane.xlu0 %1333
    %v1335 = vsel %vm527, %v284, 0.0
    %1336 = vadd.xlane.f32.xlu0 %v1335
    %v1337 = vpop.xlane.xlu0 %1336
    %v1338 = vsel %vm527, %v285, 0.0
    %1339 = vadd.xlane.f32.xlu0 %v1338
    %v1340 = vpop.xlane.xlu0 %1339
    %v1341 = vsel %vm527, %v286, 0.0
    %1342 = vadd.xlane.f32.xlu0 %v1341
    %v1343 = vpop.xlane.xlu0 %1342
    %v1344 = vsel %vm527, %v287, 0.0
    %1345 = vadd.xlane.f32.xlu0 %v1344
    %v1346 = vpop.xlane.xlu0 %1345
    %v1347 = vsel %vm527, %v288, 0.0
    %1348 = vadd.xlane.f32.xlu0 %v1347
    %v1349 = vpop.xlane.xlu0 %1348
    %v1350 = vsel %vm527, %v289, 0.0
    %1351 = vadd.xlane.f32.xlu0 %v1350
    %v1352 = vpop.xlane.xlu0 %1351
    %v1353 = vsel %vm527, %v290, 0.0
    %1354 = vadd.xlane.f32.xlu0 %v1353
    %v1355 = vpop.xlane.xlu0 %1354
    %v1356 = vsel %vm527, %v291, 0.0
    %1357 = vadd.xlane.f32.xlu0 %v1356
    %v1358 = vpop.xlane.xlu0 %1357
    %v1359 = vsel %vm527, %v292, 0.0
    %1360 = vadd.xlane.f32.xlu0 %v1359
    %v1361 = vpop.xlane.xlu0 %1360
    %v1362 = vsel %vm527, %v293, 0.0
    %1363 = vadd.xlane.f32.xlu0 %v1362
    %v1364 = vpop.xlane.xlu0 %1363
    %v1365 = vsel %vm527, %v294, 0.0
    %1366 = vadd.xlane.f32.xlu0 %v1365
    %v1367 = vpop.xlane.xlu0 %1366
    %v1368 = vsel %vm527, %v295, 0.0
    %1369 = vadd.xlane.f32.xlu0 %v1368
    %v1370 = vpop.xlane.xlu0 %1369
    %v1371 = vsel %vm527, %v296, 0.0
    %1372 = vadd.xlane.f32.xlu0 %v1371
    %v1373 = vpop.xlane.xlu0 %1372
    %v1374 = vsel %vm527, %v297, 0.0
    %1375 = vadd.xlane.f32.xlu0 %v1374
    %v1376 = vpop.xlane.xlu0 %1375
    %v1377 = vsel %vm527, %v298, 0.0
    %1378 = vadd.xlane.f32.xlu0 %v1377
    %v1379 = vpop.xlane.xlu0 %1378
    %v1380 = vsel %vm527, %v299, 0.0
    %1381 = vadd.xlane.f32.xlu0 %v1380
    %v1382 = vpop.xlane.xlu0 %1381
    %v1383 = vsel %vm527, %v300, 0.0
    %1384 = vadd.xlane.f32.xlu0 %v1383
    %v1385 = vpop.xlane.xlu0 %1384
    %v1386 = vsel %vm527, %v301, 0.0
    %1387 = vadd.xlane.f32.xlu0 %v1386
    %v1388 = vpop.xlane.xlu0 %1387
    %v1389 = vsel %vm527, %v302, 0.0
    %1390 = vadd.xlane.f32.xlu0 %v1389
    %v1391 = vpop.xlane.xlu0 %1390
    %v1392 = vsel %vm527, %v303, 0.0
    %1393 = vadd.xlane.f32.xlu0 %v1392
    %v1394 = vpop.xlane.xlu0 %1393
    %v1395 = vsel %vm527, %v304, 0.0
    %1396 = vadd.xlane.f32.xlu0 %v1395
    %v1397 = vpop.xlane.xlu0 %1396
    %v1398 = vsel %vm527, %v305, 0.0
    %1399 = vadd.xlane.f32.xlu0 %v1398
    %v1400 = vpop.xlane.xlu0 %1399
    %v1401 = vsel %vm527, %v306, 0.0
    %1402 = vadd.xlane.f32.xlu0 %v1401
    %v1403 = vpop.xlane.xlu0 %1402
    %v1404 = vsel %vm527, %v307, 0.0
    %1405 = vadd.xlane.f32.xlu0 %v1404
    %v1406 = vpop.xlane.xlu0 %1405
    %v1407 = vsel %vm527, %v308, 0.0
    %1408 = vadd.xlane.f32.xlu0 %v1407
    %v1409 = vpop.xlane.xlu0 %1408
    %v1410 = vsel %vm527, %v309, 0.0
    %1411 = vadd.xlane.f32.xlu0 %v1410
    %v1412 = vpop.xlane.xlu0 %1411
    %v1413 = vsel %vm527, %v310, 0.0
    %1414 = vadd.xlane.f32.xlu0 %v1413
    %v1415 = vpop.xlane.xlu0 %1414
    %v1416 = vsel %vm527, %v311, 0.0
    %1417 = vadd.xlane.f32.xlu0 %v1416
    %v1418 = vpop.xlane.xlu0 %1417
    %v1419 = vsel %vm527, %v312, 0.0
    %1420 = vadd.xlane.f32.xlu0 %v1419
    %v1421 = vpop.xlane.xlu0 %1420
    %v1422 = vsel %vm527, %v313, 0.0
    %1423 = vadd.xlane.f32.xlu0 %v1422
    %v1424 = vpop.xlane.xlu0 %1423
    %v1425 = vsel %vm527, %v314, 0.0
    %1426 = vadd.xlane.f32.xlu0 %v1425
    %v1427 = vpop.xlane.xlu0 %1426
    %v1428 = vsel %vm527, %v315, 0.0
    %1429 = vadd.xlane.f32.xlu0 %v1428
    %v1430 = vpop.xlane.xlu0 %1429
    %v1431 = vsel %vm527, %v316, 0.0
    %1432 = vadd.xlane.f32.xlu0 %v1431
    %v1433 = vpop.xlane.xlu0 %1432
    %v1434 = vsel %vm527, %v317, 0.0
    %1435 = vadd.xlane.f32.xlu0 %v1434
    %v1436 = vpop.xlane.xlu0 %1435
    %v1437 = vsel %vm527, %v318, 0.0
    %1438 = vadd.xlane.f32.xlu0 %v1437
    %v1439 = vpop.xlane.xlu0 %1438
    %v1440 = vsel %vm527, %v319, 0.0
    %1441 = vadd.xlane.f32.xlu0 %v1440
    %v1442 = vpop.xlane.xlu0 %1441
    %v1443 = vsel %vm527, %v320, 0.0
    %1444 = vadd.xlane.f32.xlu0 %v1443
    %v1445 = vpop.xlane.xlu0 %1444
    %v1446 = vsel %vm527, %v321, 0.0
    %1447 = vadd.xlane.f32.xlu0 %v1446
    %v1448 = vpop.xlane.xlu0 %1447
    %v1449 = vsel %vm527, %v322, 0.0
    %1450 = vadd.xlane.f32.xlu0 %v1449
    %v1451 = vpop.xlane.xlu0 %1450
    %v1452 = vsel %vm527, %v323, 0.0
    %1453 = vadd.xlane.f32.xlu0 %v1452
    %v1454 = vpop.xlane.xlu0 %1453
    %v1455 = vsel %vm527, %v324, 0.0
    %1456 = vadd.xlane.f32.xlu0 %v1455
    %v1457 = vpop.xlane.xlu0 %1456
    %v1458 = vsel %vm527, %v325, 0.0
    %1459 = vadd.xlane.f32.xlu0 %v1458
    %v1460 = vpop.xlane.xlu0 %1459
    %v1461 = vsel %vm527, %v326, 0.0
    %1462 = vadd.xlane.f32.xlu0 %v1461
    %v1463 = vpop.xlane.xlu0 %1462
    %v1464 = vsel %vm527, %v327, 0.0
    %1465 = vadd.xlane.f32.xlu0 %v1464
    %v1466 = vpop.xlane.xlu0 %1465
    %v1467 = vsel %vm527, %v328, 0.0
    %1468 = vadd.xlane.f32.xlu0 %v1467
    %v1469 = vpop.xlane.xlu0 %1468
    %v1470 = vsel %vm527, %v329, 0.0
    %1471 = vadd.xlane.f32.xlu0 %v1470
    %v1472 = vpop.xlane.xlu0 %1471
    %v1473 = vsel %vm527, %v330, 0.0
    %1474 = vadd.xlane.f32.xlu0 %v1473
    %v1475 = vpop.xlane.xlu0 %1474
    %v1476 = vsel %vm527, %v331, 0.0
    %1477 = vadd.xlane.f32.xlu0 %v1476
    %v1478 = vpop.xlane.xlu0 %1477
    %v1479 = vsel %vm527, %v332, 0.0
    %1480 = vadd.xlane.f32.xlu0 %v1479
    %v1481 = vpop.xlane.xlu0 %1480
    %v1482 = vsel %vm527, %v333, 0.0
    %1483 = vadd.xlane.f32.xlu0 %v1482
    %v1484 = vpop.xlane.xlu0 %1483
    %v1485 = vsel %vm527, %v334, 0.0
    %1486 = vadd.xlane.f32.xlu0 %v1485
    %v1487 = vpop.xlane.xlu0 %1486
    %v1488 = vsel %vm527, %v335, 0.0
    %1489 = vadd.xlane.f32.xlu0 %v1488
    %v1490 = vpop.xlane.xlu0 %1489
    %v1491 = vsel %vm527, %v336, 0.0
    %1492 = vadd.xlane.f32.xlu0 %v1491
    %v1493 = vpop.xlane.xlu0 %1492
    %v1494 = vsel %vm527, %v337, 0.0
    %1495 = vadd.xlane.f32.xlu0 %v1494
    %v1496 = vpop.xlane.xlu0 %1495
    %v1497 = vsel %vm527, %v338, 0.0
    %1498 = vadd.xlane.f32.xlu0 %v1497
    %v1499 = vpop.xlane.xlu0 %1498
    %v1500 = vsel %vm527, %v339, 0.0
    %1501 = vadd.xlane.f32.xlu0 %v1500
    %v1502 = vpop.xlane.xlu0 %1501
    %v1503 = vsel %vm527, %v340, 0.0
    %1504 = vadd.xlane.f32.xlu0 %v1503
    %v1505 = vpop.xlane.xlu0 %1504
    %v1506 = vsel %vm527, %v341, 0.0
    %1507 = vadd.xlane.f32.xlu0 %v1506
    %v1508 = vpop.xlane.xlu0 %1507
    %v1509 = vsel %vm527, %v342, 0.0
    %1510 = vadd.xlane.f32.xlu0 %v1509
    %v1511 = vpop.xlane.xlu0 %1510
    %v1512 = vsel %vm527, %v343, 0.0
    %1513 = vadd.xlane.f32.xlu0 %v1512
    %v1514 = vpop.xlane.xlu0 %1513
    %v1515 = vsel %vm527, %v344, 0.0
    %1516 = vadd.xlane.f32.xlu0 %v1515
    %v1517 = vpop.xlane.xlu0 %1516
    %v1518 = vsel %vm527, %v345, 0.0
    %1519 = vadd.xlane.f32.xlu0 %v1518
    %v1520 = vpop.xlane.xlu0 %1519
    %v1521 = vsel %vm527, %v346, 0.0
    %1522 = vadd.xlane.f32.xlu0 %v1521
    %v1523 = vpop.xlane.xlu0 %1522
    %v1524 = vsel %vm527, %v347, 0.0
    %1525 = vadd.xlane.f32.xlu0 %v1524
    %v1526 = vpop.xlane.xlu0 %1525
    %v1527 = vsel %vm527, %v348, 0.0
    %1528 = vadd.xlane.f32.xlu0 %v1527
    %v1529 = vpop.xlane.xlu0 %1528
    %v1530 = vsel %vm527, %v349, 0.0
    %1531 = vadd.xlane.f32.xlu0 %v1530
    %v1532 = vpop.xlane.xlu0 %1531
    %v1533 = vsel %vm527, %v350, 0.0
    %1534 = vadd.xlane.f32.xlu0 %v1533
    %v1535 = vpop.xlane.xlu0 %1534
    %v1536 = vsel %vm527, %v351, 0.0
    %1537 = vadd.xlane.f32.xlu0 %v1536
    %v1538 = vpop.xlane.xlu0 %1537
    %v1539 = vsel %vm527, %v352, 0.0
    %1540 = vadd.xlane.f32.xlu0 %v1539
    %v1541 = vpop.xlane.xlu0 %1540
    %v1542 = vsel %vm527, %v353, 0.0
    %1543 = vadd.xlane.f32.xlu0 %v1542
    %v1544 = vpop.xlane.xlu0 %1543
    %v1545 = vsel %vm527, %v354, 0.0
    %1546 = vadd.xlane.f32.xlu0 %v1545
    %v1547 = vpop.xlane.xlu0 %1546
    %v1548 = vsel %vm527, %v355, 0.0
    %1549 = vadd.xlane.f32.xlu0 %v1548
    %v1550 = vpop.xlane.xlu0 %1549
    %v1551 = vsel %vm527, %v356, 0.0
    %1552 = vadd.xlane.f32.xlu0 %v1551
    %v1553 = vpop.xlane.xlu0 %1552
    %v1554 = vsel %vm527, %v357, 0.0
    %1555 = vadd.xlane.f32.xlu0 %v1554
    %v1556 = vpop.xlane.xlu0 %1555
    %v1557 = vsel %vm527, %v358, 0.0
    %1558 = vadd.xlane.f32.xlu0 %v1557
    %v1559 = vpop.xlane.xlu0 %1558
    %v1560 = vsel %vm527, %v359, 0.0
    %1561 = vadd.xlane.f32.xlu0 %v1560
    %v1562 = vpop.xlane.xlu0 %1561
    %v1563 = vsel %vm527, %v360, 0.0
    %1564 = vadd.xlane.f32.xlu0 %v1563
    %v1565 = vpop.xlane.xlu0 %1564
    %v1566 = vsel %vm527, %v361, 0.0
    %1567 = vadd.xlane.f32.xlu0 %v1566
    %v1568 = vpop.xlane.xlu0 %1567
    %v1569 = vsel %vm527, %v362, 0.0
    %1570 = vadd.xlane.f32.xlu0 %v1569
    %v1571 = vpop.xlane.xlu0 %1570
    %v1572 = vsel %vm527, %v363, 0.0
    %1573 = vadd.xlane.f32.xlu0 %v1572
    %v1574 = vpop.xlane.xlu0 %1573
    %v1575 = vsel %vm527, %v364, 0.0
    %1576 = vadd.xlane.f32.xlu0 %v1575
    %v1577 = vpop.xlane.xlu0 %1576
    %v1578 = vsel %vm527, %v365, 0.0
    %1579 = vadd.xlane.f32.xlu0 %v1578
    %v1580 = vpop.xlane.xlu0 %1579
    %v1581 = vsel %vm527, %v366, 0.0
    %1582 = vadd.xlane.f32.xlu0 %v1581
    %v1583 = vpop.xlane.xlu0 %1582
    %v1584 = vsel %vm527, %v367, 0.0
    %1585 = vadd.xlane.f32.xlu0 %v1584
    %v1586 = vpop.xlane.xlu0 %1585
    %v1587 = vsel %vm527, %v368, 0.0
    %1588 = vadd.xlane.f32.xlu0 %v1587
    %v1589 = vpop.xlane.xlu0 %1588
    %v1590 = vsel %vm527, %v369, 0.0
    %1591 = vadd.xlane.f32.xlu0 %v1590
    %v1592 = vpop.xlane.xlu0 %1591
    %v1593 = vsel %vm527, %v370, 0.0
    %1594 = vadd.xlane.f32.xlu0 %v1593
    %v1595 = vpop.xlane.xlu0 %1594
    %v1596 = vsel %vm527, %v371, 0.0
    %1597 = vadd.xlane.f32.xlu0 %v1596
    %v1598 = vpop.xlane.xlu0 %1597
    %v1599 = vsel %vm527, %v372, 0.0
    %1600 = vadd.xlane.f32.xlu0 %v1599
    %v1601 = vpop.xlane.xlu0 %1600
    %v1602 = vsel %vm527, %v373, 0.0
    %1603 = vadd.xlane.f32.xlu0 %v1602
    %v1604 = vpop.xlane.xlu0 %1603
    %v1605 = vsel %vm527, %v374, 0.0
    %1606 = vadd.xlane.f32.xlu0 %v1605
    %v1607 = vpop.xlane.xlu0 %1606
    %v1608 = vsel %vm527, %v375, 0.0
    %1609 = vadd.xlane.f32.xlu0 %v1608
    %v1610 = vpop.xlane.xlu0 %1609
    %v1611 = vsel %vm527, %v376, 0.0
    %1612 = vadd.xlane.f32.xlu0 %v1611
    %v1613 = vpop.xlane.xlu0 %1612
    %v1614 = vsel %vm527, %v377, 0.0
    %1615 = vadd.xlane.f32.xlu0 %v1614
    %v1616 = vpop.xlane.xlu0 %1615
    %v1617 = vsel %vm527, %v378, 0.0
    %1618 = vadd.xlane.f32.xlu0 %v1617
    %v1619 = vpop.xlane.xlu0 %1618
    %v1620 = vsel %vm527, %v379, 0.0
    %1621 = vadd.xlane.f32.xlu0 %v1620
    %v1622 = vpop.xlane.xlu0 %1621
    %v1623 = vsel %vm527, %v380, 0.0
    %1624 = vadd.xlane.f32.xlu0 %v1623
    %v1625 = vpop.xlane.xlu0 %1624
    %v1626 = vsel %vm527, %v381, 0.0
    %1627 = vadd.xlane.f32.xlu0 %v1626
    %v1628 = vpop.xlane.xlu0 %1627
    %v1629 = vsel %vm527, %v382, 0.0
    %1630 = vadd.xlane.f32.xlu0 %v1629
    %v1631 = vpop.xlane.xlu0 %1630
    %v1632 = vsel %vm527, %v383, 0.0
    %1633 = vadd.xlane.f32.xlu0 %v1632
    %v1634 = vpop.xlane.xlu0 %1633
    %v1635 = vsel %vm527, %v384, 0.0
    %1636 = vadd.xlane.f32.xlu0 %v1635
    %v1637 = vpop.xlane.xlu0 %1636
    %v1638 = vsel %vm527, %v385, 0.0
    %1639 = vadd.xlane.f32.xlu0 %v1638
    %v1640 = vpop.xlane.xlu0 %1639
    %v1641 = vsel %vm527, %v386, 0.0
    %1642 = vadd.xlane.f32.xlu0 %v1641
    %v1643 = vpop.xlane.xlu0 %1642
    %v1644 = vsel %vm527, %v387, 0.0
    %1645 = vadd.xlane.f32.xlu0 %v1644
    %v1646 = vpop.xlane.xlu0 %1645
    %v1647 = vsel %vm527, %v388, 0.0
    %1648 = vadd.xlane.f32.xlu0 %v1647
    %v1649 = vpop.xlane.xlu0 %1648
    %v1650 = vsel %vm527, %v389, 0.0
    %1651 = vadd.xlane.f32.xlu0 %v1650
    %v1652 = vpop.xlane.xlu0 %1651
    %v1653 = vsel %vm527, %v390, 0.0
    %1654 = vadd.xlane.f32.xlu0 %v1653
    %v1655 = vpop.xlane.xlu0 %1654
    %v1656 = vsel %vm527, %v391, 0.0
    %1657 = vadd.xlane.f32.xlu0 %v1656
    %v1658 = vpop.xlane.xlu0 %1657
    %v1659 = vsel %vm527, %v392, 0.0
    %1660 = vadd.xlane.f32.xlu0 %v1659
    %v1661 = vpop.xlane.xlu0 %1660
    %v1662 = vsel %vm527, %v393, 0.0
    %1663 = vadd.xlane.f32.xlu0 %v1662
    %v1664 = vpop.xlane.xlu0 %1663
    %v1665 = vsel %vm527, %v394, 0.0
    %1666 = vadd.xlane.f32.xlu0 %v1665
    %v1667 = vpop.xlane.xlu0 %1666
    %v1668 = vsel %vm527, %v395, 0.0
    %1669 = vadd.xlane.f32.xlu0 %v1668
    %v1670 = vpop.xlane.xlu0 %1669
    %v1671 = vsel %vm527, %v396, 0.0
    %1672 = vadd.xlane.f32.xlu0 %v1671
    %v1673 = vpop.xlane.xlu0 %1672
    %v1674 = vsel %vm527, %v397, 0.0
    %1675 = vadd.xlane.f32.xlu0 %v1674
    %v1676 = vpop.xlane.xlu0 %1675
    %v1677 = vsel %vm527, %v398, 0.0
    %1678 = vadd.xlane.f32.xlu0 %v1677
    %v1679 = vpop.xlane.xlu0 %1678
    %v1680 = vsel %vm527, %v399, 0.0
    %1681 = vadd.xlane.f32.xlu0 %v1680
    %v1682 = vpop.xlane.xlu0 %1681
    %v1683 = vsel %vm527, %v400, 0.0
    %1684 = vadd.xlane.f32.xlu0 %v1683
    %v1685 = vpop.xlane.xlu0 %1684
    %v1686 = vsel %vm527, %v401, 0.0
    %1687 = vadd.xlane.f32.xlu0 %v1686
    %v1688 = vpop.xlane.xlu0 %1687
    %v1689 = vsel %vm527, %v402, 0.0
    %1690 = vadd.xlane.f32.xlu0 %v1689
    %v1691 = vpop.xlane.xlu0 %1690
    %v1692 = vsel %vm527, %v403, 0.0
    %1693 = vadd.xlane.f32.xlu0 %v1692
    %v1694 = vpop.xlane.xlu0 %1693
    %v1695 = vsel %vm527, %v404, 0.0
    %1696 = vadd.xlane.f32.xlu0 %v1695
    %v1697 = vpop.xlane.xlu0 %1696
    %v1698 = vsel %vm527, %v405, 0.0
    %1699 = vadd.xlane.f32.xlu0 %v1698
    %v1700 = vpop.xlane.xlu0 %1699
    %v1701 = vsel %vm527, %v406, 0.0
    %1702 = vadd.xlane.f32.xlu0 %v1701
    %v1703 = vpop.xlane.xlu0 %1702
    %v1704 = vsel %vm527, %v407, 0.0
    %1705 = vadd.xlane.f32.xlu0 %v1704
    %v1706 = vpop.xlane.xlu0 %1705
    %v1707 = vsel %vm527, %v408, 0.0
    %1708 = vadd.xlane.f32.xlu0 %v1707
    %v1709 = vpop.xlane.xlu0 %1708
    %v1710 = vsel %vm527, %v409, 0.0
    %1711 = vadd.xlane.f32.xlu0 %v1710
    %v1712 = vpop.xlane.xlu0 %1711
    %v1713 = vsel %vm527, %v410, 0.0
    %1714 = vadd.xlane.f32.xlu0 %v1713
    %v1715 = vpop.xlane.xlu0 %1714
    %v1716 = vsel %vm527, %v411, 0.0
    %1717 = vadd.xlane.f32.xlu0 %v1716
    %v1718 = vpop.xlane.xlu0 %1717
    %v1719 = vsel %vm527, %v412, 0.0
    %1720 = vadd.xlane.f32.xlu0 %v1719
    %v1721 = vpop.xlane.xlu0 %1720
    %v1722 = vsel %vm527, %v413, 0.0
    %1723 = vadd.xlane.f32.xlu0 %v1722
    %v1724 = vpop.xlane.xlu0 %1723
    %v1725 = vsel %vm527, %v414, 0.0
    %1726 = vadd.xlane.f32.xlu0 %v1725
    %v1727 = vpop.xlane.xlu0 %1726
    %v1728 = vsel %vm527, %v415, 0.0
    %1729 = vadd.xlane.f32.xlu0 %v1728
    %v1730 = vpop.xlane.xlu0 %1729
    %v1731 = vsel %vm527, %v416, 0.0
    %1732 = vadd.xlane.f32.xlu0 %v1731
    %v1733 = vpop.xlane.xlu0 %1732
    %v1734 = vsel %vm527, %v417, 0.0
    %1735 = vadd.xlane.f32.xlu0 %v1734
    %v1736 = vpop.xlane.xlu0 %1735
    %v1737 = vsel %vm527, %v418, 0.0
    %1738 = vadd.xlane.f32.xlu0 %v1737
    %v1739 = vpop.xlane.xlu0 %1738
    %v1740 = vsel %vm527, %v419, 0.0
    %1741 = vadd.xlane.f32.xlu0 %v1740
    %v1742 = vpop.xlane.xlu0 %1741
    %v1743 = vsel %vm527, %v420, 0.0
    %1744 = vadd.xlane.f32.xlu0 %v1743
    %v1745 = vpop.xlane.xlu0 %1744
    %v1746 = vsel %vm527, %v421, 0.0
    %1747 = vadd.xlane.f32.xlu0 %v1746
    %v1748 = vpop.xlane.xlu0 %1747
    %v1749 = vsel %vm527, %v422, 0.0
    %1750 = vadd.xlane.f32.xlu0 %v1749
    %v1751 = vpop.xlane.xlu0 %1750
    %v1752 = vsel %vm527, %v423, 0.0
    %1753 = vadd.xlane.f32.xlu0 %v1752
    %v1754 = vpop.xlane.xlu0 %1753
    %v1755 = vsel %vm527, %v424, 0.0
    %1756 = vadd.xlane.f32.xlu0 %v1755
    %v1757 = vpop.xlane.xlu0 %1756
    %v1758 = vsel %vm527, %v425, 0.0
    %1759 = vadd.xlane.f32.xlu0 %v1758
    %v1760 = vpop.xlane.xlu0 %1759
    %v1761 = vsel %vm527, %v426, 0.0
    %1762 = vadd.xlane.f32.xlu0 %v1761
    %v1763 = vpop.xlane.xlu0 %1762
    %v1764 = vsel %vm527, %v427, 0.0
    %1765 = vadd.xlane.f32.xlu0 %v1764
    %v1766 = vpop.xlane.xlu0 %1765
    %v1767 = vsel %vm527, %v428, 0.0
    %1768 = vadd.xlane.f32.xlu0 %v1767
    %v1769 = vpop.xlane.xlu0 %1768
    %v1770 = vsel %vm527, %v429, 0.0
    %1771 = vadd.xlane.f32.xlu0 %v1770
    %v1772 = vpop.xlane.xlu0 %1771
    %v1773 = vsel %vm527, %v430, 0.0
    %1774 = vadd.xlane.f32.xlu0 %v1773
    %v1775 = vpop.xlane.xlu0 %1774
    %v1776 = vsel %vm527, %v431, 0.0
    %1777 = vadd.xlane.f32.xlu0 %v1776
    %v1778 = vpop.xlane.xlu0 %1777
    %v1779 = vsel %vm527, %v432, 0.0
    %1780 = vadd.xlane.f32.xlu0 %v1779
    %v1781 = vpop.xlane.xlu0 %1780
    %v1782 = vsel %vm527, %v433, 0.0
    %1783 = vadd.xlane.f32.xlu0 %v1782
    %v1784 = vpop.xlane.xlu0 %1783
    %v1785 = vsel %vm527, %v434, 0.0
    %1786 = vadd.xlane.f32.xlu0 %v1785
    %v1787 = vpop.xlane.xlu0 %1786
    %v1788 = vsel %vm527, %v435, 0.0
    %1789 = vadd.xlane.f32.xlu0 %v1788
    %v1790 = vpop.xlane.xlu0 %1789
    %v1791 = vsel %vm527, %v436, 0.0
    %1792 = vadd.xlane.f32.xlu0 %v1791
    %v1793 = vpop.xlane.xlu0 %1792
    %v1794 = vsel %vm527, %v437, 0.0
    %1795 = vadd.xlane.f32.xlu0 %v1794
    %v1796 = vpop.xlane.xlu0 %1795
    %v1797 = vsel %vm527, %v438, 0.0
    %1798 = vadd.xlane.f32.xlu0 %v1797
    %v1799 = vpop.xlane.xlu0 %1798
    %v1800 = vsel %vm527, %v439, 0.0
    %1801 = vadd.xlane.f32.xlu0 %v1800
    %v1802 = vpop.xlane.xlu0 %1801
    %v1803 = vsel %vm527, %v440, 0.0
    %1804 = vadd.xlane.f32.xlu0 %v1803
    %v1805 = vpop.xlane.xlu0 %1804
    %v1806 = vsel %vm527, %v441, 0.0
    %1807 = vadd.xlane.f32.xlu0 %v1806
    %v1808 = vpop.xlane.xlu0 %1807
    %v1809 = vsel %vm527, %v442, 0.0
    %1810 = vadd.xlane.f32.xlu0 %v1809
    %v1811 = vpop.xlane.xlu0 %1810
    %v1812 = vsel %vm527, %v443, 0.0
    %1813 = vadd.xlane.f32.xlu0 %v1812
    %v1814 = vpop.xlane.xlu0 %1813
    %v1815 = vsel %vm527, %v444, 0.0
    %1816 = vadd.xlane.f32.xlu0 %v1815
    %v1817 = vpop.xlane.xlu0 %1816
    %v1818 = vsel %vm527, %v445, 0.0
    %1819 = vadd.xlane.f32.xlu0 %v1818
    %v1820 = vpop.xlane.xlu0 %1819
    %v1821 = vsel %vm527, %v446, 0.0
    %1822 = vadd.xlane.f32.xlu0 %v1821
    %v1823 = vpop.xlane.xlu0 %1822
    %v1824 = vsel %vm527, %v447, 0.0
    %1825 = vadd.xlane.f32.xlu0 %v1824
    %v1826 = vpop.xlane.xlu0 %1825
    %v1827 = vsel %vm527, %v448, 0.0
    %1828 = vadd.xlane.f32.xlu0 %v1827
    %v1829 = vpop.xlane.xlu0 %1828
    %v1830 = vsel %vm527, %v449, 0.0
    %1831 = vadd.xlane.f32.xlu0 %v1830
    %v1832 = vpop.xlane.xlu0 %1831
    %v1833 = vsel %vm527, %v450, 0.0
    %1834 = vadd.xlane.f32.xlu0 %v1833
    %v1835 = vpop.xlane.xlu0 %1834
    %v1836 = vsel %vm527, %v451, 0.0
    %1837 = vadd.xlane.f32.xlu0 %v1836
    %v1838 = vpop.xlane.xlu0 %1837
    %v1839 = vsel %vm527, %v452, 0.0
    %1840 = vadd.xlane.f32.xlu0 %v1839
    %v1841 = vpop.xlane.xlu0 %1840
    %v1842 = vsel %vm527, %v453, 0.0
    %1843 = vadd.xlane.f32.xlu0 %v1842
    %v1844 = vpop.xlane.xlu0 %1843
    %v1845 = vsel %vm527, %v454, 0.0
    %1846 = vadd.xlane.f32.xlu0 %v1845
    %v1847 = vpop.xlane.xlu0 %1846
    %v1848 = vsel %vm527, %v455, 0.0
    %1849 = vadd.xlane.f32.xlu0 %v1848
    %v1850 = vpop.xlane.xlu0 %1849
    %v1851 = vsel %vm527, %v456, 0.0
    %1852 = vadd.xlane.f32.xlu0 %v1851
    %v1853 = vpop.xlane.xlu0 %1852
    %v1854 = vsel %vm527, %v457, 0.0
    %1855 = vadd.xlane.f32.xlu0 %v1854
    %v1856 = vpop.xlane.xlu0 %1855
    %v1857 = vsel %vm527, %v458, 0.0
    %1858 = vadd.xlane.f32.xlu0 %v1857
    %v1859 = vpop.xlane.xlu0 %1858
    %v1860 = vsel %vm527, %v459, 0.0
    %1861 = vadd.xlane.f32.xlu0 %v1860
    %v1862 = vpop.xlane.xlu0 %1861
    %v1863 = vsel %vm527, %v460, 0.0
    %1864 = vadd.xlane.f32.xlu0 %v1863
    %v1865 = vpop.xlane.xlu0 %1864
    %v1866 = vsel %vm527, %v461, 0.0
    %1867 = vadd.xlane.f32.xlu0 %v1866
    %v1868 = vpop.xlane.xlu0 %1867
    %v1869 = vsel %vm527, %v462, 0.0
    %1870 = vadd.xlane.f32.xlu0 %v1869
    %v1871 = vpop.xlane.xlu0 %1870
    %v1872 = vsel %vm527, %v463, 0.0
    %1873 = vadd.xlane.f32.xlu0 %v1872
    %v1874 = vpop.xlane.xlu0 %1873
    %v1875 = vsel %vm527, %v464, 0.0
    %1876 = vadd.xlane.f32.xlu0 %v1875
    %v1877 = vpop.xlane.xlu0 %1876
    %v1878 = vsel %vm527, %v465, 0.0
    %1879 = vadd.xlane.f32.xlu0 %v1878
    %v1880 = vpop.xlane.xlu0 %1879
    %v1881 = vsel %vm527, %v466, 0.0
    %1882 = vadd.xlane.f32.xlu0 %v1881
    %v1883 = vpop.xlane.xlu0 %1882
    %v1884 = vsel %vm527, %v467, 0.0
    %1885 = vadd.xlane.f32.xlu0 %v1884
    %v1886 = vpop.xlane.xlu0 %1885
    %v1887 = vsel %vm527, %v468, 0.0
    %1888 = vadd.xlane.f32.xlu0 %v1887
    %v1889 = vpop.xlane.xlu0 %1888
    %v1890 = vsel %vm527, %v469, 0.0
    %1891 = vadd.xlane.f32.xlu0 %v1890
    %v1892 = vpop.xlane.xlu0 %1891
    %v1893 = vsel %vm527, %v470, 0.0
    %1894 = vadd.xlane.f32.xlu0 %v1893
    %v1895 = vpop.xlane.xlu0 %1894
    %v1896 = vsel %vm527, %v471, 0.0
    %1897 = vadd.xlane.f32.xlu0 %v1896
    %v1898 = vpop.xlane.xlu0 %1897
    %v1899 = vsel %vm527, %v472, 0.0
    %1900 = vadd.xlane.f32.xlu0 %v1899
    %v1901 = vpop.xlane.xlu0 %1900
    %v1902 = vsel %vm527, %v473, 0.0
    %1903 = vadd.xlane.f32.xlu0 %v1902
    %v1904 = vpop.xlane.xlu0 %1903
    %v1905 = vsel %vm527, %v474, 0.0
    %1906 = vadd.xlane.f32.xlu0 %v1905
    %v1907 = vpop.xlane.xlu0 %1906
    %v1908 = vsel %vm527, %v475, 0.0
    %1909 = vadd.xlane.f32.xlu0 %v1908
    %v1910 = vpop.xlane.xlu0 %1909
    %v1911 = vsel %vm527, %v476, 0.0
    %1912 = vadd.xlane.f32.xlu0 %v1911
    %v1913 = vpop.xlane.xlu0 %1912
    %v1914 = vsel %vm527, %v477, 0.0
    %1915 = vadd.xlane.f32.xlu0 %v1914
    %v1916 = vpop.xlane.xlu0 %1915
    %v1917 = vsel %vm527, %v478, 0.0
    %1918 = vadd.xlane.f32.xlu0 %v1917
    %v1919 = vpop.xlane.xlu0 %1918
    %v1920 = vsel %vm527, %v479, 0.0
    %1921 = vadd.xlane.f32.xlu0 %v1920
    %v1922 = vpop.xlane.xlu0 %1921
    %v1923 = vsel %vm527, %v480, 0.0
    %1924 = vadd.xlane.f32.xlu0 %v1923
    %v1925 = vpop.xlane.xlu0 %1924
    %v1926 = vsel %vm527, %v481, 0.0
    %1927 = vadd.xlane.f32.xlu0 %v1926
    %v1928 = vpop.xlane.xlu0 %1927
    %v1929 = vsel %vm527, %v482, 0.0
    %1930 = vadd.xlane.f32.xlu0 %v1929
    %v1931 = vpop.xlane.xlu0 %1930
    %v1932 = vsel %vm527, %v483, 0.0
    %1933 = vadd.xlane.f32.xlu0 %v1932
    %v1934 = vpop.xlane.xlu0 %1933
    %v1935 = vsel %vm527, %v484, 0.0
    %1936 = vadd.xlane.f32.xlu0 %v1935
    %v1937 = vpop.xlane.xlu0 %1936
    %v1938 = vsel %vm527, %v485, 0.0
    %1939 = vadd.xlane.f32.xlu0 %v1938
    %v1940 = vpop.xlane.xlu0 %1939
    %v1941 = vsel %vm527, %v486, 0.0
    %1942 = vadd.xlane.f32.xlu0 %v1941
    %v1943 = vpop.xlane.xlu0 %1942
    %v1944 = vsel %vm527, %v487, 0.0
    %1945 = vadd.xlane.f32.xlu0 %v1944
    %v1946 = vpop.xlane.xlu0 %1945
    %v1947 = vsel %vm527, %v488, 0.0
    %1948 = vadd.xlane.f32.xlu0 %v1947
    %v1949 = vpop.xlane.xlu0 %1948
    %v1950 = vsel %vm527, %v489, 0.0
    %1951 = vadd.xlane.f32.xlu0 %v1950
    %v1952 = vpop.xlane.xlu0 %1951
    %v1953 = vsel %vm527, %v490, 0.0
    %1954 = vadd.xlane.f32.xlu0 %v1953
    %v1955 = vpop.xlane.xlu0 %1954
    %v1956 = vsel %vm527, %v491, 0.0
    %1957 = vadd.xlane.f32.xlu0 %v1956
    %v1958 = vpop.xlane.xlu0 %1957
    %v1959 = vsel %vm527, %v492, 0.0
    %1960 = vadd.xlane.f32.xlu0 %v1959
    %v1961 = vpop.xlane.xlu0 %1960
    %v1962 = vsel %vm527, %v493, 0.0
    %1963 = vadd.xlane.f32.xlu0 %v1962
    %v1964 = vpop.xlane.xlu0 %1963
    %v1965 = vsel %vm527, %v494, 0.0
    %1966 = vadd.xlane.f32.xlu0 %v1965
    %v1967 = vpop.xlane.xlu0 %1966
    %v1968 = vsel %vm527, %v495, 0.0
    %1969 = vadd.xlane.f32.xlu0 %v1968
    %v1970 = vpop.xlane.xlu0 %1969
    %v1971 = vsel %vm527, %v496, 0.0
    %1972 = vadd.xlane.f32.xlu0 %v1971
    %v1973 = vpop.xlane.xlu0 %1972
    %v1974 = vsel %vm527, %v497, 0.0
    %1975 = vadd.xlane.f32.xlu0 %v1974
    %v1976 = vpop.xlane.xlu0 %1975
    %v1977 = vsel %vm527, %v498, 0.0
    %1978 = vadd.xlane.f32.xlu0 %v1977
    %v1979 = vpop.xlane.xlu0 %1978
    %v1980 = vsel %vm527, %v499, 0.0
    %1981 = vadd.xlane.f32.xlu0 %v1980
    %v1982 = vpop.xlane.xlu0 %1981
    %v1983 = vsel %vm527, %v500, 0.0
    %1984 = vadd.xlane.f32.xlu0 %v1983
    %v1985 = vpop.xlane.xlu0 %1984
    %v1986 = vsel %vm527, %v501, 0.0
    %1987 = vadd.xlane.f32.xlu0 %v1986
    %v1988 = vpop.xlane.xlu0 %1987
    %v1989 = vsel %vm527, %v502, 0.0
    %1990 = vadd.xlane.f32.xlu0 %v1989
    %v1991 = vpop.xlane.xlu0 %1990
    %v1992 = vsel %vm527, %v503, 0.0
    %1993 = vadd.xlane.f32.xlu0 %v1992
    %v1994 = vpop.xlane.xlu0 %1993
    %v1995 = vsel %vm527, %v504, 0.0
    %1996 = vadd.xlane.f32.xlu0 %v1995
    %v1997 = vpop.xlane.xlu0 %1996
    %v1998 = vsel %vm527, %v505, 0.0
    %1999 = vadd.xlane.f32.xlu0 %v1998
    %v2000 = vpop.xlane.xlu0 %1999
    %v2001 = vsel %vm527, %v506, 0.0
    %2002 = vadd.xlane.f32.xlu0 %v2001
    %v2003 = vpop.xlane.xlu0 %2002
    %v2004 = vsel %vm527, %v507, 0.0
    %2005 = vadd.xlane.f32.xlu0 %v2004
    %v2006 = vpop.xlane.xlu0 %2005
    %v2007 = vsel %vm527, %v508, 0.0
    %2008 = vadd.xlane.f32.xlu0 %v2007
    %v2009 = vpop.xlane.xlu0 %2008
    %v2010 = vsel %vm527, %v509, 0.0
    %2011 = vadd.xlane.f32.xlu0 %v2010
    %v2012 = vpop.xlane.xlu0 %2011
    %v2013 = vsel %vm527, %v510, 0.0
    %2014 = vadd.xlane.f32.xlu0 %v2013
    %v2015 = vpop.xlane.xlu0 %2014
    %v2016 = vsel %vm527, %v511, 0.0
    %2017 = vadd.xlane.f32.xlu0 %v2016
    %v2018 = vpop.xlane.xlu0 %2017
    %v2019 = vsel %vm527, %v512, 0.0
    %2020 = vadd.xlane.f32.xlu0 %v2019
    %v2021 = vpop.xlane.xlu0 %2020
    %v2022 = vsel %vm527, %v513, 0.0
    %2023 = vadd.xlane.f32.xlu0 %v2022
    %v2024 = vpop.xlane.xlu0 %2023
    %v2025 = vsel %vm527, %v514, 0.0
    %2026 = vadd.xlane.f32.xlu0 %v2025
    %v2027 = vpop.xlane.xlu0 %2026
    %v2028 = vsel %vm527, %v515, 0.0
    %2029 = vadd.xlane.f32.xlu0 %v2028
    %v2030 = vpop.xlane.xlu0 %2029
    %v2031 = vsel %vm527, %v516, 0.0
    %2032 = vadd.xlane.f32.xlu0 %v2031
    %v2033 = vpop.xlane.xlu0 %2032
    %v2034 = vsel %vm527, %v517, 0.0
    %2035 = vadd.xlane.f32.xlu0 %v2034
    %v2036 = vpop.xlane.xlu0 %2035
    %v2037 = vsel %vm527, %v518, 0.0
    %2038 = vadd.xlane.f32.xlu0 %v2037
    %v2039 = vpop.xlane.xlu0 %2038
    %v2040 = vsel %vm527, %v519, 0.0
    %2041 = vadd.xlane.f32.xlu0 %v2040
    %v2042 = vpop.xlane.xlu0 %2041
    %v2043 = vsel %vm527, %v520, 0.0
    %2044 = vadd.xlane.f32.xlu0 %v2043
    %v2045 = vpop.xlane.xlu0 %2044
    %v2046 = vsel %vm527, %v521, 0.0
    %2047 = vadd.xlane.f32.xlu0 %v2046
    %v2048 = vpop.xlane.xlu0 %2047
    %v2049 = vsel %vm527, %v522, 0.0
    %2050 = vadd.xlane.f32.xlu0 %v2049
    %v2051 = vpop.xlane.xlu0 %2050
    %v2052 = vsel %vm527, %v523, 0.0
    %2053 = vadd.xlane.f32.xlu0 %v2052
    %v2054 = vpop.xlane.xlu0 %2053
    %v2055 = vsel %vm527, %v524, 0.0
    %2056 = vadd.xlane.f32.xlu0 %v2055
    %v2057 = vpop.xlane.xlu0 %2056
    %v2058 = vsel %vm527, %v525, 0.0
    %2059 = vadd.xlane.f32.xlu0 %v2058
    %v2060 = vpop.xlane.xlu0 %2059
    %v2061 = vsel %vm527, %v526, 0.0
    %2062 = vadd.xlane.f32.xlu0 %v2061
    %v2063 = vpop.xlane.xlu0 %2062
    %v2064 = vmul.f32 %v530, 0.0625
    %v2065 = vmul.f32 %v533, 0.0625
    %v2066 = vmul.f32 %v536, 0.0625
    %v2067 = vmul.f32 %v539, 0.0625
    %v2068 = vmul.f32 %v542, 0.0625
    %v2069 = vmul.f32 %v545, 0.0625
    %v2070 = vmul.f32 %v548, 0.0625
    %v2071 = vmul.f32 %v551, 0.0625
    %v2072 = vmul.f32 %v554, 0.0625
    %v2073 = vmul.f32 %v557, 0.0625
    %v2074 = vmul.f32 %v560, 0.0625
    %v2075 = vmul.f32 %v563, 0.0625
    %v2076 = vmul.f32 %v566, 0.0625
    %v2077 = vmul.f32 %v569, 0.0625
    %v2078 = vmul.f32 %v572, 0.0625
    %v2079 = vmul.f32 %v575, 0.0625
    %v2080 = vmul.f32 %v578, 0.0625
    %v2081 = vmul.f32 %v581, 0.0625
    %v2082 = vmul.f32 %v584, 0.0625
    %v2083 = vmul.f32 %v587, 0.0625
    %v2084 = vmul.f32 %v590, 0.0625
    %v2085 = vmul.f32 %v593, 0.0625
    %v2086 = vmul.f32 %v596, 0.0625
    %v2087 = vmul.f32 %v599, 0.0625
    %v2088 = vmul.f32 %v602, 0.0625
    %v2089 = vmul.f32 %v605, 0.0625
    %v2090 = vmul.f32 %v608, 0.0625
    %v2091 = vmul.f32 %v611, 0.0625
    %v2092 = vmul.f32 %v614, 0.0625
    %v2093 = vmul.f32 %v617, 0.0625
    %v2094 = vmul.f32 %v620, 0.0625
    %v2095 = vmul.f32 %v623, 0.0625
    %v2096 = vmul.f32 %v626, 0.0625
    %v2097 = vmul.f32 %v629, 0.0625
    %v2098 = vmul.f32 %v632, 0.0625
    %v2099 = vmul.f32 %v635, 0.0625
    %v2100 = vmul.f32 %v638, 0.0625
    %v2101 = vmul.f32 %v641, 0.0625
    %v2102 = vmul.f32 %v644, 0.0625
    %v2103 = vmul.f32 %v647, 0.0625
    %v2104 = vmul.f32 %v650, 0.0625
    %v2105 = vmul.f32 %v653, 0.0625
    %v2106 = vmul.f32 %v656, 0.0625
    %v2107 = vmul.f32 %v659, 0.0625
    %v2108 = vmul.f32 %v662, 0.0625
    %v2109 = vmul.f32 %v665, 0.0625
    %v2110 = vmul.f32 %v668, 0.0625
    %v2111 = vmul.f32 %v671, 0.0625
    %v2112 = vmul.f32 %v674, 0.0625
    %v2113 = vmul.f32 %v677, 0.0625
    %v2114 = vmul.f32 %v680, 0.0625
    %v2115 = vmul.f32 %v683, 0.0625
    %v2116 = vmul.f32 %v686, 0.0625
    %v2117 = vmul.f32 %v689, 0.0625
    %v2118 = vmul.f32 %v692, 0.0625
    %v2119 = vmul.f32 %v695, 0.0625
    %v2120 = vmul.f32 %v698, 0.0625
    %v2121 = vmul.f32 %v701, 0.0625
    %v2122 = vmul.f32 %v704, 0.0625
    %v2123 = vmul.f32 %v707, 0.0625
    %v2124 = vmul.f32 %v710, 0.0625
    %v2125 = vmul.f32 %v713, 0.0625
    %v2126 = vmul.f32 %v716, 0.0625
    %v2127 = vmul.f32 %v719, 0.0625
    %v2128 = vmul.f32 %v722, 0.0625
    %v2129 = vmul.f32 %v725, 0.0625
    %v2130 = vmul.f32 %v728, 0.0625
    %v2131 = vmul.f32 %v731, 0.0625
    %v2132 = vmul.f32 %v734, 0.0625
    %v2133 = vmul.f32 %v737, 0.0625
    %v2134 = vmul.f32 %v740, 0.0625
    %v2135 = vmul.f32 %v743, 0.0625
    %v2136 = vmul.f32 %v746, 0.0625
    %v2137 = vmul.f32 %v749, 0.0625
    %v2138 = vmul.f32 %v752, 0.0625
    %v2139 = vmul.f32 %v755, 0.0625
    %v2140 = vmul.f32 %v758, 0.0625
    %v2141 = vmul.f32 %v761, 0.0625
    %v2142 = vmul.f32 %v764, 0.0625
    %v2143 = vmul.f32 %v767, 0.0625
    %v2144 = vmul.f32 %v770, 0.0625
    %v2145 = vmul.f32 %v773, 0.0625
    %v2146 = vmul.f32 %v776, 0.0625
    %v2147 = vmul.f32 %v779, 0.0625
    %v2148 = vmul.f32 %v782, 0.0625
    %v2149 = vmul.f32 %v785, 0.0625
    %v2150 = vmul.f32 %v788, 0.0625
    %v2151 = vmul.f32 %v791, 0.0625
    %v2152 = vmul.f32 %v794, 0.0625
    %v2153 = vmul.f32 %v797, 0.0625
    %v2154 = vmul.f32 %v800, 0.0625
    %v2155 = vmul.f32 %v803, 0.0625
    %v2156 = vmul.f32 %v806, 0.0625
    %v2157 = vmul.f32 %v809, 0.0625
    %v2158 = vmul.f32 %v812, 0.0625
    %v2159 = vmul.f32 %v815, 0.0625
    %v2160 = vmul.f32 %v818, 0.0625
    %v2161 = vmul.f32 %v821, 0.0625
    %v2162 = vmul.f32 %v824, 0.0625
    %v2163 = vmul.f32 %v827, 0.0625
    %v2164 = vmul.f32 %v830, 0.0625
    %v2165 = vmul.f32 %v833, 0.0625
    %v2166 = vmul.f32 %v836, 0.0625
    %v2167 = vmul.f32 %v839, 0.0625
    %v2168 = vmul.f32 %v842, 0.0625
    %v2169 = vmul.f32 %v845, 0.0625
    %v2170 = vmul.f32 %v848, 0.0625
    %v2171 = vmul.f32 %v851, 0.0625
    %v2172 = vmul.f32 %v854, 0.0625
    %v2173 = vmul.f32 %v857, 0.0625
    %v2174 = vmul.f32 %v860, 0.0625
    %v2175 = vmul.f32 %v863, 0.0625
    %v2176 = vmul.f32 %v866, 0.0625
    %v2177 = vmul.f32 %v869, 0.0625
    %v2178 = vmul.f32 %v872, 0.0625
    %v2179 = vmul.f32 %v875, 0.0625
    %v2180 = vmul.f32 %v878, 0.0625
    %v2181 = vmul.f32 %v881, 0.0625
    %v2182 = vmul.f32 %v884, 0.0625
    %v2183 = vmul.f32 %v887, 0.0625
    %v2184 = vmul.f32 %v890, 0.0625
    %v2185 = vmul.f32 %v893, 0.0625
    %v2186 = vmul.f32 %v896, 0.0625
    %v2187 = vmul.f32 %v899, 0.0625
    %v2188 = vmul.f32 %v902, 0.0625
    %v2189 = vmul.f32 %v905, 0.0625
    %v2190 = vmul.f32 %v908, 0.0625
    %v2191 = vmul.f32 %v911, 0.0625
    %v2192 = vmul.f32 %v914, 0.0625
    %v2193 = vmul.f32 %v917, 0.0625
    %v2194 = vmul.f32 %v920, 0.0625
    %v2195 = vmul.f32 %v923, 0.0625
    %v2196 = vmul.f32 %v926, 0.0625
    %v2197 = vmul.f32 %v929, 0.0625
    %v2198 = vmul.f32 %v932, 0.0625
    %v2199 = vmul.f32 %v935, 0.0625
    %v2200 = vmul.f32 %v938, 0.0625
    %v2201 = vmul.f32 %v941, 0.0625
    %v2202 = vmul.f32 %v944, 0.0625
    %v2203 = vmul.f32 %v947, 0.0625
    %v2204 = vmul.f32 %v950, 0.0625
    %v2205 = vmul.f32 %v953, 0.0625
    %v2206 = vmul.f32 %v956, 0.0625
    %v2207 = vmul.f32 %v959, 0.0625
    %v2208 = vmul.f32 %v962, 0.0625
    %v2209 = vmul.f32 %v965, 0.0625
    %v2210 = vmul.f32 %v968, 0.0625
    %v2211 = vmul.f32 %v971, 0.0625
    %v2212 = vmul.f32 %v974, 0.0625
    %v2213 = vmul.f32 %v977, 0.0625
    %v2214 = vmul.f32 %v980, 0.0625
    %v2215 = vmul.f32 %v983, 0.0625
    %v2216 = vmul.f32 %v986, 0.0625
    %v2217 = vmul.f32 %v989, 0.0625
    %v2218 = vmul.f32 %v992, 0.0625
    %v2219 = vmul.f32 %v995, 0.0625
    %v2220 = vmul.f32 %v998, 0.0625
    %v2221 = vmul.f32 %v1001, 0.0625
    %v2222 = vmul.f32 %v1004, 0.0625
    %v2223 = vmul.f32 %v1007, 0.0625
    %v2224 = vmul.f32 %v1010, 0.0625
    %v2225 = vmul.f32 %v1013, 0.0625
    %v2226 = vmul.f32 %v1016, 0.0625
    %v2227 = vmul.f32 %v1019, 0.0625
    %v2228 = vmul.f32 %v1022, 0.0625
    %v2229 = vmul.f32 %v1025, 0.0625
    %v2230 = vmul.f32 %v1028, 0.0625
    %v2231 = vmul.f32 %v1031, 0.0625
    %v2232 = vmul.f32 %v1034, 0.0625
    %v2233 = vmul.f32 %v1037, 0.0625
    %v2234 = vmul.f32 %v1040, 0.0625
    %v2235 = vmul.f32 %v1043, 0.0625
    %v2236 = vmul.f32 %v1046, 0.0625
    %v2237 = vmul.f32 %v1049, 0.0625
    %v2238 = vmul.f32 %v1052, 0.0625
    %v2239 = vmul.f32 %v1055, 0.0625
    %v2240 = vmul.f32 %v1058, 0.0625
    %v2241 = vmul.f32 %v1061, 0.0625
    %v2242 = vmul.f32 %v1064, 0.0625
    %v2243 = vmul.f32 %v1067, 0.0625
    %v2244 = vmul.f32 %v1070, 0.0625
    %v2245 = vmul.f32 %v1073, 0.0625
    %v2246 = vmul.f32 %v1076, 0.0625
    %v2247 = vmul.f32 %v1079, 0.0625
    %v2248 = vmul.f32 %v1082, 0.0625
    %v2249 = vmul.f32 %v1085, 0.0625
    %v2250 = vmul.f32 %v1088, 0.0625
    %v2251 = vmul.f32 %v1091, 0.0625
    %v2252 = vmul.f32 %v1094, 0.0625
    %v2253 = vmul.f32 %v1097, 0.0625
    %v2254 = vmul.f32 %v1100, 0.0625
    %v2255 = vmul.f32 %v1103, 0.0625
    %v2256 = vmul.f32 %v1106, 0.0625
    %v2257 = vmul.f32 %v1109, 0.0625
    %v2258 = vmul.f32 %v1112, 0.0625
    %v2259 = vmul.f32 %v1115, 0.0625
    %v2260 = vmul.f32 %v1118, 0.0625
    %v2261 = vmul.f32 %v1121, 0.0625
    %v2262 = vmul.f32 %v1124, 0.0625
    %v2263 = vmul.f32 %v1127, 0.0625
    %v2264 = vmul.f32 %v1130, 0.0625
    %v2265 = vmul.f32 %v1133, 0.0625
    %v2266 = vmul.f32 %v1136, 0.0625
    %v2267 = vmul.f32 %v1139, 0.0625
    %v2268 = vmul.f32 %v1142, 0.0625
    %v2269 = vmul.f32 %v1145, 0.0625
    %v2270 = vmul.f32 %v1148, 0.0625
    %v2271 = vmul.f32 %v1151, 0.0625
    %v2272 = vmul.f32 %v1154, 0.0625
    %v2273 = vmul.f32 %v1157, 0.0625
    %v2274 = vmul.f32 %v1160, 0.0625
    %v2275 = vmul.f32 %v1163, 0.0625
    %v2276 = vmul.f32 %v1166, 0.0625
    %v2277 = vmul.f32 %v1169, 0.0625
    %v2278 = vmul.f32 %v1172, 0.0625
    %v2279 = vmul.f32 %v1175, 0.0625
    %v2280 = vmul.f32 %v1178, 0.0625
    %v2281 = vmul.f32 %v1181, 0.0625
    %v2282 = vmul.f32 %v1184, 0.0625
    %v2283 = vmul.f32 %v1187, 0.0625
    %v2284 = vmul.f32 %v1190, 0.0625
    %v2285 = vmul.f32 %v1193, 0.0625
    %v2286 = vmul.f32 %v1196, 0.0625
    %v2287 = vmul.f32 %v1199, 0.0625
    %v2288 = vmul.f32 %v1202, 0.0625
    %v2289 = vmul.f32 %v1205, 0.0625
    %v2290 = vmul.f32 %v1208, 0.0625
    %v2291 = vmul.f32 %v1211, 0.0625
    %v2292 = vmul.f32 %v1214, 0.0625
    %v2293 = vmul.f32 %v1217, 0.0625
    %v2294 = vmul.f32 %v1220, 0.0625
    %v2295 = vmul.f32 %v1223, 0.0625
    %v2296 = vmul.f32 %v1226, 0.0625
    %v2297 = vmul.f32 %v1229, 0.0625
    %v2298 = vmul.f32 %v1232, 0.0625
    %v2299 = vmul.f32 %v1235, 0.0625
    %v2300 = vmul.f32 %v1238, 0.0625
    %v2301 = vmul.f32 %v1241, 0.0625
    %v2302 = vmul.f32 %v1244, 0.0625
    %v2303 = vmul.f32 %v1247, 0.0625
    %v2304 = vmul.f32 %v1250, 0.0625
    %v2305 = vmul.f32 %v1253, 0.0625
    %v2306 = vmul.f32 %v1256, 0.0625
    %v2307 = vmul.f32 %v1259, 0.0625
    %v2308 = vmul.f32 %v1262, 0.0625
    %v2309 = vmul.f32 %v1265, 0.0625
    %v2310 = vmul.f32 %v1268, 0.0625
    %v2311 = vmul.f32 %v1271, 0.0625
    %v2312 = vmul.f32 %v1274, 0.0625
    %v2313 = vmul.f32 %v1277, 0.0625
    %v2314 = vmul.f32 %v1280, 0.0625
    %v2315 = vmul.f32 %v1283, 0.0625
    %v2316 = vmul.f32 %v1286, 0.0625
    %v2317 = vmul.f32 %v1289, 0.0625
    %v2318 = vmul.f32 %v1292, 0.0625
    %v2319 = vmul.f32 %v1295, 0.0625
    %v2320 = vmul.f32 %v1298, 0.0625
    %v2321 = vmul.f32 %v1301, 0.0625
    %v2322 = vmul.f32 %v1304, 0.0625
    %v2323 = vmul.f32 %v1307, 0.0625
    %v2324 = vmul.f32 %v1310, 0.0625
    %v2325 = vmul.f32 %v1313, 0.0625
    %v2326 = vmul.f32 %v1316, 0.0625
    %v2327 = vmul.f32 %v1319, 0.0625
    %v2328 = vmul.f32 %v1322, 0.0625
    %v2329 = vmul.f32 %v1325, 0.0625
    %v2330 = vmul.f32 %v1328, 0.0625
    %v2331 = vmul.f32 %v1331, 0.0625
    %v2332 = vmul.f32 %v1334, 0.0625
    %v2333 = vmul.f32 %v1337, 0.0625
    %v2334 = vmul.f32 %v1340, 0.0625
    %v2335 = vmul.f32 %v1343, 0.0625
    %v2336 = vmul.f32 %v1346, 0.0625
    %v2337 = vmul.f32 %v1349, 0.0625
    %v2338 = vmul.f32 %v1352, 0.0625
    %v2339 = vmul.f32 %v1355, 0.0625
    %v2340 = vmul.f32 %v1358, 0.0625
    %v2341 = vmul.f32 %v1361, 0.0625
    %v2342 = vmul.f32 %v1364, 0.0625
    %v2343 = vmul.f32 %v1367, 0.0625
    %v2344 = vmul.f32 %v1370, 0.0625
    %v2345 = vmul.f32 %v1373, 0.0625
    %v2346 = vmul.f32 %v1376, 0.0625
    %v2347 = vmul.f32 %v1379, 0.0625
    %v2348 = vmul.f32 %v1382, 0.0625
    %v2349 = vmul.f32 %v1385, 0.0625
    %v2350 = vmul.f32 %v1388, 0.0625
    %v2351 = vmul.f32 %v1391, 0.0625
    %v2352 = vmul.f32 %v1394, 0.0625
    %v2353 = vmul.f32 %v1397, 0.0625
    %v2354 = vmul.f32 %v1400, 0.0625
    %v2355 = vmul.f32 %v1403, 0.0625
    %v2356 = vmul.f32 %v1406, 0.0625
    %v2357 = vmul.f32 %v1409, 0.0625
    %v2358 = vmul.f32 %v1412, 0.0625
    %v2359 = vmul.f32 %v1415, 0.0625
    %v2360 = vmul.f32 %v1418, 0.0625
    %v2361 = vmul.f32 %v1421, 0.0625
    %v2362 = vmul.f32 %v1424, 0.0625
    %v2363 = vmul.f32 %v1427, 0.0625
    %v2364 = vmul.f32 %v1430, 0.0625
    %v2365 = vmul.f32 %v1433, 0.0625
    %v2366 = vmul.f32 %v1436, 0.0625
    %v2367 = vmul.f32 %v1439, 0.0625
    %v2368 = vmul.f32 %v1442, 0.0625
    %v2369 = vmul.f32 %v1445, 0.0625
    %v2370 = vmul.f32 %v1448, 0.0625
    %v2371 = vmul.f32 %v1451, 0.0625
    %v2372 = vmul.f32 %v1454, 0.0625
    %v2373 = vmul.f32 %v1457, 0.0625
    %v2374 = vmul.f32 %v1460, 0.0625
    %v2375 = vmul.f32 %v1463, 0.0625
    %v2376 = vmul.f32 %v1466, 0.0625
    %v2377 = vmul.f32 %v1469, 0.0625
    %v2378 = vmul.f32 %v1472, 0.0625
    %v2379 = vmul.f32 %v1475, 0.0625
    %v2380 = vmul.f32 %v1478, 0.0625
    %v2381 = vmul.f32 %v1481, 0.0625
    %v2382 = vmul.f32 %v1484, 0.0625
    %v2383 = vmul.f32 %v1487, 0.0625
    %v2384 = vmul.f32 %v1490, 0.0625
    %v2385 = vmul.f32 %v1493, 0.0625
    %v2386 = vmul.f32 %v1496, 0.0625
    %v2387 = vmul.f32 %v1499, 0.0625
    %v2388 = vmul.f32 %v1502, 0.0625
    %v2389 = vmul.f32 %v1505, 0.0625
    %v2390 = vmul.f32 %v1508, 0.0625
    %v2391 = vmul.f32 %v1511, 0.0625
    %v2392 = vmul.f32 %v1514, 0.0625
    %v2393 = vmul.f32 %v1517, 0.0625
    %v2394 = vmul.f32 %v1520, 0.0625
    %v2395 = vmul.f32 %v1523, 0.0625
    %v2396 = vmul.f32 %v1526, 0.0625
    %v2397 = vmul.f32 %v1529, 0.0625
    %v2398 = vmul.f32 %v1532, 0.0625
    %v2399 = vmul.f32 %v1535, 0.0625
    %v2400 = vmul.f32 %v1538, 0.0625
    %v2401 = vmul.f32 %v1541, 0.0625
    %v2402 = vmul.f32 %v1544, 0.0625
    %v2403 = vmul.f32 %v1547, 0.0625
    %v2404 = vmul.f32 %v1550, 0.0625
    %v2405 = vmul.f32 %v1553, 0.0625
    %v2406 = vmul.f32 %v1556, 0.0625
    %v2407 = vmul.f32 %v1559, 0.0625
    %v2408 = vmul.f32 %v1562, 0.0625
    %v2409 = vmul.f32 %v1565, 0.0625
    %v2410 = vmul.f32 %v1568, 0.0625
    %v2411 = vmul.f32 %v1571, 0.0625
    %v2412 = vmul.f32 %v1574, 0.0625
    %v2413 = vmul.f32 %v1577, 0.0625
    %v2414 = vmul.f32 %v1580, 0.0625
    %v2415 = vmul.f32 %v1583, 0.0625
    %v2416 = vmul.f32 %v1586, 0.0625
    %v2417 = vmul.f32 %v1589, 0.0625
    %v2418 = vmul.f32 %v1592, 0.0625
    %v2419 = vmul.f32 %v1595, 0.0625
    %v2420 = vmul.f32 %v1598, 0.0625
    %v2421 = vmul.f32 %v1601, 0.0625
    %v2422 = vmul.f32 %v1604, 0.0625
    %v2423 = vmul.f32 %v1607, 0.0625
    %v2424 = vmul.f32 %v1610, 0.0625
    %v2425 = vmul.f32 %v1613, 0.0625
    %v2426 = vmul.f32 %v1616, 0.0625
    %v2427 = vmul.f32 %v1619, 0.0625
    %v2428 = vmul.f32 %v1622, 0.0625
    %v2429 = vmul.f32 %v1625, 0.0625
    %v2430 = vmul.f32 %v1628, 0.0625
    %v2431 = vmul.f32 %v1631, 0.0625
    %v2432 = vmul.f32 %v1634, 0.0625
    %v2433 = vmul.f32 %v1637, 0.0625
    %v2434 = vmul.f32 %v1640, 0.0625
    %v2435 = vmul.f32 %v1643, 0.0625
    %v2436 = vmul.f32 %v1646, 0.0625
    %v2437 = vmul.f32 %v1649, 0.0625
    %v2438 = vmul.f32 %v1652, 0.0625
    %v2439 = vmul.f32 %v1655, 0.0625
    %v2440 = vmul.f32 %v1658, 0.0625
    %v2441 = vmul.f32 %v1661, 0.0625
    %v2442 = vmul.f32 %v1664, 0.0625
    %v2443 = vmul.f32 %v1667, 0.0625
    %v2444 = vmul.f32 %v1670, 0.0625
    %v2445 = vmul.f32 %v1673, 0.0625
    %v2446 = vmul.f32 %v1676, 0.0625
    %v2447 = vmul.f32 %v1679, 0.0625
    %v2448 = vmul.f32 %v1682, 0.0625
    %v2449 = vmul.f32 %v1685, 0.0625
    %v2450 = vmul.f32 %v1688, 0.0625
    %v2451 = vmul.f32 %v1691, 0.0625
    %v2452 = vmul.f32 %v1694, 0.0625
    %v2453 = vmul.f32 %v1697, 0.0625
    %v2454 = vmul.f32 %v1700, 0.0625
    %v2455 = vmul.f32 %v1703, 0.0625
    %v2456 = vmul.f32 %v1706, 0.0625
    %v2457 = vmul.f32 %v1709, 0.0625
    %v2458 = vmul.f32 %v1712, 0.0625
    %v2459 = vmul.f32 %v1715, 0.0625
    %v2460 = vmul.f32 %v1718, 0.0625
    %v2461 = vmul.f32 %v1721, 0.0625
    %v2462 = vmul.f32 %v1724, 0.0625
    %v2463 = vmul.f32 %v1727, 0.0625
    %v2464 = vmul.f32 %v1730, 0.0625
    %v2465 = vmul.f32 %v1733, 0.0625
    %v2466 = vmul.f32 %v1736, 0.0625
    %v2467 = vmul.f32 %v1739, 0.0625
    %v2468 = vmul.f32 %v1742, 0.0625
    %v2469 = vmul.f32 %v1745, 0.0625
    %v2470 = vmul.f32 %v1748, 0.0625
    %v2471 = vmul.f32 %v1751, 0.0625
    %v2472 = vmul.f32 %v1754, 0.0625
    %v2473 = vmul.f32 %v1757, 0.0625
    %v2474 = vmul.f32 %v1760, 0.0625
    %v2475 = vmul.f32 %v1763, 0.0625
    %v2476 = vmul.f32 %v1766, 0.0625
    %v2477 = vmul.f32 %v1769, 0.0625
    %v2478 = vmul.f32 %v1772, 0.0625
    %v2479 = vmul.f32 %v1775, 0.0625
    %v2480 = vmul.f32 %v1778, 0.0625
    %v2481 = vmul.f32 %v1781, 0.0625
    %v2482 = vmul.f32 %v1784, 0.0625
    %v2483 = vmul.f32 %v1787, 0.0625
    %v2484 = vmul.f32 %v1790, 0.0625
    %v2485 = vmul.f32 %v1793, 0.0625
    %v2486 = vmul.f32 %v1796, 0.0625
    %v2487 = vmul.f32 %v1799, 0.0625
    %v2488 = vmul.f32 %v1802, 0.0625
    %v2489 = vmul.f32 %v1805, 0.0625
    %v2490 = vmul.f32 %v1808, 0.0625
    %v2491 = vmul.f32 %v1811, 0.0625
    %v2492 = vmul.f32 %v1814, 0.0625
    %v2493 = vmul.f32 %v1817, 0.0625
    %v2494 = vmul.f32 %v1820, 0.0625
    %v2495 = vmul.f32 %v1823, 0.0625
    %v2496 = vmul.f32 %v1826, 0.0625
    %v2497 = vmul.f32 %v1829, 0.0625
    %v2498 = vmul.f32 %v1832, 0.0625
    %v2499 = vmul.f32 %v1835, 0.0625
    %v2500 = vmul.f32 %v1838, 0.0625
    %v2501 = vmul.f32 %v1841, 0.0625
    %v2502 = vmul.f32 %v1844, 0.0625
    %v2503 = vmul.f32 %v1847, 0.0625
    %v2504 = vmul.f32 %v1850, 0.0625
    %v2505 = vmul.f32 %v1853, 0.0625
    %v2506 = vmul.f32 %v1856, 0.0625
    %v2507 = vmul.f32 %v1859, 0.0625
    %v2508 = vmul.f32 %v1862, 0.0625
    %v2509 = vmul.f32 %v1865, 0.0625
    %v2510 = vmul.f32 %v1868, 0.0625
    %v2511 = vmul.f32 %v1871, 0.0625
    %v2512 = vmul.f32 %v1874, 0.0625
    %v2513 = vmul.f32 %v1877, 0.0625
    %v2514 = vmul.f32 %v1880, 0.0625
    %v2515 = vmul.f32 %v1883, 0.0625
    %v2516 = vmul.f32 %v1886, 0.0625
    %v2517 = vmul.f32 %v1889, 0.0625
    %v2518 = vmul.f32 %v1892, 0.0625
    %v2519 = vmul.f32 %v1895, 0.0625
    %v2520 = vmul.f32 %v1898, 0.0625
    %v2521 = vmul.f32 %v1901, 0.0625
    %v2522 = vmul.f32 %v1904, 0.0625
    %v2523 = vmul.f32 %v1907, 0.0625
    %v2524 = vmul.f32 %v1910, 0.0625
    %v2525 = vmul.f32 %v1913, 0.0625
    %v2526 = vmul.f32 %v1916, 0.0625
    %v2527 = vmul.f32 %v1919, 0.0625
    %v2528 = vmul.f32 %v1922, 0.0625
    %v2529 = vmul.f32 %v1925, 0.0625
    %v2530 = vmul.f32 %v1928, 0.0625
    %v2531 = vmul.f32 %v1931, 0.0625
    %v2532 = vmul.f32 %v1934, 0.0625
    %v2533 = vmul.f32 %v1937, 0.0625
    %v2534 = vmul.f32 %v1940, 0.0625
    %v2535 = vmul.f32 %v1943, 0.0625
    %v2536 = vmul.f32 %v1946, 0.0625
    %v2537 = vmul.f32 %v1949, 0.0625
    %v2538 = vmul.f32 %v1952, 0.0625
    %v2539 = vmul.f32 %v1955, 0.0625
    %v2540 = vmul.f32 %v1958, 0.0625
    %v2541 = vmul.f32 %v1961, 0.0625
    %v2542 = vmul.f32 %v1964, 0.0625
    %v2543 = vmul.f32 %v1967, 0.0625
    %v2544 = vmul.f32 %v1970, 0.0625
    %v2545 = vmul.f32 %v1973, 0.0625
    %v2546 = vmul.f32 %v1976, 0.0625
    %v2547 = vmul.f32 %v1979, 0.0625
    %v2548 = vmul.f32 %v1982, 0.0625
    %v2549 = vmul.f32 %v1985, 0.0625
    %v2550 = vmul.f32 %v1988, 0.0625
    %v2551 = vmul.f32 %v1991, 0.0625
    %v2552 = vmul.f32 %v1994, 0.0625
    %v2553 = vmul.f32 %v1997, 0.0625
    %v2554 = vmul.f32 %v2000, 0.0625
    %v2555 = vmul.f32 %v2003, 0.0625
    %v2556 = vmul.f32 %v2006, 0.0625
    %v2557 = vmul.f32 %v2009, 0.0625
    %v2558 = vmul.f32 %v2012, 0.0625
    %v2559 = vmul.f32 %v2015, 0.0625
    %v2560 = vmul.f32 %v2018, 0.0625
    %v2561 = vmul.f32 %v2021, 0.0625
    %v2562 = vmul.f32 %v2024, 0.0625
    %v2563 = vmul.f32 %v2027, 0.0625
    %v2564 = vmul.f32 %v2030, 0.0625
    %v2565 = vmul.f32 %v2033, 0.0625
    %v2566 = vmul.f32 %v2036, 0.0625
    %v2567 = vmul.f32 %v2039, 0.0625
    %v2568 = vmul.f32 %v2042, 0.0625
    %v2569 = vmul.f32 %v2045, 0.0625
    %v2570 = vmul.f32 %v2048, 0.0625
    %v2571 = vmul.f32 %v2051, 0.0625
    %v2572 = vmul.f32 %v2054, 0.0625
    %v2573 = vmul.f32 %v2057, 0.0625
    %v2574 = vmul.f32 %v2060, 0.0625
    %v2575 = vmul.f32 %v2063, 0.0625
    %v2576 = vld [vmem:[%s1] sm:$0xff]
    %v2577 = vld [vmem:[%s1 + $0x8] sm:$0xff]
    %v2578 = vld [vmem:[%s1 + $0x10] sm:$0xff]
    %v2579 = vld [vmem:[%s1 + $0x18] sm:$0xff]
    %v2580 = vld [vmem:[%s1 + $0x20] sm:$0xff]
    %v2581 = vld [vmem:[%s1 + $0x28] sm:$0xff]
    %v2582 = vld [vmem:[%s1 + $0x30] sm:$0xff]
    %v2583 = vld [vmem:[%s1 + $0x38] sm:$0xff]
    %v2584 = vld [vmem:[%s1 + $0x40] sm:$0xff]
    %v2585 = vld [vmem:[%s1 + $0x48] sm:$0xff]
    %v2586 = vld [vmem:[%s1 + $0x50] sm:$0xff]
    %v2587 = vld [vmem:[%s1 + $0x58] sm:$0xff]
    %v2588 = vld [vmem:[%s1 + $0x60] sm:$0xff]
    %v2589 = vld [vmem:[%s1 + $0x68] sm:$0xff]
    %v2590 = vld [vmem:[%s1 + $0x70] sm:$0xff]
    %v2591 = vld [vmem:[%s1 + $0x78] sm:$0xff]
    %v2592 = vld [vmem:[%s1 + $0x80] sm:$0xff]
    %v2593 = vld [vmem:[%s1 + $0x88] sm:$0xff]
    %v2594 = vld [vmem:[%s1 + $0x90] sm:$0xff]
    %v2595 = vld [vmem:[%s1 + $0x98] sm:$0xff]
    %v2596 = vld [vmem:[%s1 + $0xa0] sm:$0xff]
    %v2597 = vld [vmem:[%s1 + $0xa8] sm:$0xff]
    %v2598 = vld [vmem:[%s1 + $0xb0] sm:$0xff]
    %v2599 = vld [vmem:[%s1 + $0xb8] sm:$0xff]
    %v2600 = vld [vmem:[%s1 + $0xc0] sm:$0xff]
    %v2601 = vld [vmem:[%s1 + $0xc8] sm:$0xff]
    %v2602 = vld [vmem:[%s1 + $0xd0] sm:$0xff]
    %v2603 = vld [vmem:[%s1 + $0xd8] sm:$0xff]
    %v2604 = vld [vmem:[%s1 + $0xe0] sm:$0xff]
    %v2605 = vld [vmem:[%s1 + $0xe8] sm:$0xff]
    %v2606 = vld [vmem:[%s1 + $0xf0] sm:$0xff]
    %v2607 = vld [vmem:[%s1 + $0xf8] sm:$0xff]
    %v2608 = vld [vmem:[%s1 + $0x100] sm:$0xff]
    %v2609 = vld [vmem:[%s1 + $0x108] sm:$0xff]
    %v2610 = vld [vmem:[%s1 + $0x110] sm:$0xff]
    %v2611 = vld [vmem:[%s1 + $0x118] sm:$0xff]
    %v2612 = vld [vmem:[%s1 + $0x120] sm:$0xff]
    %v2613 = vld [vmem:[%s1 + $0x128] sm:$0xff]
    %v2614 = vld [vmem:[%s1 + $0x130] sm:$0xff]
    %v2615 = vld [vmem:[%s1 + $0x138] sm:$0xff]
    %v2616 = vld [vmem:[%s1 + $0x140] sm:$0xff]
    %v2617 = vld [vmem:[%s1 + $0x148] sm:$0xff]
    %v2618 = vld [vmem:[%s1 + $0x150] sm:$0xff]
    %v2619 = vld [vmem:[%s1 + $0x158] sm:$0xff]
    %v2620 = vld [vmem:[%s1 + $0x160] sm:$0xff]
    %v2621 = vld [vmem:[%s1 + $0x168] sm:$0xff]
    %v2622 = vld [vmem:[%s1 + $0x170] sm:$0xff]
    %v2623 = vld [vmem:[%s1 + $0x178] sm:$0xff]
    %v2624 = vld [vmem:[%s1 + $0x180] sm:$0xff]
    %v2625 = vld [vmem:[%s1 + $0x188] sm:$0xff]
    %v2626 = vld [vmem:[%s1 + $0x190] sm:$0xff]
    %v2627 = vld [vmem:[%s1 + $0x198] sm:$0xff]
    %v2628 = vld [vmem:[%s1 + $0x1a0] sm:$0xff]
    %v2629 = vld [vmem:[%s1 + $0x1a8] sm:$0xff]
    %v2630 = vld [vmem:[%s1 + $0x1b0] sm:$0xff]
    %v2631 = vld [vmem:[%s1 + $0x1b8] sm:$0xff]
    %v2632 = vld [vmem:[%s1 + $0x1c0] sm:$0xff]
    %v2633 = vld [vmem:[%s1 + $0x1c8] sm:$0xff]
    %v2634 = vld [vmem:[%s1 + $0x1d0] sm:$0xff]
    %v2635 = vld [vmem:[%s1 + $0x1d8] sm:$0xff]
    %v2636 = vld [vmem:[%s1 + $0x1e0] sm:$0xff]
    %v2637 = vld [vmem:[%s1 + $0x1e8] sm:$0xff]
    %v2638 = vld [vmem:[%s1 + $0x1f0] sm:$0xff]
    %v2639 = vld [vmem:[%s1 + $0x1f8] sm:$0xff]
    %v2640 = vld [vmem:[%s1 + $0x200] sm:$0xff]
    %v2641 = vld [vmem:[%s1 + $0x208] sm:$0xff]
    %v2642 = vld [vmem:[%s1 + $0x210] sm:$0xff]
    %v2643 = vld [vmem:[%s1 + $0x218] sm:$0xff]
    %v2644 = vld [vmem:[%s1 + $0x220] sm:$0xff]
    %v2645 = vld [vmem:[%s1 + $0x228] sm:$0xff]
    %v2646 = vld [vmem:[%s1 + $0x230] sm:$0xff]
    %v2647 = vld [vmem:[%s1 + $0x238] sm:$0xff]
    %v2648 = vld [vmem:[%s1 + $0x240] sm:$0xff]
    %v2649 = vld [vmem:[%s1 + $0x248] sm:$0xff]
    %v2650 = vld [vmem:[%s1 + $0x250] sm:$0xff]
    %v2651 = vld [vmem:[%s1 + $0x258] sm:$0xff]
    %v2652 = vld [vmem:[%s1 + $0x260] sm:$0xff]
    %v2653 = vld [vmem:[%s1 + $0x268] sm:$0xff]
    %v2654 = vld [vmem:[%s1 + $0x270] sm:$0xff]
    %v2655 = vld [vmem:[%s1 + $0x278] sm:$0xff]
    %v2656 = vld [vmem:[%s1 + $0x280] sm:$0xff]
    %v2657 = vld [vmem:[%s1 + $0x288] sm:$0xff]
    %v2658 = vld [vmem:[%s1 + $0x290] sm:$0xff]
    %v2659 = vld [vmem:[%s1 + $0x298] sm:$0xff]
    %v2660 = vld [vmem:[%s1 + $0x2a0] sm:$0xff]
    %v2661 = vld [vmem:[%s1 + $0x2a8] sm:$0xff]
    %v2662 = vld [vmem:[%s1 + $0x2b0] sm:$0xff]
    %v2663 = vld [vmem:[%s1 + $0x2b8] sm:$0xff]
    %v2664 = vld [vmem:[%s1 + $0x2c0] sm:$0xff]
    %v2665 = vld [vmem:[%s1 + $0x2c8] sm:$0xff]
    %v2666 = vld [vmem:[%s1 + $0x2d0] sm:$0xff]
    %v2667 = vld [vmem:[%s1 + $0x2d8] sm:$0xff]
    %v2668 = vld [vmem:[%s1 + $0x2e0] sm:$0xff]
    %v2669 = vld [vmem:[%s1 + $0x2e8] sm:$0xff]
    %v2670 = vld [vmem:[%s1 + $0x2f0] sm:$0xff]
    %v2671 = vld [vmem:[%s1 + $0x2f8] sm:$0xff]
    %v2672 = vld [vmem:[%s1 + $0x300] sm:$0xff]
    %v2673 = vld [vmem:[%s1 + $0x308] sm:$0xff]
    %v2674 = vld [vmem:[%s1 + $0x310] sm:$0xff]
    %v2675 = vld [vmem:[%s1 + $0x318] sm:$0xff]
    %v2676 = vld [vmem:[%s1 + $0x320] sm:$0xff]
    %v2677 = vld [vmem:[%s1 + $0x328] sm:$0xff]
    %v2678 = vld [vmem:[%s1 + $0x330] sm:$0xff]
    %v2679 = vld [vmem:[%s1 + $0x338] sm:$0xff]
    %v2680 = vld [vmem:[%s1 + $0x340] sm:$0xff]
    %v2681 = vld [vmem:[%s1 + $0x348] sm:$0xff]
    %v2682 = vld [vmem:[%s1 + $0x350] sm:$0xff]
    %v2683 = vld [vmem:[%s1 + $0x358] sm:$0xff]
    %v2684 = vld [vmem:[%s1 + $0x360] sm:$0xff]
    %v2685 = vld [vmem:[%s1 + $0x368] sm:$0xff]
    %v2686 = vld [vmem:[%s1 + $0x370] sm:$0xff]
    %v2687 = vld [vmem:[%s1 + $0x378] sm:$0xff]
    %v2688 = vld [vmem:[%s1 + $0x380] sm:$0xff]
    %v2689 = vld [vmem:[%s1 + $0x388] sm:$0xff]
    %v2690 = vld [vmem:[%s1 + $0x390] sm:$0xff]
    %v2691 = vld [vmem:[%s1 + $0x398] sm:$0xff]
    %v2692 = vld [vmem:[%s1 + $0x3a0] sm:$0xff]
    %v2693 = vld [vmem:[%s1 + $0x3a8] sm:$0xff]
    %v2694 = vld [vmem:[%s1 + $0x3b0] sm:$0xff]
    %v2695 = vld [vmem:[%s1 + $0x3b8] sm:$0xff]
    %v2696 = vld [vmem:[%s1 + $0x3c0] sm:$0xff]
    %v2697 = vld [vmem:[%s1 + $0x3c8] sm:$0xff]
    %v2698 = vld [vmem:[%s1 + $0x3d0] sm:$0xff]
    %v2699 = vld [vmem:[%s1 + $0x3d8] sm:$0xff]
    %v2700 = vld [vmem:[%s1 + $0x3e0] sm:$0xff]
    %v2701 = vld [vmem:[%s1 + $0x3e8] sm:$0xff]
    %v2702 = vld [vmem:[%s1 + $0x3f0] sm:$0xff]
    %v2703 = vld [vmem:[%s1 + $0x3f8] sm:$0xff]
    %v2704 = vld [vmem:[%s1 + $0x400] sm:$0xff]
    %v2705 = vld [vmem:[%s1 + $0x408] sm:$0xff]
    %v2706 = vld [vmem:[%s1 + $0x410] sm:$0xff]
    %v2707 = vld [vmem:[%s1 + $0x418] sm:$0xff]
    %v2708 = vld [vmem:[%s1 + $0x420] sm:$0xff]
    %v2709 = vld [vmem:[%s1 + $0x428] sm:$0xff]
    %v2710 = vld [vmem:[%s1 + $0x430] sm:$0xff]
    %v2711 = vld [vmem:[%s1 + $0x438] sm:$0xff]
    %v2712 = vld [vmem:[%s1 + $0x440] sm:$0xff]
    %v2713 = vld [vmem:[%s1 + $0x448] sm:$0xff]
    %v2714 = vld [vmem:[%s1 + $0x450] sm:$0xff]
    %v2715 = vld [vmem:[%s1 + $0x458] sm:$0xff]
    %v2716 = vld [vmem:[%s1 + $0x460] sm:$0xff]
    %v2717 = vld [vmem:[%s1 + $0x468] sm:$0xff]
    %v2718 = vld [vmem:[%s1 + $0x470] sm:$0xff]
    %v2719 = vld [vmem:[%s1 + $0x478] sm:$0xff]
    %v2720 = vld [vmem:[%s1 + $0x480] sm:$0xff]
    %v2721 = vld [vmem:[%s1 + $0x488] sm:$0xff]
    %v2722 = vld [vmem:[%s1 + $0x490] sm:$0xff]
    %v2723 = vld [vmem:[%s1 + $0x498] sm:$0xff]
    %v2724 = vld [vmem:[%s1 + $0x4a0] sm:$0xff]
    %v2725 = vld [vmem:[%s1 + $0x4a8] sm:$0xff]
    %v2726 = vld [vmem:[%s1 + $0x4b0] sm:$0xff]
    %v2727 = vld [vmem:[%s1 + $0x4b8] sm:$0xff]
    %v2728 = vld [vmem:[%s1 + $0x4c0] sm:$0xff]
    %v2729 = vld [vmem:[%s1 + $0x4c8] sm:$0xff]
    %v2730 = vld [vmem:[%s1 + $0x4d0] sm:$0xff]
    %v2731 = vld [vmem:[%s1 + $0x4d8] sm:$0xff]
    %v2732 = vld [vmem:[%s1 + $0x4e0] sm:$0xff]
    %v2733 = vld [vmem:[%s1 + $0x4e8] sm:$0xff]
    %v2734 = vld [vmem:[%s1 + $0x4f0] sm:$0xff]
    %v2735 = vld [vmem:[%s1 + $0x4f8] sm:$0xff]
    %v2736 = vld [vmem:[%s1 + $0x500] sm:$0xff]
    %v2737 = vld [vmem:[%s1 + $0x508] sm:$0xff]
    %v2738 = vld [vmem:[%s1 + $0x510] sm:$0xff]
    %v2739 = vld [vmem:[%s1 + $0x518] sm:$0xff]
    %v2740 = vld [vmem:[%s1 + $0x520] sm:$0xff]
    %v2741 = vld [vmem:[%s1 + $0x528] sm:$0xff]
    %v2742 = vld [vmem:[%s1 + $0x530] sm:$0xff]
    %v2743 = vld [vmem:[%s1 + $0x538] sm:$0xff]
    %v2744 = vld [vmem:[%s1 + $0x540] sm:$0xff]
    %v2745 = vld [vmem:[%s1 + $0x548] sm:$0xff]
    %v2746 = vld [vmem:[%s1 + $0x550] sm:$0xff]
    %v2747 = vld [vmem:[%s1 + $0x558] sm:$0xff]
    %v2748 = vld [vmem:[%s1 + $0x560] sm:$0xff]
    %v2749 = vld [vmem:[%s1 + $0x568] sm:$0xff]
    %v2750 = vld [vmem:[%s1 + $0x570] sm:$0xff]
    %v2751 = vld [vmem:[%s1 + $0x578] sm:$0xff]
    %v2752 = vld [vmem:[%s1 + $0x580] sm:$0xff]
    %v2753 = vld [vmem:[%s1 + $0x588] sm:$0xff]
    %v2754 = vld [vmem:[%s1 + $0x590] sm:$0xff]
    %v2755 = vld [vmem:[%s1 + $0x598] sm:$0xff]
    %v2756 = vld [vmem:[%s1 + $0x5a0] sm:$0xff]
    %v2757 = vld [vmem:[%s1 + $0x5a8] sm:$0xff]
    %v2758 = vld [vmem:[%s1 + $0x5b0] sm:$0xff]
    %v2759 = vld [vmem:[%s1 + $0x5b8] sm:$0xff]
    %v2760 = vld [vmem:[%s1 + $0x5c0] sm:$0xff]
    %v2761 = vld [vmem:[%s1 + $0x5c8] sm:$0xff]
    %v2762 = vld [vmem:[%s1 + $0x5d0] sm:$0xff]
    %v2763 = vld [vmem:[%s1 + $0x5d8] sm:$0xff]
    %v2764 = vld [vmem:[%s1 + $0x5e0] sm:$0xff]
    %v2765 = vld [vmem:[%s1 + $0x5e8] sm:$0xff]
    %v2766 = vld [vmem:[%s1 + $0x5f0] sm:$0xff]
    %v2767 = vld [vmem:[%s1 + $0x5f8] sm:$0xff]
    %v2768 = vld [vmem:[%s1 + $0x600] sm:$0xff]
    %v2769 = vld [vmem:[%s1 + $0x608] sm:$0xff]
    %v2770 = vld [vmem:[%s1 + $0x610] sm:$0xff]
    %v2771 = vld [vmem:[%s1 + $0x618] sm:$0xff]
    %v2772 = vld [vmem:[%s1 + $0x620] sm:$0xff]
    %v2773 = vld [vmem:[%s1 + $0x628] sm:$0xff]
    %v2774 = vld [vmem:[%s1 + $0x630] sm:$0xff]
    %v2775 = vld [vmem:[%s1 + $0x638] sm:$0xff]
    %v2776 = vld [vmem:[%s1 + $0x640] sm:$0xff]
    %v2777 = vld [vmem:[%s1 + $0x648] sm:$0xff]
    %v2778 = vld [vmem:[%s1 + $0x650] sm:$0xff]
    %v2779 = vld [vmem:[%s1 + $0x658] sm:$0xff]
    %v2780 = vld [vmem:[%s1 + $0x660] sm:$0xff]
    %v2781 = vld [vmem:[%s1 + $0x668] sm:$0xff]
    %v2782 = vld [vmem:[%s1 + $0x670] sm:$0xff]
    %v2783 = vld [vmem:[%s1 + $0x678] sm:$0xff]
    %v2784 = vld [vmem:[%s1 + $0x680] sm:$0xff]
    %v2785 = vld [vmem:[%s1 + $0x688] sm:$0xff]
    %v2786 = vld [vmem:[%s1 + $0x690] sm:$0xff]
    %v2787 = vld [vmem:[%s1 + $0x698] sm:$0xff]
    %v2788 = vld [vmem:[%s1 + $0x6a0] sm:$0xff]
    %v2789 = vld [vmem:[%s1 + $0x6a8] sm:$0xff]
    %v2790 = vld [vmem:[%s1 + $0x6b0] sm:$0xff]
    %v2791 = vld [vmem:[%s1 + $0x6b8] sm:$0xff]
    %v2792 = vld [vmem:[%s1 + $0x6c0] sm:$0xff]
    %v2793 = vld [vmem:[%s1 + $0x6c8] sm:$0xff]
    %v2794 = vld [vmem:[%s1 + $0x6d0] sm:$0xff]
    %v2795 = vld [vmem:[%s1 + $0x6d8] sm:$0xff]
    %v2796 = vld [vmem:[%s1 + $0x6e0] sm:$0xff]
    %v2797 = vld [vmem:[%s1 + $0x6e8] sm:$0xff]
    %v2798 = vld [vmem:[%s1 + $0x6f0] sm:$0xff]
    %v2799 = vld [vmem:[%s1 + $0x6f8] sm:$0xff]
    %v2800 = vld [vmem:[%s1 + $0x700] sm:$0xff]
    %v2801 = vld [vmem:[%s1 + $0x708] sm:$0xff]
    %v2802 = vld [vmem:[%s1 + $0x710] sm:$0xff]
    %v2803 = vld [vmem:[%s1 + $0x718] sm:$0xff]
    %v2804 = vld [vmem:[%s1 + $0x720] sm:$0xff]
    %v2805 = vld [vmem:[%s1 + $0x728] sm:$0xff]
    %v2806 = vld [vmem:[%s1 + $0x730] sm:$0xff]
    %v2807 = vld [vmem:[%s1 + $0x738] sm:$0xff]
    %v2808 = vld [vmem:[%s1 + $0x740] sm:$0xff]
    %v2809 = vld [vmem:[%s1 + $0x748] sm:$0xff]
    %v2810 = vld [vmem:[%s1 + $0x750] sm:$0xff]
    %v2811 = vld [vmem:[%s1 + $0x758] sm:$0xff]
    %v2812 = vld [vmem:[%s1 + $0x760] sm:$0xff]
    %v2813 = vld [vmem:[%s1 + $0x768] sm:$0xff]
    %v2814 = vld [vmem:[%s1 + $0x770] sm:$0xff]
    %v2815 = vld [vmem:[%s1 + $0x778] sm:$0xff]
    %v2816 = vld [vmem:[%s1 + $0x780] sm:$0xff]
    %v2817 = vld [vmem:[%s1 + $0x788] sm:$0xff]
    %v2818 = vld [vmem:[%s1 + $0x790] sm:$0xff]
    %v2819 = vld [vmem:[%s1 + $0x798] sm:$0xff]
    %v2820 = vld [vmem:[%s1 + $0x7a0] sm:$0xff]
    %v2821 = vld [vmem:[%s1 + $0x7a8] sm:$0xff]
    %v2822 = vld [vmem:[%s1 + $0x7b0] sm:$0xff]
    %v2823 = vld [vmem:[%s1 + $0x7b8] sm:$0xff]
    %v2824 = vld [vmem:[%s1 + $0x7c0] sm:$0xff]
    %v2825 = vld [vmem:[%s1 + $0x7c8] sm:$0xff]
    %v2826 = vld [vmem:[%s1 + $0x7d0] sm:$0xff]
    %v2827 = vld [vmem:[%s1 + $0x7d8] sm:$0xff]
    %v2828 = vld [vmem:[%s1 + $0x7e0] sm:$0xff]
    %v2829 = vld [vmem:[%s1 + $0x7e8] sm:$0xff]
    %v2830 = vld [vmem:[%s1 + $0x7f0] sm:$0xff]
    %v2831 = vld [vmem:[%s1 + $0x7f8] sm:$0xff]
    %v2832 = vld [vmem:[%s2] sm:$0x1]
    %v2834 = vlaneseq
    %v2835 = vshrl.u32 %v2834, 7
    %v2836 = vsub.s32 0, %v2835
    %v2837 = vrot.slane %v2832, %v2836
    %v3351 = vlaneseq
    %v3352 = vand.u32 %v3351, 127
    %v3353 = vlaneseq
    %v3354 = vshrl.u32 %v3353, 7
    %v3355 = vsub.s32 %v3352, %v3354
    %v3356 = vrot.slane %v2064, %v3355
    %v3357 = vadd.s32 %v3352, 4294967288
    %v3358 = vlaneseq
    %v3359 = vshrl.u32 %v3358, 7
    %v3360 = vsub.s32 %v3357, %v3359
    %v3361 = vrot.slane %v2065, %v3360
    %vm3362 = vcmask 130112
    %v3363 = vsel %vm3362, %v3361, %v3356
    %v3364 = vadd.s32 %v3352, 4294967280
    %v3365 = vlaneseq
    %v3366 = vshrl.u32 %v3365, 7
    %v3367 = vsub.s32 %v3364, %v3366
    %v3368 = vrot.slane %v2066, %v3367
    %vm3369 = vcmask 195712
    %v3370 = vsel %vm3369, %v3368, %v3363
    %v3371 = vadd.s32 %v3352, 4294967272
    %v3372 = vlaneseq
    %v3373 = vshrl.u32 %v3372, 7
    %v3374 = vsub.s32 %v3371, %v3373
    %v3375 = vrot.slane %v2067, %v3374
    %vm3376 = vcmask 261312
    %v3377 = vsel %vm3376, %v3375, %v3370
    %v3378 = vadd.s32 %v3352, 4294967264
    %v3379 = vlaneseq
    %v3380 = vshrl.u32 %v3379, 7
    %v3381 = vsub.s32 %v3378, %v3380
    %v3382 = vrot.slane %v2068, %v3381
    %vm3383 = vcmask 326912
    %v3384 = vsel %vm3383, %v3382, %v3377
    %v3385 = vadd.s32 %v3352, 4294967256
    %v3386 = vlaneseq
    %v3387 = vshrl.u32 %v3386, 7
    %v3388 = vsub.s32 %v3385, %v3387
    %v3389 = vrot.slane %v2069, %v3388
    %vm3390 = vcmask 392512
    %v3391 = vsel %vm3390, %v3389, %v3384
    %v3392 = vadd.s32 %v3352, 4294967248
    %v3393 = vlaneseq
    %v3394 = vshrl.u32 %v3393, 7
    %v3395 = vsub.s32 %v3392, %v3394
    %v3396 = vrot.slane %v2070, %v3395
    %vm3397 = vcmask 458112
    %v3398 = vsel %vm3397, %v3396, %v3391
    %v3399 = vadd.s32 %v3352, 4294967240
    %v3400 = vlaneseq
    %v3401 = vshrl.u32 %v3400, 7
    %v3402 = vsub.s32 %v3399, %v3401
    %v3403 = vrot.slane %v2071, %v3402
    %vm3404 = vcmask 523712
    %v3405 = vsel %vm3404, %v3403, %v3398
    %v3406 = vadd.s32 %v3352, 4294967232
    %v3407 = vlaneseq
    %v3408 = vshrl.u32 %v3407, 7
    %v3409 = vsub.s32 %v3406, %v3408
    %v3410 = vrot.slane %v2072, %v3409
    %vm3411 = vcmask 589312
    %v3412 = vsel %vm3411, %v3410, %v3405
    %v3413 = vadd.s32 %v3352, 4294967224
    %v3414 = vlaneseq
    %v3415 = vshrl.u32 %v3414, 7
    %v3416 = vsub.s32 %v3413, %v3415
    %v3417 = vrot.slane %v2073, %v3416
    %vm3418 = vcmask 654912
    %v3419 = vsel %vm3418, %v3417, %v3412
    %v3420 = vadd.s32 %v3352, 4294967216
    %v3421 = vlaneseq
    %v3422 = vshrl.u32 %v3421, 7
    %v3423 = vsub.s32 %v3420, %v3422
    %v3424 = vrot.slane %v2074, %v3423
    %vm3425 = vcmask 720512
    %v3426 = vsel %vm3425, %v3424, %v3419
    %v3427 = vadd.s32 %v3352, 4294967208
    %v3428 = vlaneseq
    %v3429 = vshrl.u32 %v3428, 7
    %v3430 = vsub.s32 %v3427, %v3429
    %v3431 = vrot.slane %v2075, %v3430
    %vm3432 = vcmask 786112
    %v3433 = vsel %vm3432, %v3431, %v3426
    %v3434 = vadd.s32 %v3352, 4294967200
    %v3435 = vlaneseq
    %v3436 = vshrl.u32 %v3435, 7
    %v3437 = vsub.s32 %v3434, %v3436
    %v3438 = vrot.slane %v2076, %v3437
    %vm3439 = vcmask 851712
    %v3440 = vsel %vm3439, %v3438, %v3433
    %v3441 = vadd.s32 %v3352, 4294967192
    %v3442 = vlaneseq
    %v3443 = vshrl.u32 %v3442, 7
    %v3444 = vsub.s32 %v3441, %v3443
    %v3445 = vrot.slane %v2077, %v3444
    %vm3446 = vcmask 917312
    %v3447 = vsel %vm3446, %v3445, %v3440
    %v3448 = vadd.s32 %v3352, 4294967184
    %v3449 = vlaneseq
    %v3450 = vshrl.u32 %v3449, 7
    %v3451 = vsub.s32 %v3448, %v3450
    %v3452 = vrot.slane %v2078, %v3451
    %vm3453 = vcmask 982912
    %v3454 = vsel %vm3453, %v3452, %v3447
    %v3455 = vadd.s32 %v3352, 4294967176
    %v3456 = vlaneseq
    %v3457 = vshrl.u32 %v3456, 7
    %v3458 = vsub.s32 %v3455, %v3457
    %v3459 = vrot.slane %v2079, %v3458
    %vm3460 = vcmask 1048512
    %v3461 = vsel %vm3460, %v3459, %v3454
    %v3462 = vlaneseq
    %v3463 = vshrl.u32 %v3462, 7
    %v3464 = vsub.s32 %v3352, %v3463
    %v3465 = vrot.slane %v2080, %v3464
    %v3466 = vlaneseq
    %v3467 = vshrl.u32 %v3466, 7
    %v3468 = vsub.s32 %v3357, %v3467
    %v3469 = vrot.slane %v2081, %v3468
    %v3470 = vsel %vm3362, %v3469, %v3465
    %v3471 = vlaneseq
    %v3472 = vshrl.u32 %v3471, 7
    %v3473 = vsub.s32 %v3364, %v3472
    %v3474 = vrot.slane %v2082, %v3473
    %v3475 = vsel %vm3369, %v3474, %v3470
    %v3476 = vlaneseq
    %v3477 = vshrl.u32 %v3476, 7
    %v3478 = vsub.s32 %v3371, %v3477
    %v3479 = vrot.slane %v2083, %v3478
    %v3480 = vsel %vm3376, %v3479, %v3475
    %v3481 = vlaneseq
    %v3482 = vshrl.u32 %v3481, 7
    %v3483 = vsub.s32 %v3378, %v3482
    %v3484 = vrot.slane %v2084, %v3483
    %v3485 = vsel %vm3383, %v3484, %v3480
    %v3486 = vlaneseq
    %v3487 = vshrl.u32 %v3486, 7
    %v3488 = vsub.s32 %v3385, %v3487
    %v3489 = vrot.slane %v2085, %v3488
    %v3490 = vsel %vm3390, %v3489, %v3485
    %v3491 = vlaneseq
    %v3492 = vshrl.u32 %v3491, 7
    %v3493 = vsub.s32 %v3392, %v3492
    %v3494 = vrot.slane %v2086, %v3493
    %v3495 = vsel %vm3397, %v3494, %v3490
    %v3496 = vlaneseq
    %v3497 = vshrl.u32 %v3496, 7
    %v3498 = vsub.s32 %v3399, %v3497
    %v3499 = vrot.slane %v2087, %v3498
    %v3500 = vsel %vm3404, %v3499, %v3495
    %v3501 = vlaneseq
    %v3502 = vshrl.u32 %v3501, 7
    %v3503 = vsub.s32 %v3406, %v3502
    %v3504 = vrot.slane %v2088, %v3503
    %v3505 = vsel %vm3411, %v3504, %v3500
    %v3506 = vlaneseq
    %v3507 = vshrl.u32 %v3506, 7
    %v3508 = vsub.s32 %v3413, %v3507
    %v3509 = vrot.slane %v2089, %v3508
    %v3510 = vsel %vm3418, %v3509, %v3505
    %v3511 = vlaneseq
    %v3512 = vshrl.u32 %v3511, 7
    %v3513 = vsub.s32 %v3420, %v3512
    %v3514 = vrot.slane %v2090, %v3513
    %v3515 = vsel %vm3425, %v3514, %v3510
    %v3516 = vlaneseq
    %v3517 = vshrl.u32 %v3516, 7
    %v3518 = vsub.s32 %v3427, %v3517
    %v3519 = vrot.slane %v2091, %v3518
    %v3520 = vsel %vm3432, %v3519, %v3515
    %v3521 = vlaneseq
    %v3522 = vshrl.u32 %v3521, 7
    %v3523 = vsub.s32 %v3434, %v3522
    %v3524 = vrot.slane %v2092, %v3523
    %v3525 = vsel %vm3439, %v3524, %v3520
    %v3526 = vlaneseq
    %v3527 = vshrl.u32 %v3526, 7
    %v3528 = vsub.s32 %v3441, %v3527
    %v3529 = vrot.slane %v2093, %v3528
    %v3530 = vsel %vm3446, %v3529, %v3525
    %v3531 = vlaneseq
    %v3532 = vshrl.u32 %v3531, 7
    %v3533 = vsub.s32 %v3448, %v3532
    %v3534 = vrot.slane %v2094, %v3533
    %v3535 = vsel %vm3453, %v3534, %v3530
    %v3536 = vlaneseq
    %v3537 = vshrl.u32 %v3536, 7
    %v3538 = vsub.s32 %v3455, %v3537
    %v3539 = vrot.slane %v2095, %v3538
    %v3540 = vsel %vm3460, %v3539, %v3535
    %v3541 = vlaneseq
    %v3542 = vshrl.u32 %v3541, 7
    %v3543 = vsub.s32 %v3352, %v3542
    %v3544 = vrot.slane %v2096, %v3543
    %v3545 = vlaneseq
    %v3546 = vshrl.u32 %v3545, 7
    %v3547 = vsub.s32 %v3357, %v3546
    %v3548 = vrot.slane %v2097, %v3547
    %v3549 = vsel %vm3362, %v3548, %v3544
    %v3550 = vlaneseq
    %v3551 = vshrl.u32 %v3550, 7
    %v3552 = vsub.s32 %v3364, %v3551
    %v3553 = vrot.slane %v2098, %v3552
    %v3554 = vsel %vm3369, %v3553, %v3549
    %v3555 = vlaneseq
    %v3556 = vshrl.u32 %v3555, 7
    %v3557 = vsub.s32 %v3371, %v3556
    %v3558 = vrot.slane %v2099, %v3557
    %v3559 = vsel %vm3376, %v3558, %v3554
    %v3560 = vlaneseq
    %v3561 = vshrl.u32 %v3560, 7
    %v3562 = vsub.s32 %v3378, %v3561
    %v3563 = vrot.slane %v2100, %v3562
    %v3564 = vsel %vm3383, %v3563, %v3559
    %v3565 = vlaneseq
    %v3566 = vshrl.u32 %v3565, 7
    %v3567 = vsub.s32 %v3385, %v3566
    %v3568 = vrot.slane %v2101, %v3567
    %v3569 = vsel %vm3390, %v3568, %v3564
    %v3570 = vlaneseq
    %v3571 = vshrl.u32 %v3570, 7
    %v3572 = vsub.s32 %v3392, %v3571
    %v3573 = vrot.slane %v2102, %v3572
    %v3574 = vsel %vm3397, %v3573, %v3569
    %v3575 = vlaneseq
    %v3576 = vshrl.u32 %v3575, 7
    %v3577 = vsub.s32 %v3399, %v3576
    %v3578 = vrot.slane %v2103, %v3577
    %v3579 = vsel %vm3404, %v3578, %v3574
    %v3580 = vlaneseq
    %v3581 = vshrl.u32 %v3580, 7
    %v3582 = vsub.s32 %v3406, %v3581
    %v3583 = vrot.slane %v2104, %v3582
    %v3584 = vsel %vm3411, %v3583, %v3579
    %v3585 = vlaneseq
    %v3586 = vshrl.u32 %v3585, 7
    %v3587 = vsub.s32 %v3413, %v3586
    %v3588 = vrot.slane %v2105, %v3587
    %v3589 = vsel %vm3418, %v3588, %v3584
    %v3590 = vlaneseq
    %v3591 = vshrl.u32 %v3590, 7
    %v3592 = vsub.s32 %v3420, %v3591
    %v3593 = vrot.slane %v2106, %v3592
    %v3594 = vsel %vm3425, %v3593, %v3589
    %v3595 = vlaneseq
    %v3596 = vshrl.u32 %v3595, 7
    %v3597 = vsub.s32 %v3427, %v3596
    %v3598 = vrot.slane %v2107, %v3597
    %v3599 = vsel %vm3432, %v3598, %v3594
    %v3600 = vlaneseq
    %v3601 = vshrl.u32 %v3600, 7
    %v3602 = vsub.s32 %v3434, %v3601
    %v3603 = vrot.slane %v2108, %v3602
    %v3604 = vsel %vm3439, %v3603, %v3599
    %v3605 = vlaneseq
    %v3606 = vshrl.u32 %v3605, 7
    %v3607 = vsub.s32 %v3441, %v3606
    %v3608 = vrot.slane %v2109, %v3607
    %v3609 = vsel %vm3446, %v3608, %v3604
    %v3610 = vlaneseq
    %v3611 = vshrl.u32 %v3610, 7
    %v3612 = vsub.s32 %v3448, %v3611
    %v3613 = vrot.slane %v2110, %v3612
    %v3614 = vsel %vm3453, %v3613, %v3609
    %v3615 = vlaneseq
    %v3616 = vshrl.u32 %v3615, 7
    %v3617 = vsub.s32 %v3455, %v3616
    %v3618 = vrot.slane %v2111, %v3617
    %v3619 = vsel %vm3460, %v3618, %v3614
    %v3620 = vlaneseq
    %v3621 = vshrl.u32 %v3620, 7
    %v3622 = vsub.s32 %v3352, %v3621
    %v3623 = vrot.slane %v2112, %v3622
    %v3624 = vlaneseq
    %v3625 = vshrl.u32 %v3624, 7
    %v3626 = vsub.s32 %v3357, %v3625
    %v3627 = vrot.slane %v2113, %v3626
    %v3628 = vsel %vm3362, %v3627, %v3623
    %v3629 = vlaneseq
    %v3630 = vshrl.u32 %v3629, 7
    %v3631 = vsub.s32 %v3364, %v3630
    %v3632 = vrot.slane %v2114, %v3631
    %v3633 = vsel %vm3369, %v3632, %v3628
    %v3634 = vlaneseq
    %v3635 = vshrl.u32 %v3634, 7
    %v3636 = vsub.s32 %v3371, %v3635
    %v3637 = vrot.slane %v2115, %v3636
    %v3638 = vsel %vm3376, %v3637, %v3633
    %v3639 = vlaneseq
    %v3640 = vshrl.u32 %v3639, 7
    %v3641 = vsub.s32 %v3378, %v3640
    %v3642 = vrot.slane %v2116, %v3641
    %v3643 = vsel %vm3383, %v3642, %v3638
    %v3644 = vlaneseq
    %v3645 = vshrl.u32 %v3644, 7
    %v3646 = vsub.s32 %v3385, %v3645
    %v3647 = vrot.slane %v2117, %v3646
    %v3648 = vsel %vm3390, %v3647, %v3643
    %v3649 = vlaneseq
    %v3650 = vshrl.u32 %v3649, 7
    %v3651 = vsub.s32 %v3392, %v3650
    %v3652 = vrot.slane %v2118, %v3651
    %v3653 = vsel %vm3397, %v3652, %v3648
    %v3654 = vlaneseq
    %v3655 = vshrl.u32 %v3654, 7
    %v3656 = vsub.s32 %v3399, %v3655
    %v3657 = vrot.slane %v2119, %v3656
    %v3658 = vsel %vm3404, %v3657, %v3653
    %v3659 = vlaneseq
    %v3660 = vshrl.u32 %v3659, 7
    %v3661 = vsub.s32 %v3406, %v3660
    %v3662 = vrot.slane %v2120, %v3661
    %v3663 = vsel %vm3411, %v3662, %v3658
    %v3664 = vlaneseq
    %v3665 = vshrl.u32 %v3664, 7
    %v3666 = vsub.s32 %v3413, %v3665
    %v3667 = vrot.slane %v2121, %v3666
    %v3668 = vsel %vm3418, %v3667, %v3663
    %v3669 = vlaneseq
    %v3670 = vshrl.u32 %v3669, 7
    %v3671 = vsub.s32 %v3420, %v3670
    %v3672 = vrot.slane %v2122, %v3671
    %v3673 = vsel %vm3425, %v3672, %v3668
    %v3674 = vlaneseq
    %v3675 = vshrl.u32 %v3674, 7
    %v3676 = vsub.s32 %v3427, %v3675
    %v3677 = vrot.slane %v2123, %v3676
    %v3678 = vsel %vm3432, %v3677, %v3673
    %v3679 = vlaneseq
    %v3680 = vshrl.u32 %v3679, 7
    %v3681 = vsub.s32 %v3434, %v3680
    %v3682 = vrot.slane %v2124, %v3681
    %v3683 = vsel %vm3439, %v3682, %v3678
    %v3684 = vlaneseq
    %v3685 = vshrl.u32 %v3684, 7
    %v3686 = vsub.s32 %v3441, %v3685
    %v3687 = vrot.slane %v2125, %v3686
    %v3688 = vsel %vm3446, %v3687, %v3683
    %v3689 = vlaneseq
    %v3690 = vshrl.u32 %v3689, 7
    %v3691 = vsub.s32 %v3448, %v3690
    %v3692 = vrot.slane %v2126, %v3691
    %v3693 = vsel %vm3453, %v3692, %v3688
    %v3694 = vlaneseq
    %v3695 = vshrl.u32 %v3694, 7
    %v3696 = vsub.s32 %v3455, %v3695
    %v3697 = vrot.slane %v2127, %v3696
    %v3698 = vsel %vm3460, %v3697, %v3693
    %v3699 = vlaneseq
    %v3700 = vshrl.u32 %v3699, 7
    %v3701 = vsub.s32 %v3352, %v3700
    %v3702 = vrot.slane %v2128, %v3701
    %v3703 = vlaneseq
    %v3704 = vshrl.u32 %v3703, 7
    %v3705 = vsub.s32 %v3357, %v3704
    %v3706 = vrot.slane %v2129, %v3705
    %v3707 = vsel %vm3362, %v3706, %v3702
    %v3708 = vlaneseq
    %v3709 = vshrl.u32 %v3708, 7
    %v3710 = vsub.s32 %v3364, %v3709
    %v3711 = vrot.slane %v2130, %v3710
    %v3712 = vsel %vm3369, %v3711, %v3707
    %v3713 = vlaneseq
    %v3714 = vshrl.u32 %v3713, 7
    %v3715 = vsub.s32 %v3371, %v3714
    %v3716 = vrot.slane %v2131, %v3715
    %v3717 = vsel %vm3376, %v3716, %v3712
    %v3718 = vlaneseq
    %v3719 = vshrl.u32 %v3718, 7
    %v3720 = vsub.s32 %v3378, %v3719
    %v3721 = vrot.slane %v2132, %v3720
    %v3722 = vsel %vm3383, %v3721, %v3717
    %v3723 = vlaneseq
    %v3724 = vshrl.u32 %v3723, 7
    %v3725 = vsub.s32 %v3385, %v3724
    %v3726 = vrot.slane %v2133, %v3725
    %v3727 = vsel %vm3390, %v3726, %v3722
    %v3728 = vlaneseq
    %v3729 = vshrl.u32 %v3728, 7
    %v3730 = vsub.s32 %v3392, %v3729
    %v3731 = vrot.slane %v2134, %v3730
    %v3732 = vsel %vm3397, %v3731, %v3727
    %v3733 = vlaneseq
    %v3734 = vshrl.u32 %v3733, 7
    %v3735 = vsub.s32 %v3399, %v3734
    %v3736 = vrot.slane %v2135, %v3735
    %v3737 = vsel %vm3404, %v3736, %v3732
    %v3738 = vlaneseq
    %v3739 = vshrl.u32 %v3738, 7
    %v3740 = vsub.s32 %v3406, %v3739
    %v3741 = vrot.slane %v2136, %v3740
    %v3742 = vsel %vm3411, %v3741, %v3737
    %v3743 = vlaneseq
    %v3744 = vshrl.u32 %v3743, 7
    %v3745 = vsub.s32 %v3413, %v3744
    %v3746 = vrot.slane %v2137, %v3745
    %v3747 = vsel %vm3418, %v3746, %v3742
    %v3748 = vlaneseq
    %v3749 = vshrl.u32 %v3748, 7
    %v3750 = vsub.s32 %v3420, %v3749
    %v3751 = vrot.slane %v2138, %v3750
    %v3752 = vsel %vm3425, %v3751, %v3747
    %v3753 = vlaneseq
    %v3754 = vshrl.u32 %v3753, 7
    %v3755 = vsub.s32 %v3427, %v3754
    %v3756 = vrot.slane %v2139, %v3755
    %v3757 = vsel %vm3432, %v3756, %v3752
    %v3758 = vlaneseq
    %v3759 = vshrl.u32 %v3758, 7
    %v3760 = vsub.s32 %v3434, %v3759
    %v3761 = vrot.slane %v2140, %v3760
    %v3762 = vsel %vm3439, %v3761, %v3757
    %v3763 = vlaneseq
    %v3764 = vshrl.u32 %v3763, 7
    %v3765 = vsub.s32 %v3441, %v3764
    %v3766 = vrot.slane %v2141, %v3765
    %v3767 = vsel %vm3446, %v3766, %v3762
    %v3768 = vlaneseq
    %v3769 = vshrl.u32 %v3768, 7
    %v3770 = vsub.s32 %v3448, %v3769
    %v3771 = vrot.slane %v2142, %v3770
    %v3772 = vsel %vm3453, %v3771, %v3767
    %v3773 = vlaneseq
    %v3774 = vshrl.u32 %v3773, 7
    %v3775 = vsub.s32 %v3455, %v3774
    %v3776 = vrot.slane %v2143, %v3775
    %v3777 = vsel %vm3460, %v3776, %v3772
    %v3778 = vlaneseq
    %v3779 = vshrl.u32 %v3778, 7
    %v3780 = vsub.s32 %v3352, %v3779
    %v3781 = vrot.slane %v2144, %v3780
    %v3782 = vlaneseq
    %v3783 = vshrl.u32 %v3782, 7
    %v3784 = vsub.s32 %v3357, %v3783
    %v3785 = vrot.slane %v2145, %v3784
    %v3786 = vsel %vm3362, %v3785, %v3781
    %v3787 = vlaneseq
    %v3788 = vshrl.u32 %v3787, 7
    %v3789 = vsub.s32 %v3364, %v3788
    %v3790 = vrot.slane %v2146, %v3789
    %v3791 = vsel %vm3369, %v3790, %v3786
    %v3792 = vlaneseq
    %v3793 = vshrl.u32 %v3792, 7
    %v3794 = vsub.s32 %v3371, %v3793
    %v3795 = vrot.slane %v2147, %v3794
    %v3796 = vsel %vm3376, %v3795, %v3791
    %v3797 = vlaneseq
    %v3798 = vshrl.u32 %v3797, 7
    %v3799 = vsub.s32 %v3378, %v3798
    %v3800 = vrot.slane %v2148, %v3799
    %v3801 = vsel %vm3383, %v3800, %v3796
    %v3802 = vlaneseq
    %v3803 = vshrl.u32 %v3802, 7
    %v3804 = vsub.s32 %v3385, %v3803
    %v3805 = vrot.slane %v2149, %v3804
    %v3806 = vsel %vm3390, %v3805, %v3801
    %v3807 = vlaneseq
    %v3808 = vshrl.u32 %v3807, 7
    %v3809 = vsub.s32 %v3392, %v3808
    %v3810 = vrot.slane %v2150, %v3809
    %v3811 = vsel %vm3397, %v3810, %v3806
    %v3812 = vlaneseq
    %v3813 = vshrl.u32 %v3812, 7
    %v3814 = vsub.s32 %v3399, %v3813
    %v3815 = vrot.slane %v2151, %v3814
    %v3816 = vsel %vm3404, %v3815, %v3811
    %v3817 = vlaneseq
    %v3818 = vshrl.u32 %v3817, 7
    %v3819 = vsub.s32 %v3406, %v3818
    %v3820 = vrot.slane %v2152, %v3819
    %v3821 = vsel %vm3411, %v3820, %v3816
    %v3822 = vlaneseq
    %v3823 = vshrl.u32 %v3822, 7
    %v3824 = vsub.s32 %v3413, %v3823
    %v3825 = vrot.slane %v2153, %v3824
    %v3826 = vsel %vm3418, %v3825, %v3821
    %v3827 = vlaneseq
    %v3828 = vshrl.u32 %v3827, 7
    %v3829 = vsub.s32 %v3420, %v3828
    %v3830 = vrot.slane %v2154, %v3829
    %v3831 = vsel %vm3425, %v3830, %v3826
    %v3832 = vlaneseq
    %v3833 = vshrl.u32 %v3832, 7
    %v3834 = vsub.s32 %v3427, %v3833
    %v3835 = vrot.slane %v2155, %v3834
    %v3836 = vsel %vm3432, %v3835, %v3831
    %v3837 = vlaneseq
    %v3838 = vshrl.u32 %v3837, 7
    %v3839 = vsub.s32 %v3434, %v3838
    %v3840 = vrot.slane %v2156, %v3839
    %v3841 = vsel %vm3439, %v3840, %v3836
    %v3842 = vlaneseq
    %v3843 = vshrl.u32 %v3842, 7
    %v3844 = vsub.s32 %v3441, %v3843
    %v3845 = vrot.slane %v2157, %v3844
    %v3846 = vsel %vm3446, %v3845, %v3841
    %v3847 = vlaneseq
    %v3848 = vshrl.u32 %v3847, 7
    %v3849 = vsub.s32 %v3448, %v3848
    %v3850 = vrot.slane %v2158, %v3849
    %v3851 = vsel %vm3453, %v3850, %v3846
    %v3852 = vlaneseq
    %v3853 = vshrl.u32 %v3852, 7
    %v3854 = vsub.s32 %v3455, %v3853
    %v3855 = vrot.slane %v2159, %v3854
    %v3856 = vsel %vm3460, %v3855, %v3851
    %v3857 = vlaneseq
    %v3858 = vshrl.u32 %v3857, 7
    %v3859 = vsub.s32 %v3352, %v3858
    %v3860 = vrot.slane %v2160, %v3859
    %v3861 = vlaneseq
    %v3862 = vshrl.u32 %v3861, 7
    %v3863 = vsub.s32 %v3357, %v3862
    %v3864 = vrot.slane %v2161, %v3863
    %v3865 = vsel %vm3362, %v3864, %v3860
    %v3866 = vlaneseq
    %v3867 = vshrl.u32 %v3866, 7
    %v3868 = vsub.s32 %v3364, %v3867
    %v3869 = vrot.slane %v2162, %v3868
    %v3870 = vsel %vm3369, %v3869, %v3865
    %v3871 = vlaneseq
    %v3872 = vshrl.u32 %v3871, 7
    %v3873 = vsub.s32 %v3371, %v3872
    %v3874 = vrot.slane %v2163, %v3873
    %v3875 = vsel %vm3376, %v3874, %v3870
    %v3876 = vlaneseq
    %v3877 = vshrl.u32 %v3876, 7
    %v3878 = vsub.s32 %v3378, %v3877
    %v3879 = vrot.slane %v2164, %v3878
    %v3880 = vsel %vm3383, %v3879, %v3875
    %v3881 = vlaneseq
    %v3882 = vshrl.u32 %v3881, 7
    %v3883 = vsub.s32 %v3385, %v3882
    %v3884 = vrot.slane %v2165, %v3883
    %v3885 = vsel %vm3390, %v3884, %v3880
    %v3886 = vlaneseq
    %v3887 = vshrl.u32 %v3886, 7
    %v3888 = vsub.s32 %v3392, %v3887
    %v3889 = vrot.slane %v2166, %v3888
    %v3890 = vsel %vm3397, %v3889, %v3885
    %v3891 = vlaneseq
    %v3892 = vshrl.u32 %v3891, 7
    %v3893 = vsub.s32 %v3399, %v3892
    %v3894 = vrot.slane %v2167, %v3893
    %v3895 = vsel %vm3404, %v3894, %v3890
    %v3896 = vlaneseq
    %v3897 = vshrl.u32 %v3896, 7
    %v3898 = vsub.s32 %v3406, %v3897
    %v3899 = vrot.slane %v2168, %v3898
    %v3900 = vsel %vm3411, %v3899, %v3895
    %v3901 = vlaneseq
    %v3902 = vshrl.u32 %v3901, 7
    %v3903 = vsub.s32 %v3413, %v3902
    %v3904 = vrot.slane %v2169, %v3903
    %v3905 = vsel %vm3418, %v3904, %v3900
    %v3906 = vlaneseq
    %v3907 = vshrl.u32 %v3906, 7
    %v3908 = vsub.s32 %v3420, %v3907
    %v3909 = vrot.slane %v2170, %v3908
    %v3910 = vsel %vm3425, %v3909, %v3905
    %v3911 = vlaneseq
    %v3912 = vshrl.u32 %v3911, 7
    %v3913 = vsub.s32 %v3427, %v3912
    %v3914 = vrot.slane %v2171, %v3913
    %v3915 = vsel %vm3432, %v3914, %v3910
    %v3916 = vlaneseq
    %v3917 = vshrl.u32 %v3916, 7
    %v3918 = vsub.s32 %v3434, %v3917
    %v3919 = vrot.slane %v2172, %v3918
    %v3920 = vsel %vm3439, %v3919, %v3915
    %v3921 = vlaneseq
    %v3922 = vshrl.u32 %v3921, 7
    %v3923 = vsub.s32 %v3441, %v3922
    %v3924 = vrot.slane %v2173, %v3923
    %v3925 = vsel %vm3446, %v3924, %v3920
    %v3926 = vlaneseq
    %v3927 = vshrl.u32 %v3926, 7
    %v3928 = vsub.s32 %v3448, %v3927
    %v3929 = vrot.slane %v2174, %v3928
    %v3930 = vsel %vm3453, %v3929, %v3925
    %v3931 = vlaneseq
    %v3932 = vshrl.u32 %v3931, 7
    %v3933 = vsub.s32 %v3455, %v3932
    %v3934 = vrot.slane %v2175, %v3933
    %v3935 = vsel %vm3460, %v3934, %v3930
    %v3936 = vlaneseq
    %v3937 = vshrl.u32 %v3936, 7
    %v3938 = vsub.s32 %v3352, %v3937
    %v3939 = vrot.slane %v2176, %v3938
    %v3940 = vlaneseq
    %v3941 = vshrl.u32 %v3940, 7
    %v3942 = vsub.s32 %v3357, %v3941
    %v3943 = vrot.slane %v2177, %v3942
    %v3944 = vsel %vm3362, %v3943, %v3939
    %v3945 = vlaneseq
    %v3946 = vshrl.u32 %v3945, 7
    %v3947 = vsub.s32 %v3364, %v3946
    %v3948 = vrot.slane %v2178, %v3947
    %v3949 = vsel %vm3369, %v3948, %v3944
    %v3950 = vlaneseq
    %v3951 = vshrl.u32 %v3950, 7
    %v3952 = vsub.s32 %v3371, %v3951
    %v3953 = vrot.slane %v2179, %v3952
    %v3954 = vsel %vm3376, %v3953, %v3949
    %v3955 = vlaneseq
    %v3956 = vshrl.u32 %v3955, 7
    %v3957 = vsub.s32 %v3378, %v3956
    %v3958 = vrot.slane %v2180, %v3957
    %v3959 = vsel %vm3383, %v3958, %v3954
    %v3960 = vlaneseq
    %v3961 = vshrl.u32 %v3960, 7
    %v3962 = vsub.s32 %v3385, %v3961
    %v3963 = vrot.slane %v2181, %v3962
    %v3964 = vsel %vm3390, %v3963, %v3959
    %v3965 = vlaneseq
    %v3966 = vshrl.u32 %v3965, 7
    %v3967 = vsub.s32 %v3392, %v3966
    %v3968 = vrot.slane %v2182, %v3967
    %v3969 = vsel %vm3397, %v3968, %v3964
    %v3970 = vlaneseq
    %v3971 = vshrl.u32 %v3970, 7
    %v3972 = vsub.s32 %v3399, %v3971
    %v3973 = vrot.slane %v2183, %v3972
    %v3974 = vsel %vm3404, %v3973, %v3969
    %v3975 = vlaneseq
    %v3976 = vshrl.u32 %v3975, 7
    %v3977 = vsub.s32 %v3406, %v3976
    %v3978 = vrot.slane %v2184, %v3977
    %v3979 = vsel %vm3411, %v3978, %v3974
    %v3980 = vlaneseq
    %v3981 = vshrl.u32 %v3980, 7
    %v3982 = vsub.s32 %v3413, %v3981
    %v3983 = vrot.slane %v2185, %v3982
    %v3984 = vsel %vm3418, %v3983, %v3979
    %v3985 = vlaneseq
    %v3986 = vshrl.u32 %v3985, 7
    %v3987 = vsub.s32 %v3420, %v3986
    %v3988 = vrot.slane %v2186, %v3987
    %v3989 = vsel %vm3425, %v3988, %v3984
    %v3990 = vlaneseq
    %v3991 = vshrl.u32 %v3990, 7
    %v3992 = vsub.s32 %v3427, %v3991
    %v3993 = vrot.slane %v2187, %v3992
    %v3994 = vsel %vm3432, %v3993, %v3989
    %v3995 = vlaneseq
    %v3996 = vshrl.u32 %v3995, 7
    %v3997 = vsub.s32 %v3434, %v3996
    %v3998 = vrot.slane %v2188, %v3997
    %v3999 = vsel %vm3439, %v3998, %v3994
    %v4000 = vlaneseq
    %v4001 = vshrl.u32 %v4000, 7
    %v4002 = vsub.s32 %v3441, %v4001
    %v4003 = vrot.slane %v2189, %v4002
    %v4004 = vsel %vm3446, %v4003, %v3999
    %v4005 = vlaneseq
    %v4006 = vshrl.u32 %v4005, 7
    %v4007 = vsub.s32 %v3448, %v4006
    %v4008 = vrot.slane %v2190, %v4007
    %v4009 = vsel %vm3453, %v4008, %v4004
    %v4010 = vlaneseq
    %v4011 = vshrl.u32 %v4010, 7
    %v4012 = vsub.s32 %v3455, %v4011
    %v4013 = vrot.slane %v2191, %v4012
    %v4014 = vsel %vm3460, %v4013, %v4009
    %v4015 = vlaneseq
    %v4016 = vshrl.u32 %v4015, 7
    %v4017 = vsub.s32 %v3352, %v4016
    %v4018 = vrot.slane %v2192, %v4017
    %v4019 = vlaneseq
    %v4020 = vshrl.u32 %v4019, 7
    %v4021 = vsub.s32 %v3357, %v4020
    %v4022 = vrot.slane %v2193, %v4021
    %v4023 = vsel %vm3362, %v4022, %v4018
    %v4024 = vlaneseq
    %v4025 = vshrl.u32 %v4024, 7
    %v4026 = vsub.s32 %v3364, %v4025
    %v4027 = vrot.slane %v2194, %v4026
    %v4028 = vsel %vm3369, %v4027, %v4023
    %v4029 = vlaneseq
    %v4030 = vshrl.u32 %v4029, 7
    %v4031 = vsub.s32 %v3371, %v4030
    %v4032 = vrot.slane %v2195, %v4031
    %v4033 = vsel %vm3376, %v4032, %v4028
    %v4034 = vlaneseq
    %v4035 = vshrl.u32 %v4034, 7
    %v4036 = vsub.s32 %v3378, %v4035
    %v4037 = vrot.slane %v2196, %v4036
    %v4038 = vsel %vm3383, %v4037, %v4033
    %v4039 = vlaneseq
    %v4040 = vshrl.u32 %v4039, 7
    %v4041 = vsub.s32 %v3385, %v4040
    %v4042 = vrot.slane %v2197, %v4041
    %v4043 = vsel %vm3390, %v4042, %v4038
    %v4044 = vlaneseq
    %v4045 = vshrl.u32 %v4044, 7
    %v4046 = vsub.s32 %v3392, %v4045
    %v4047 = vrot.slane %v2198, %v4046
    %v4048 = vsel %vm3397, %v4047, %v4043
    %v4049 = vlaneseq
    %v4050 = vshrl.u32 %v4049, 7
    %v4051 = vsub.s32 %v3399, %v4050
    %v4052 = vrot.slane %v2199, %v4051
    %v4053 = vsel %vm3404, %v4052, %v4048
    %v4054 = vlaneseq
    %v4055 = vshrl.u32 %v4054, 7
    %v4056 = vsub.s32 %v3406, %v4055
    %v4057 = vrot.slane %v2200, %v4056
    %v4058 = vsel %vm3411, %v4057, %v4053
    %v4059 = vlaneseq
    %v4060 = vshrl.u32 %v4059, 7
    %v4061 = vsub.s32 %v3413, %v4060
    %v4062 = vrot.slane %v2201, %v4061
    %v4063 = vsel %vm3418, %v4062, %v4058
    %v4064 = vlaneseq
    %v4065 = vshrl.u32 %v4064, 7
    %v4066 = vsub.s32 %v3420, %v4065
    %v4067 = vrot.slane %v2202, %v4066
    %v4068 = vsel %vm3425, %v4067, %v4063
    %v4069 = vlaneseq
    %v4070 = vshrl.u32 %v4069, 7
    %v4071 = vsub.s32 %v3427, %v4070
    %v4072 = vrot.slane %v2203, %v4071
    %v4073 = vsel %vm3432, %v4072, %v4068
    %v4074 = vlaneseq
    %v4075 = vshrl.u32 %v4074, 7
    %v4076 = vsub.s32 %v3434, %v4075
    %v4077 = vrot.slane %v2204, %v4076
    %v4078 = vsel %vm3439, %v4077, %v4073
    %v4079 = vlaneseq
    %v4080 = vshrl.u32 %v4079, 7
    %v4081 = vsub.s32 %v3441, %v4080
    %v4082 = vrot.slane %v2205, %v4081
    %v4083 = vsel %vm3446, %v4082, %v4078
    %v4084 = vlaneseq
    %v4085 = vshrl.u32 %v4084, 7
    %v4086 = vsub.s32 %v3448, %v4085
    %v4087 = vrot.slane %v2206, %v4086
    %v4088 = vsel %vm3453, %v4087, %v4083
    %v4089 = vlaneseq
    %v4090 = vshrl.u32 %v4089, 7
    %v4091 = vsub.s32 %v3455, %v4090
    %v4092 = vrot.slane %v2207, %v4091
    %v4093 = vsel %vm3460, %v4092, %v4088
    %v4094 = vlaneseq
    %v4095 = vshrl.u32 %v4094, 7
    %v4096 = vsub.s32 %v3352, %v4095
    %v4097 = vrot.slane %v2208, %v4096
    %v4098 = vlaneseq
    %v4099 = vshrl.u32 %v4098, 7
    %v4100 = vsub.s32 %v3357, %v4099
    %v4101 = vrot.slane %v2209, %v4100
    %v4102 = vsel %vm3362, %v4101, %v4097
    %v4103 = vlaneseq
    %v4104 = vshrl.u32 %v4103, 7
    %v4105 = vsub.s32 %v3364, %v4104
    %v4106 = vrot.slane %v2210, %v4105
    %v4107 = vsel %vm3369, %v4106, %v4102
    %v4108 = vlaneseq
    %v4109 = vshrl.u32 %v4108, 7
    %v4110 = vsub.s32 %v3371, %v4109
    %v4111 = vrot.slane %v2211, %v4110
    %v4112 = vsel %vm3376, %v4111, %v4107
    %v4113 = vlaneseq
    %v4114 = vshrl.u32 %v4113, 7
    %v4115 = vsub.s32 %v3378, %v4114
    %v4116 = vrot.slane %v2212, %v4115
    %v4117 = vsel %vm3383, %v4116, %v4112
    %v4118 = vlaneseq
    %v4119 = vshrl.u32 %v4118, 7
    %v4120 = vsub.s32 %v3385, %v4119
    %v4121 = vrot.slane %v2213, %v4120
    %v4122 = vsel %vm3390, %v4121, %v4117
    %v4123 = vlaneseq
    %v4124 = vshrl.u32 %v4123, 7
    %v4125 = vsub.s32 %v3392, %v4124
    %v4126 = vrot.slane %v2214, %v4125
    %v4127 = vsel %vm3397, %v4126, %v4122
    %v4128 = vlaneseq
    %v4129 = vshrl.u32 %v4128, 7
    %v4130 = vsub.s32 %v3399, %v4129
    %v4131 = vrot.slane %v2215, %v4130
    %v4132 = vsel %vm3404, %v4131, %v4127
    %v4133 = vlaneseq
    %v4134 = vshrl.u32 %v4133, 7
    %v4135 = vsub.s32 %v3406, %v4134
    %v4136 = vrot.slane %v2216, %v4135
    %v4137 = vsel %vm3411, %v4136, %v4132
    %v4138 = vlaneseq
    %v4139 = vshrl.u32 %v4138, 7
    %v4140 = vsub.s32 %v3413, %v4139
    %v4141 = vrot.slane %v2217, %v4140
    %v4142 = vsel %vm3418, %v4141, %v4137
    %v4143 = vlaneseq
    %v4144 = vshrl.u32 %v4143, 7
    %v4145 = vsub.s32 %v3420, %v4144
    %v4146 = vrot.slane %v2218, %v4145
    %v4147 = vsel %vm3425, %v4146, %v4142
    %v4148 = vlaneseq
    %v4149 = vshrl.u32 %v4148, 7
    %v4150 = vsub.s32 %v3427, %v4149
    %v4151 = vrot.slane %v2219, %v4150
    %v4152 = vsel %vm3432, %v4151, %v4147
    %v4153 = vlaneseq
    %v4154 = vshrl.u32 %v4153, 7
    %v4155 = vsub.s32 %v3434, %v4154
    %v4156 = vrot.slane %v2220, %v4155
    %v4157 = vsel %vm3439, %v4156, %v4152
    %v4158 = vlaneseq
    %v4159 = vshrl.u32 %v4158, 7
    %v4160 = vsub.s32 %v3441, %v4159
    %v4161 = vrot.slane %v2221, %v4160
    %v4162 = vsel %vm3446, %v4161, %v4157
    %v4163 = vlaneseq
    %v4164 = vshrl.u32 %v4163, 7
    %v4165 = vsub.s32 %v3448, %v4164
    %v4166 = vrot.slane %v2222, %v4165
    %v4167 = vsel %vm3453, %v4166, %v4162
    %v4168 = vlaneseq
    %v4169 = vshrl.u32 %v4168, 7
    %v4170 = vsub.s32 %v3455, %v4169
    %v4171 = vrot.slane %v2223, %v4170
    %v4172 = vsel %vm3460, %v4171, %v4167
    %v4173 = vlaneseq
    %v4174 = vshrl.u32 %v4173, 7
    %v4175 = vsub.s32 %v3352, %v4174
    %v4176 = vrot.slane %v2224, %v4175
    %v4177 = vlaneseq
    %v4178 = vshrl.u32 %v4177, 7
    %v4179 = vsub.s32 %v3357, %v4178
    %v4180 = vrot.slane %v2225, %v4179
    %v4181 = vsel %vm3362, %v4180, %v4176
    %v4182 = vlaneseq
    %v4183 = vshrl.u32 %v4182, 7
    %v4184 = vsub.s32 %v3364, %v4183
    %v4185 = vrot.slane %v2226, %v4184
    %v4186 = vsel %vm3369, %v4185, %v4181
    %v4187 = vlaneseq
    %v4188 = vshrl.u32 %v4187, 7
    %v4189 = vsub.s32 %v3371, %v4188
    %v4190 = vrot.slane %v2227, %v4189
    %v4191 = vsel %vm3376, %v4190, %v4186
    %v4192 = vlaneseq
    %v4193 = vshrl.u32 %v4192, 7
    %v4194 = vsub.s32 %v3378, %v4193
    %v4195 = vrot.slane %v2228, %v4194
    %v4196 = vsel %vm3383, %v4195, %v4191
    %v4197 = vlaneseq
    %v4198 = vshrl.u32 %v4197, 7
    %v4199 = vsub.s32 %v3385, %v4198
    %v4200 = vrot.slane %v2229, %v4199
    %v4201 = vsel %vm3390, %v4200, %v4196
    %v4202 = vlaneseq
    %v4203 = vshrl.u32 %v4202, 7
    %v4204 = vsub.s32 %v3392, %v4203
    %v4205 = vrot.slane %v2230, %v4204
    %v4206 = vsel %vm3397, %v4205, %v4201
    %v4207 = vlaneseq
    %v4208 = vshrl.u32 %v4207, 7
    %v4209 = vsub.s32 %v3399, %v4208
    %v4210 = vrot.slane %v2231, %v4209
    %v4211 = vsel %vm3404, %v4210, %v4206
    %v4212 = vlaneseq
    %v4213 = vshrl.u32 %v4212, 7
    %v4214 = vsub.s32 %v3406, %v4213
    %v4215 = vrot.slane %v2232, %v4214
    %v4216 = vsel %vm3411, %v4215, %v4211
    %v4217 = vlaneseq
    %v4218 = vshrl.u32 %v4217, 7
    %v4219 = vsub.s32 %v3413, %v4218
    %v4220 = vrot.slane %v2233, %v4219
    %v4221 = vsel %vm3418, %v4220, %v4216
    %v4222 = vlaneseq
    %v4223 = vshrl.u32 %v4222, 7
    %v4224 = vsub.s32 %v3420, %v4223
    %v4225 = vrot.slane %v2234, %v4224
    %v4226 = vsel %vm3425, %v4225, %v4221
    %v4227 = vlaneseq
    %v4228 = vshrl.u32 %v4227, 7
    %v4229 = vsub.s32 %v3427, %v4228
    %v4230 = vrot.slane %v2235, %v4229
    %v4231 = vsel %vm3432, %v4230, %v4226
    %v4232 = vlaneseq
    %v4233 = vshrl.u32 %v4232, 7
    %v4234 = vsub.s32 %v3434, %v4233
    %v4235 = vrot.slane %v2236, %v4234
    %v4236 = vsel %vm3439, %v4235, %v4231
    %v4237 = vlaneseq
    %v4238 = vshrl.u32 %v4237, 7
    %v4239 = vsub.s32 %v3441, %v4238
    %v4240 = vrot.slane %v2237, %v4239
    %v4241 = vsel %vm3446, %v4240, %v4236
    %v4242 = vlaneseq
    %v4243 = vshrl.u32 %v4242, 7
    %v4244 = vsub.s32 %v3448, %v4243
    %v4245 = vrot.slane %v2238, %v4244
    %v4246 = vsel %vm3453, %v4245, %v4241
    %v4247 = vlaneseq
    %v4248 = vshrl.u32 %v4247, 7
    %v4249 = vsub.s32 %v3455, %v4248
    %v4250 = vrot.slane %v2239, %v4249
    %v4251 = vsel %vm3460, %v4250, %v4246
    %v4252 = vlaneseq
    %v4253 = vshrl.u32 %v4252, 7
    %v4254 = vsub.s32 %v3352, %v4253
    %v4255 = vrot.slane %v2240, %v4254
    %v4256 = vlaneseq
    %v4257 = vshrl.u32 %v4256, 7
    %v4258 = vsub.s32 %v3357, %v4257
    %v4259 = vrot.slane %v2241, %v4258
    %v4260 = vsel %vm3362, %v4259, %v4255
    %v4261 = vlaneseq
    %v4262 = vshrl.u32 %v4261, 7
    %v4263 = vsub.s32 %v3364, %v4262
    %v4264 = vrot.slane %v2242, %v4263
    %v4265 = vsel %vm3369, %v4264, %v4260
    %v4266 = vlaneseq
    %v4267 = vshrl.u32 %v4266, 7
    %v4268 = vsub.s32 %v3371, %v4267
    %v4269 = vrot.slane %v2243, %v4268
    %v4270 = vsel %vm3376, %v4269, %v4265
    %v4271 = vlaneseq
    %v4272 = vshrl.u32 %v4271, 7
    %v4273 = vsub.s32 %v3378, %v4272
    %v4274 = vrot.slane %v2244, %v4273
    %v4275 = vsel %vm3383, %v4274, %v4270
    %v4276 = vlaneseq
    %v4277 = vshrl.u32 %v4276, 7
    %v4278 = vsub.s32 %v3385, %v4277
    %v4279 = vrot.slane %v2245, %v4278
    %v4280 = vsel %vm3390, %v4279, %v4275
    %v4281 = vlaneseq
    %v4282 = vshrl.u32 %v4281, 7
    %v4283 = vsub.s32 %v3392, %v4282
    %v4284 = vrot.slane %v2246, %v4283
    %v4285 = vsel %vm3397, %v4284, %v4280
    %v4286 = vlaneseq
    %v4287 = vshrl.u32 %v4286, 7
    %v4288 = vsub.s32 %v3399, %v4287
    %v4289 = vrot.slane %v2247, %v4288
    %v4290 = vsel %vm3404, %v4289, %v4285
    %v4291 = vlaneseq
    %v4292 = vshrl.u32 %v4291, 7
    %v4293 = vsub.s32 %v3406, %v4292
    %v4294 = vrot.slane %v2248, %v4293
    %v4295 = vsel %vm3411, %v4294, %v4290
    %v4296 = vlaneseq
    %v4297 = vshrl.u32 %v4296, 7
    %v4298 = vsub.s32 %v3413, %v4297
    %v4299 = vrot.slane %v2249, %v4298
    %v4300 = vsel %vm3418, %v4299, %v4295
    %v4301 = vlaneseq
    %v4302 = vshrl.u32 %v4301, 7
    %v4303 = vsub.s32 %v3420, %v4302
    %v4304 = vrot.slane %v2250, %v4303
    %v4305 = vsel %vm3425, %v4304, %v4300
    %v4306 = vlaneseq
    %v4307 = vshrl.u32 %v4306, 7
    %v4308 = vsub.s32 %v3427, %v4307
    %v4309 = vrot.slane %v2251, %v4308
    %v4310 = vsel %vm3432, %v4309, %v4305
    %v4311 = vlaneseq
    %v4312 = vshrl.u32 %v4311, 7
    %v4313 = vsub.s32 %v3434, %v4312
    %v4314 = vrot.slane %v2252, %v4313
    %v4315 = vsel %vm3439, %v4314, %v4310
    %v4316 = vlaneseq
    %v4317 = vshrl.u32 %v4316, 7
    %v4318 = vsub.s32 %v3441, %v4317
    %v4319 = vrot.slane %v2253, %v4318
    %v4320 = vsel %vm3446, %v4319, %v4315
    %v4321 = vlaneseq
    %v4322 = vshrl.u32 %v4321, 7
    %v4323 = vsub.s32 %v3448, %v4322
    %v4324 = vrot.slane %v2254, %v4323
    %v4325 = vsel %vm3453, %v4324, %v4320
    %v4326 = vlaneseq
    %v4327 = vshrl.u32 %v4326, 7
    %v4328 = vsub.s32 %v3455, %v4327
    %v4329 = vrot.slane %v2255, %v4328
    %v4330 = vsel %vm3460, %v4329, %v4325
    %v4331 = vlaneseq
    %v4332 = vshrl.u32 %v4331, 7
    %v4333 = vsub.s32 %v3352, %v4332
    %v4334 = vrot.slane %v2256, %v4333
    %v4335 = vlaneseq
    %v4336 = vshrl.u32 %v4335, 7
    %v4337 = vsub.s32 %v3357, %v4336
    %v4338 = vrot.slane %v2257, %v4337
    %v4339 = vsel %vm3362, %v4338, %v4334
    %v4340 = vlaneseq
    %v4341 = vshrl.u32 %v4340, 7
    %v4342 = vsub.s32 %v3364, %v4341
    %v4343 = vrot.slane %v2258, %v4342
    %v4344 = vsel %vm3369, %v4343, %v4339
    %v4345 = vlaneseq
    %v4346 = vshrl.u32 %v4345, 7
    %v4347 = vsub.s32 %v3371, %v4346
    %v4348 = vrot.slane %v2259, %v4347
    %v4349 = vsel %vm3376, %v4348, %v4344
    %v4350 = vlaneseq
    %v4351 = vshrl.u32 %v4350, 7
    %v4352 = vsub.s32 %v3378, %v4351
    %v4353 = vrot.slane %v2260, %v4352
    %v4354 = vsel %vm3383, %v4353, %v4349
    %v4355 = vlaneseq
    %v4356 = vshrl.u32 %v4355, 7
    %v4357 = vsub.s32 %v3385, %v4356
    %v4358 = vrot.slane %v2261, %v4357
    %v4359 = vsel %vm3390, %v4358, %v4354
    %v4360 = vlaneseq
    %v4361 = vshrl.u32 %v4360, 7
    %v4362 = vsub.s32 %v3392, %v4361
    %v4363 = vrot.slane %v2262, %v4362
    %v4364 = vsel %vm3397, %v4363, %v4359
    %v4365 = vlaneseq
    %v4366 = vshrl.u32 %v4365, 7
    %v4367 = vsub.s32 %v3399, %v4366
    %v4368 = vrot.slane %v2263, %v4367
    %v4369 = vsel %vm3404, %v4368, %v4364
    %v4370 = vlaneseq
    %v4371 = vshrl.u32 %v4370, 7
    %v4372 = vsub.s32 %v3406, %v4371
    %v4373 = vrot.slane %v2264, %v4372
    %v4374 = vsel %vm3411, %v4373, %v4369
    %v4375 = vlaneseq
    %v4376 = vshrl.u32 %v4375, 7
    %v4377 = vsub.s32 %v3413, %v4376
    %v4378 = vrot.slane %v2265, %v4377
    %v4379 = vsel %vm3418, %v4378, %v4374
    %v4380 = vlaneseq
    %v4381 = vshrl.u32 %v4380, 7
    %v4382 = vsub.s32 %v3420, %v4381
    %v4383 = vrot.slane %v2266, %v4382
    %v4384 = vsel %vm3425, %v4383, %v4379
    %v4385 = vlaneseq
    %v4386 = vshrl.u32 %v4385, 7
    %v4387 = vsub.s32 %v3427, %v4386
    %v4388 = vrot.slane %v2267, %v4387
    %v4389 = vsel %vm3432, %v4388, %v4384
    %v4390 = vlaneseq
    %v4391 = vshrl.u32 %v4390, 7
    %v4392 = vsub.s32 %v3434, %v4391
    %v4393 = vrot.slane %v2268, %v4392
    %v4394 = vsel %vm3439, %v4393, %v4389
    %v4395 = vlaneseq
    %v4396 = vshrl.u32 %v4395, 7
    %v4397 = vsub.s32 %v3441, %v4396
    %v4398 = vrot.slane %v2269, %v4397
    %v4399 = vsel %vm3446, %v4398, %v4394
    %v4400 = vlaneseq
    %v4401 = vshrl.u32 %v4400, 7
    %v4402 = vsub.s32 %v3448, %v4401
    %v4403 = vrot.slane %v2270, %v4402
    %v4404 = vsel %vm3453, %v4403, %v4399
    %v4405 = vlaneseq
    %v4406 = vshrl.u32 %v4405, 7
    %v4407 = vsub.s32 %v3455, %v4406
    %v4408 = vrot.slane %v2271, %v4407
    %v4409 = vsel %vm3460, %v4408, %v4404
    %v4410 = vlaneseq
    %v4411 = vshrl.u32 %v4410, 7
    %v4412 = vsub.s32 %v3352, %v4411
    %v4413 = vrot.slane %v2272, %v4412
    %v4414 = vlaneseq
    %v4415 = vshrl.u32 %v4414, 7
    %v4416 = vsub.s32 %v3357, %v4415
    %v4417 = vrot.slane %v2273, %v4416
    %v4418 = vsel %vm3362, %v4417, %v4413
    %v4419 = vlaneseq
    %v4420 = vshrl.u32 %v4419, 7
    %v4421 = vsub.s32 %v3364, %v4420
    %v4422 = vrot.slane %v2274, %v4421
    %v4423 = vsel %vm3369, %v4422, %v4418
    %v4424 = vlaneseq
    %v4425 = vshrl.u32 %v4424, 7
    %v4426 = vsub.s32 %v3371, %v4425
    %v4427 = vrot.slane %v2275, %v4426
    %v4428 = vsel %vm3376, %v4427, %v4423
    %v4429 = vlaneseq
    %v4430 = vshrl.u32 %v4429, 7
    %v4431 = vsub.s32 %v3378, %v4430
    %v4432 = vrot.slane %v2276, %v4431
    %v4433 = vsel %vm3383, %v4432, %v4428
    %v4434 = vlaneseq
    %v4435 = vshrl.u32 %v4434, 7
    %v4436 = vsub.s32 %v3385, %v4435
    %v4437 = vrot.slane %v2277, %v4436
    %v4438 = vsel %vm3390, %v4437, %v4433
    %v4439 = vlaneseq
    %v4440 = vshrl.u32 %v4439, 7
    %v4441 = vsub.s32 %v3392, %v4440
    %v4442 = vrot.slane %v2278, %v4441
    %v4443 = vsel %vm3397, %v4442, %v4438
    %v4444 = vlaneseq
    %v4445 = vshrl.u32 %v4444, 7
    %v4446 = vsub.s32 %v3399, %v4445
    %v4447 = vrot.slane %v2279, %v4446
    %v4448 = vsel %vm3404, %v4447, %v4443
    %v4449 = vlaneseq
    %v4450 = vshrl.u32 %v4449, 7
    %v4451 = vsub.s32 %v3406, %v4450
    %v4452 = vrot.slane %v2280, %v4451
    %v4453 = vsel %vm3411, %v4452, %v4448
    %v4454 = vlaneseq
    %v4455 = vshrl.u32 %v4454, 7
    %v4456 = vsub.s32 %v3413, %v4455
    %v4457 = vrot.slane %v2281, %v4456
    %v4458 = vsel %vm3418, %v4457, %v4453
    %v4459 = vlaneseq
    %v4460 = vshrl.u32 %v4459, 7
    %v4461 = vsub.s32 %v3420, %v4460
    %v4462 = vrot.slane %v2282, %v4461
    %v4463 = vsel %vm3425, %v4462, %v4458
    %v4464 = vlaneseq
    %v4465 = vshrl.u32 %v4464, 7
    %v4466 = vsub.s32 %v3427, %v4465
    %v4467 = vrot.slane %v2283, %v4466
    %v4468 = vsel %vm3432, %v4467, %v4463
    %v4469 = vlaneseq
    %v4470 = vshrl.u32 %v4469, 7
    %v4471 = vsub.s32 %v3434, %v4470
    %v4472 = vrot.slane %v2284, %v4471
    %v4473 = vsel %vm3439, %v4472, %v4468
    %v4474 = vlaneseq
    %v4475 = vshrl.u32 %v4474, 7
    %v4476 = vsub.s32 %v3441, %v4475
    %v4477 = vrot.slane %v2285, %v4476
    %v4478 = vsel %vm3446, %v4477, %v4473
    %v4479 = vlaneseq
    %v4480 = vshrl.u32 %v4479, 7
    %v4481 = vsub.s32 %v3448, %v4480
    %v4482 = vrot.slane %v2286, %v4481
    %v4483 = vsel %vm3453, %v4482, %v4478
    %v4484 = vlaneseq
    %v4485 = vshrl.u32 %v4484, 7
    %v4486 = vsub.s32 %v3455, %v4485
    %v4487 = vrot.slane %v2287, %v4486
    %v4488 = vsel %vm3460, %v4487, %v4483
    %v4489 = vlaneseq
    %v4490 = vshrl.u32 %v4489, 7
    %v4491 = vsub.s32 %v3352, %v4490
    %v4492 = vrot.slane %v2288, %v4491
    %v4493 = vlaneseq
    %v4494 = vshrl.u32 %v4493, 7
    %v4495 = vsub.s32 %v3357, %v4494
    %v4496 = vrot.slane %v2289, %v4495
    %v4497 = vsel %vm3362, %v4496, %v4492
    %v4498 = vlaneseq
    %v4499 = vshrl.u32 %v4498, 7
    %v4500 = vsub.s32 %v3364, %v4499
    %v4501 = vrot.slane %v2290, %v4500
    %v4502 = vsel %vm3369, %v4501, %v4497
    %v4503 = vlaneseq
    %v4504 = vshrl.u32 %v4503, 7
    %v4505 = vsub.s32 %v3371, %v4504
    %v4506 = vrot.slane %v2291, %v4505
    %v4507 = vsel %vm3376, %v4506, %v4502
    %v4508 = vlaneseq
    %v4509 = vshrl.u32 %v4508, 7
    %v4510 = vsub.s32 %v3378, %v4509
    %v4511 = vrot.slane %v2292, %v4510
    %v4512 = vsel %vm3383, %v4511, %v4507
    %v4513 = vlaneseq
    %v4514 = vshrl.u32 %v4513, 7
    %v4515 = vsub.s32 %v3385, %v4514
    %v4516 = vrot.slane %v2293, %v4515
    %v4517 = vsel %vm3390, %v4516, %v4512
    %v4518 = vlaneseq
    %v4519 = vshrl.u32 %v4518, 7
    %v4520 = vsub.s32 %v3392, %v4519
    %v4521 = vrot.slane %v2294, %v4520
    %v4522 = vsel %vm3397, %v4521, %v4517
    %v4523 = vlaneseq
    %v4524 = vshrl.u32 %v4523, 7
    %v4525 = vsub.s32 %v3399, %v4524
    %v4526 = vrot.slane %v2295, %v4525
    %v4527 = vsel %vm3404, %v4526, %v4522
    %v4528 = vlaneseq
    %v4529 = vshrl.u32 %v4528, 7
    %v4530 = vsub.s32 %v3406, %v4529
    %v4531 = vrot.slane %v2296, %v4530
    %v4532 = vsel %vm3411, %v4531, %v4527
    %v4533 = vlaneseq
    %v4534 = vshrl.u32 %v4533, 7
    %v4535 = vsub.s32 %v3413, %v4534
    %v4536 = vrot.slane %v2297, %v4535
    %v4537 = vsel %vm3418, %v4536, %v4532
    %v4538 = vlaneseq
    %v4539 = vshrl.u32 %v4538, 7
    %v4540 = vsub.s32 %v3420, %v4539
    %v4541 = vrot.slane %v2298, %v4540
    %v4542 = vsel %vm3425, %v4541, %v4537
    %v4543 = vlaneseq
    %v4544 = vshrl.u32 %v4543, 7
    %v4545 = vsub.s32 %v3427, %v4544
    %v4546 = vrot.slane %v2299, %v4545
    %v4547 = vsel %vm3432, %v4546, %v4542
    %v4548 = vlaneseq
    %v4549 = vshrl.u32 %v4548, 7
    %v4550 = vsub.s32 %v3434, %v4549
    %v4551 = vrot.slane %v2300, %v4550
    %v4552 = vsel %vm3439, %v4551, %v4547
    %v4553 = vlaneseq
    %v4554 = vshrl.u32 %v4553, 7
    %v4555 = vsub.s32 %v3441, %v4554
    %v4556 = vrot.slane %v2301, %v4555
    %v4557 = vsel %vm3446, %v4556, %v4552
    %v4558 = vlaneseq
    %v4559 = vshrl.u32 %v4558, 7
    %v4560 = vsub.s32 %v3448, %v4559
    %v4561 = vrot.slane %v2302, %v4560
    %v4562 = vsel %vm3453, %v4561, %v4557
    %v4563 = vlaneseq
    %v4564 = vshrl.u32 %v4563, 7
    %v4565 = vsub.s32 %v3455, %v4564
    %v4566 = vrot.slane %v2303, %v4565
    %v4567 = vsel %vm3460, %v4566, %v4562
    %v4568 = vlaneseq
    %v4569 = vshrl.u32 %v4568, 7
    %v4570 = vsub.s32 %v3352, %v4569
    %v4571 = vrot.slane %v2304, %v4570
    %v4572 = vlaneseq
    %v4573 = vshrl.u32 %v4572, 7
    %v4574 = vsub.s32 %v3357, %v4573
    %v4575 = vrot.slane %v2305, %v4574
    %v4576 = vsel %vm3362, %v4575, %v4571
    %v4577 = vlaneseq
    %v4578 = vshrl.u32 %v4577, 7
    %v4579 = vsub.s32 %v3364, %v4578
    %v4580 = vrot.slane %v2306, %v4579
    %v4581 = vsel %vm3369, %v4580, %v4576
    %v4582 = vlaneseq
    %v4583 = vshrl.u32 %v4582, 7
    %v4584 = vsub.s32 %v3371, %v4583
    %v4585 = vrot.slane %v2307, %v4584
    %v4586 = vsel %vm3376, %v4585, %v4581
    %v4587 = vlaneseq
    %v4588 = vshrl.u32 %v4587, 7
    %v4589 = vsub.s32 %v3378, %v4588
    %v4590 = vrot.slane %v2308, %v4589
    %v4591 = vsel %vm3383, %v4590, %v4586
    %v4592 = vlaneseq
    %v4593 = vshrl.u32 %v4592, 7
    %v4594 = vsub.s32 %v3385, %v4593
    %v4595 = vrot.slane %v2309, %v4594
    %v4596 = vsel %vm3390, %v4595, %v4591
    %v4597 = vlaneseq
    %v4598 = vshrl.u32 %v4597, 7
    %v4599 = vsub.s32 %v3392, %v4598
    %v4600 = vrot.slane %v2310, %v4599
    %v4601 = vsel %vm3397, %v4600, %v4596
    %v4602 = vlaneseq
    %v4603 = vshrl.u32 %v4602, 7
    %v4604 = vsub.s32 %v3399, %v4603
    %v4605 = vrot.slane %v2311, %v4604
    %v4606 = vsel %vm3404, %v4605, %v4601
    %v4607 = vlaneseq
    %v4608 = vshrl.u32 %v4607, 7
    %v4609 = vsub.s32 %v3406, %v4608
    %v4610 = vrot.slane %v2312, %v4609
    %v4611 = vsel %vm3411, %v4610, %v4606
    %v4612 = vlaneseq
    %v4613 = vshrl.u32 %v4612, 7
    %v4614 = vsub.s32 %v3413, %v4613
    %v4615 = vrot.slane %v2313, %v4614
    %v4616 = vsel %vm3418, %v4615, %v4611
    %v4617 = vlaneseq
    %v4618 = vshrl.u32 %v4617, 7
    %v4619 = vsub.s32 %v3420, %v4618
    %v4620 = vrot.slane %v2314, %v4619
    %v4621 = vsel %vm3425, %v4620, %v4616
    %v4622 = vlaneseq
    %v4623 = vshrl.u32 %v4622, 7
    %v4624 = vsub.s32 %v3427, %v4623
    %v4625 = vrot.slane %v2315, %v4624
    %v4626 = vsel %vm3432, %v4625, %v4621
    %v4627 = vlaneseq
    %v4628 = vshrl.u32 %v4627, 7
    %v4629 = vsub.s32 %v3434, %v4628
    %v4630 = vrot.slane %v2316, %v4629
    %v4631 = vsel %vm3439, %v4630, %v4626
    %v4632 = vlaneseq
    %v4633 = vshrl.u32 %v4632, 7
    %v4634 = vsub.s32 %v3441, %v4633
    %v4635 = vrot.slane %v2317, %v4634
    %v4636 = vsel %vm3446, %v4635, %v4631
    %v4637 = vlaneseq
    %v4638 = vshrl.u32 %v4637, 7
    %v4639 = vsub.s32 %v3448, %v4638
    %v4640 = vrot.slane %v2318, %v4639
    %v4641 = vsel %vm3453, %v4640, %v4636
    %v4642 = vlaneseq
    %v4643 = vshrl.u32 %v4642, 7
    %v4644 = vsub.s32 %v3455, %v4643
    %v4645 = vrot.slane %v2319, %v4644
    %v4646 = vsel %vm3460, %v4645, %v4641
    %v4647 = vlaneseq
    %v4648 = vshrl.u32 %v4647, 7
    %v4649 = vsub.s32 %v3352, %v4648
    %v4650 = vrot.slane %v2320, %v4649
    %v4651 = vlaneseq
    %v4652 = vshrl.u32 %v4651, 7
    %v4653 = vsub.s32 %v3357, %v4652
    %v4654 = vrot.slane %v2321, %v4653
    %v4655 = vsel %vm3362, %v4654, %v4650
    %v4656 = vlaneseq
    %v4657 = vshrl.u32 %v4656, 7
    %v4658 = vsub.s32 %v3364, %v4657
    %v4659 = vrot.slane %v2322, %v4658
    %v4660 = vsel %vm3369, %v4659, %v4655
    %v4661 = vlaneseq
    %v4662 = vshrl.u32 %v4661, 7
    %v4663 = vsub.s32 %v3371, %v4662
    %v4664 = vrot.slane %v2323, %v4663
    %v4665 = vsel %vm3376, %v4664, %v4660
    %v4666 = vlaneseq
    %v4667 = vshrl.u32 %v4666, 7
    %v4668 = vsub.s32 %v3378, %v4667
    %v4669 = vrot.slane %v2324, %v4668
    %v4670 = vsel %vm3383, %v4669, %v4665
    %v4671 = vlaneseq
    %v4672 = vshrl.u32 %v4671, 7
    %v4673 = vsub.s32 %v3385, %v4672
    %v4674 = vrot.slane %v2325, %v4673
    %v4675 = vsel %vm3390, %v4674, %v4670
    %v4676 = vlaneseq
    %v4677 = vshrl.u32 %v4676, 7
    %v4678 = vsub.s32 %v3392, %v4677
    %v4679 = vrot.slane %v2326, %v4678
    %v4680 = vsel %vm3397, %v4679, %v4675
    %v4681 = vlaneseq
    %v4682 = vshrl.u32 %v4681, 7
    %v4683 = vsub.s32 %v3399, %v4682
    %v4684 = vrot.slane %v2327, %v4683
    %v4685 = vsel %vm3404, %v4684, %v4680
    %v4686 = vlaneseq
    %v4687 = vshrl.u32 %v4686, 7
    %v4688 = vsub.s32 %v3406, %v4687
    %v4689 = vrot.slane %v2328, %v4688
    %v4690 = vsel %vm3411, %v4689, %v4685
    %v4691 = vlaneseq
    %v4692 = vshrl.u32 %v4691, 7
    %v4693 = vsub.s32 %v3413, %v4692
    %v4694 = vrot.slane %v2329, %v4693
    %v4695 = vsel %vm3418, %v4694, %v4690
    %v4696 = vlaneseq
    %v4697 = vshrl.u32 %v4696, 7
    %v4698 = vsub.s32 %v3420, %v4697
    %v4699 = vrot.slane %v2330, %v4698
    %v4700 = vsel %vm3425, %v4699, %v4695
    %v4701 = vlaneseq
    %v4702 = vshrl.u32 %v4701, 7
    %v4703 = vsub.s32 %v3427, %v4702
    %v4704 = vrot.slane %v2331, %v4703
    %v4705 = vsel %vm3432, %v4704, %v4700
    %v4706 = vlaneseq
    %v4707 = vshrl.u32 %v4706, 7
    %v4708 = vsub.s32 %v3434, %v4707
    %v4709 = vrot.slane %v2332, %v4708
    %v4710 = vsel %vm3439, %v4709, %v4705
    %v4711 = vlaneseq
    %v4712 = vshrl.u32 %v4711, 7
    %v4713 = vsub.s32 %v3441, %v4712
    %v4714 = vrot.slane %v2333, %v4713
    %v4715 = vsel %vm3446, %v4714, %v4710
    %v4716 = vlaneseq
    %v4717 = vshrl.u32 %v4716, 7
    %v4718 = vsub.s32 %v3448, %v4717
    %v4719 = vrot.slane %v2334, %v4718
    %v4720 = vsel %vm3453, %v4719, %v4715
    %v4721 = vlaneseq
    %v4722 = vshrl.u32 %v4721, 7
    %v4723 = vsub.s32 %v3455, %v4722
    %v4724 = vrot.slane %v2335, %v4723
    %v4725 = vsel %vm3460, %v4724, %v4720
    %v4726 = vlaneseq
    %v4727 = vshrl.u32 %v4726, 7
    %v4728 = vsub.s32 %v3352, %v4727
    %v4729 = vrot.slane %v2336, %v4728
    %v4730 = vlaneseq
    %v4731 = vshrl.u32 %v4730, 7
    %v4732 = vsub.s32 %v3357, %v4731
    %v4733 = vrot.slane %v2337, %v4732
    %v4734 = vsel %vm3362, %v4733, %v4729
    %v4735 = vlaneseq
    %v4736 = vshrl.u32 %v4735, 7
    %v4737 = vsub.s32 %v3364, %v4736
    %v4738 = vrot.slane %v2338, %v4737
    %v4739 = vsel %vm3369, %v4738, %v4734
    %v4740 = vlaneseq
    %v4741 = vshrl.u32 %v4740, 7
    %v4742 = vsub.s32 %v3371, %v4741
    %v4743 = vrot.slane %v2339, %v4742
    %v4744 = vsel %vm3376, %v4743, %v4739
    %v4745 = vlaneseq
    %v4746 = vshrl.u32 %v4745, 7
    %v4747 = vsub.s32 %v3378, %v4746
    %v4748 = vrot.slane %v2340, %v4747
    %v4749 = vsel %vm3383, %v4748, %v4744
    %v4750 = vlaneseq
    %v4751 = vshrl.u32 %v4750, 7
    %v4752 = vsub.s32 %v3385, %v4751
    %v4753 = vrot.slane %v2341, %v4752
    %v4754 = vsel %vm3390, %v4753, %v4749
    %v4755 = vlaneseq
    %v4756 = vshrl.u32 %v4755, 7
    %v4757 = vsub.s32 %v3392, %v4756
    %v4758 = vrot.slane %v2342, %v4757
    %v4759 = vsel %vm3397, %v4758, %v4754
    %v4760 = vlaneseq
    %v4761 = vshrl.u32 %v4760, 7
    %v4762 = vsub.s32 %v3399, %v4761
    %v4763 = vrot.slane %v2343, %v4762
    %v4764 = vsel %vm3404, %v4763, %v4759
    %v4765 = vlaneseq
    %v4766 = vshrl.u32 %v4765, 7
    %v4767 = vsub.s32 %v3406, %v4766
    %v4768 = vrot.slane %v2344, %v4767
    %v4769 = vsel %vm3411, %v4768, %v4764
    %v4770 = vlaneseq
    %v4771 = vshrl.u32 %v4770, 7
    %v4772 = vsub.s32 %v3413, %v4771
    %v4773 = vrot.slane %v2345, %v4772
    %v4774 = vsel %vm3418, %v4773, %v4769
    %v4775 = vlaneseq
    %v4776 = vshrl.u32 %v4775, 7
    %v4777 = vsub.s32 %v3420, %v4776
    %v4778 = vrot.slane %v2346, %v4777
    %v4779 = vsel %vm3425, %v4778, %v4774
    %v4780 = vlaneseq
    %v4781 = vshrl.u32 %v4780, 7
    %v4782 = vsub.s32 %v3427, %v4781
    %v4783 = vrot.slane %v2347, %v4782
    %v4784 = vsel %vm3432, %v4783, %v4779
    %v4785 = vlaneseq
    %v4786 = vshrl.u32 %v4785, 7
    %v4787 = vsub.s32 %v3434, %v4786
    %v4788 = vrot.slane %v2348, %v4787
    %v4789 = vsel %vm3439, %v4788, %v4784
    %v4790 = vlaneseq
    %v4791 = vshrl.u32 %v4790, 7
    %v4792 = vsub.s32 %v3441, %v4791
    %v4793 = vrot.slane %v2349, %v4792
    %v4794 = vsel %vm3446, %v4793, %v4789
    %v4795 = vlaneseq
    %v4796 = vshrl.u32 %v4795, 7
    %v4797 = vsub.s32 %v3448, %v4796
    %v4798 = vrot.slane %v2350, %v4797
    %v4799 = vsel %vm3453, %v4798, %v4794
    %v4800 = vlaneseq
    %v4801 = vshrl.u32 %v4800, 7
    %v4802 = vsub.s32 %v3455, %v4801
    %v4803 = vrot.slane %v2351, %v4802
    %v4804 = vsel %vm3460, %v4803, %v4799
    %v4805 = vlaneseq
    %v4806 = vshrl.u32 %v4805, 7
    %v4807 = vsub.s32 %v3352, %v4806
    %v4808 = vrot.slane %v2352, %v4807
    %v4809 = vlaneseq
    %v4810 = vshrl.u32 %v4809, 7
    %v4811 = vsub.s32 %v3357, %v4810
    %v4812 = vrot.slane %v2353, %v4811
    %v4813 = vsel %vm3362, %v4812, %v4808
    %v4814 = vlaneseq
    %v4815 = vshrl.u32 %v4814, 7
    %v4816 = vsub.s32 %v3364, %v4815
    %v4817 = vrot.slane %v2354, %v4816
    %v4818 = vsel %vm3369, %v4817, %v4813
    %v4819 = vlaneseq
    %v4820 = vshrl.u32 %v4819, 7
    %v4821 = vsub.s32 %v3371, %v4820
    %v4822 = vrot.slane %v2355, %v4821
    %v4823 = vsel %vm3376, %v4822, %v4818
    %v4824 = vlaneseq
    %v4825 = vshrl.u32 %v4824, 7
    %v4826 = vsub.s32 %v3378, %v4825
    %v4827 = vrot.slane %v2356, %v4826
    %v4828 = vsel %vm3383, %v4827, %v4823
    %v4829 = vlaneseq
    %v4830 = vshrl.u32 %v4829, 7
    %v4831 = vsub.s32 %v3385, %v4830
    %v4832 = vrot.slane %v2357, %v4831
    %v4833 = vsel %vm3390, %v4832, %v4828
    %v4834 = vlaneseq
    %v4835 = vshrl.u32 %v4834, 7
    %v4836 = vsub.s32 %v3392, %v4835
    %v4837 = vrot.slane %v2358, %v4836
    %v4838 = vsel %vm3397, %v4837, %v4833
    %v4839 = vlaneseq
    %v4840 = vshrl.u32 %v4839, 7
    %v4841 = vsub.s32 %v3399, %v4840
    %v4842 = vrot.slane %v2359, %v4841
    %v4843 = vsel %vm3404, %v4842, %v4838
    %v4844 = vlaneseq
    %v4845 = vshrl.u32 %v4844, 7
    %v4846 = vsub.s32 %v3406, %v4845
    %v4847 = vrot.slane %v2360, %v4846
    %v4848 = vsel %vm3411, %v4847, %v4843
    %v4849 = vlaneseq
    %v4850 = vshrl.u32 %v4849, 7
    %v4851 = vsub.s32 %v3413, %v4850
    %v4852 = vrot.slane %v2361, %v4851
    %v4853 = vsel %vm3418, %v4852, %v4848
    %v4854 = vlaneseq
    %v4855 = vshrl.u32 %v4854, 7
    %v4856 = vsub.s32 %v3420, %v4855
    %v4857 = vrot.slane %v2362, %v4856
    %v4858 = vsel %vm3425, %v4857, %v4853
    %v4859 = vlaneseq
    %v4860 = vshrl.u32 %v4859, 7
    %v4861 = vsub.s32 %v3427, %v4860
    %v4862 = vrot.slane %v2363, %v4861
    %v4863 = vsel %vm3432, %v4862, %v4858
    %v4864 = vlaneseq
    %v4865 = vshrl.u32 %v4864, 7
    %v4866 = vsub.s32 %v3434, %v4865
    %v4867 = vrot.slane %v2364, %v4866
    %v4868 = vsel %vm3439, %v4867, %v4863
    %v4869 = vlaneseq
    %v4870 = vshrl.u32 %v4869, 7
    %v4871 = vsub.s32 %v3441, %v4870
    %v4872 = vrot.slane %v2365, %v4871
    %v4873 = vsel %vm3446, %v4872, %v4868
    %v4874 = vlaneseq
    %v4875 = vshrl.u32 %v4874, 7
    %v4876 = vsub.s32 %v3448, %v4875
    %v4877 = vrot.slane %v2366, %v4876
    %v4878 = vsel %vm3453, %v4877, %v4873
    %v4879 = vlaneseq
    %v4880 = vshrl.u32 %v4879, 7
    %v4881 = vsub.s32 %v3455, %v4880
    %v4882 = vrot.slane %v2367, %v4881
    %v4883 = vsel %vm3460, %v4882, %v4878
    %v4884 = vlaneseq
    %v4885 = vshrl.u32 %v4884, 7
    %v4886 = vsub.s32 %v3352, %v4885
    %v4887 = vrot.slane %v2368, %v4886
    %v4888 = vlaneseq
    %v4889 = vshrl.u32 %v4888, 7
    %v4890 = vsub.s32 %v3357, %v4889
    %v4891 = vrot.slane %v2369, %v4890
    %v4892 = vsel %vm3362, %v4891, %v4887
    %v4893 = vlaneseq
    %v4894 = vshrl.u32 %v4893, 7
    %v4895 = vsub.s32 %v3364, %v4894
    %v4896 = vrot.slane %v2370, %v4895
    %v4897 = vsel %vm3369, %v4896, %v4892
    %v4898 = vlaneseq
    %v4899 = vshrl.u32 %v4898, 7
    %v4900 = vsub.s32 %v3371, %v4899
    %v4901 = vrot.slane %v2371, %v4900
    %v4902 = vsel %vm3376, %v4901, %v4897
    %v4903 = vlaneseq
    %v4904 = vshrl.u32 %v4903, 7
    %v4905 = vsub.s32 %v3378, %v4904
    %v4906 = vrot.slane %v2372, %v4905
    %v4907 = vsel %vm3383, %v4906, %v4902
    %v4908 = vlaneseq
    %v4909 = vshrl.u32 %v4908, 7
    %v4910 = vsub.s32 %v3385, %v4909
    %v4911 = vrot.slane %v2373, %v4910
    %v4912 = vsel %vm3390, %v4911, %v4907
    %v4913 = vlaneseq
    %v4914 = vshrl.u32 %v4913, 7
    %v4915 = vsub.s32 %v3392, %v4914
    %v4916 = vrot.slane %v2374, %v4915
    %v4917 = vsel %vm3397, %v4916, %v4912
    %v4918 = vlaneseq
    %v4919 = vshrl.u32 %v4918, 7
    %v4920 = vsub.s32 %v3399, %v4919
    %v4921 = vrot.slane %v2375, %v4920
    %v4922 = vsel %vm3404, %v4921, %v4917
    %v4923 = vlaneseq
    %v4924 = vshrl.u32 %v4923, 7
    %v4925 = vsub.s32 %v3406, %v4924
    %v4926 = vrot.slane %v2376, %v4925
    %v4927 = vsel %vm3411, %v4926, %v4922
    %v4928 = vlaneseq
    %v4929 = vshrl.u32 %v4928, 7
    %v4930 = vsub.s32 %v3413, %v4929
    %v4931 = vrot.slane %v2377, %v4930
    %v4932 = vsel %vm3418, %v4931, %v4927
    %v4933 = vlaneseq
    %v4934 = vshrl.u32 %v4933, 7
    %v4935 = vsub.s32 %v3420, %v4934
    %v4936 = vrot.slane %v2378, %v4935
    %v4937 = vsel %vm3425, %v4936, %v4932
    %v4938 = vlaneseq
    %v4939 = vshrl.u32 %v4938, 7
    %v4940 = vsub.s32 %v3427, %v4939
    %v4941 = vrot.slane %v2379, %v4940
    %v4942 = vsel %vm3432, %v4941, %v4937
    %v4943 = vlaneseq
    %v4944 = vshrl.u32 %v4943, 7
    %v4945 = vsub.s32 %v3434, %v4944
    %v4946 = vrot.slane %v2380, %v4945
    %v4947 = vsel %vm3439, %v4946, %v4942
    %v4948 = vlaneseq
    %v4949 = vshrl.u32 %v4948, 7
    %v4950 = vsub.s32 %v3441, %v4949
    %v4951 = vrot.slane %v2381, %v4950
    %v4952 = vsel %vm3446, %v4951, %v4947
    %v4953 = vlaneseq
    %v4954 = vshrl.u32 %v4953, 7
    %v4955 = vsub.s32 %v3448, %v4954
    %v4956 = vrot.slane %v2382, %v4955
    %v4957 = vsel %vm3453, %v4956, %v4952
    %v4958 = vlaneseq
    %v4959 = vshrl.u32 %v4958, 7
    %v4960 = vsub.s32 %v3455, %v4959
    %v4961 = vrot.slane %v2383, %v4960
    %v4962 = vsel %vm3460, %v4961, %v4957
    %v4963 = vlaneseq
    %v4964 = vshrl.u32 %v4963, 7
    %v4965 = vsub.s32 %v3352, %v4964
    %v4966 = vrot.slane %v2384, %v4965
    %v4967 = vlaneseq
    %v4968 = vshrl.u32 %v4967, 7
    %v4969 = vsub.s32 %v3357, %v4968
    %v4970 = vrot.slane %v2385, %v4969
    %v4971 = vsel %vm3362, %v4970, %v4966
    %v4972 = vlaneseq
    %v4973 = vshrl.u32 %v4972, 7
    %v4974 = vsub.s32 %v3364, %v4973
    %v4975 = vrot.slane %v2386, %v4974
    %v4976 = vsel %vm3369, %v4975, %v4971
    %v4977 = vlaneseq
    %v4978 = vshrl.u32 %v4977, 7
    %v4979 = vsub.s32 %v3371, %v4978
    %v4980 = vrot.slane %v2387, %v4979
    %v4981 = vsel %vm3376, %v4980, %v4976
    %v4982 = vlaneseq
    %v4983 = vshrl.u32 %v4982, 7
    %v4984 = vsub.s32 %v3378, %v4983
    %v4985 = vrot.slane %v2388, %v4984
    %v4986 = vsel %vm3383, %v4985, %v4981
    %v4987 = vlaneseq
    %v4988 = vshrl.u32 %v4987, 7
    %v4989 = vsub.s32 %v3385, %v4988
    %v4990 = vrot.slane %v2389, %v4989
    %v4991 = vsel %vm3390, %v4990, %v4986
    %v4992 = vlaneseq
    %v4993 = vshrl.u32 %v4992, 7
    %v4994 = vsub.s32 %v3392, %v4993
    %v4995 = vrot.slane %v2390, %v4994
    %v4996 = vsel %vm3397, %v4995, %v4991
    %v4997 = vlaneseq
    %v4998 = vshrl.u32 %v4997, 7
    %v4999 = vsub.s32 %v3399, %v4998
    %v5000 = vrot.slane %v2391, %v4999
    %v5001 = vsel %vm3404, %v5000, %v4996
    %v5002 = vlaneseq
    %v5003 = vshrl.u32 %v5002, 7
    %v5004 = vsub.s32 %v3406, %v5003
    %v5005 = vrot.slane %v2392, %v5004
    %v5006 = vsel %vm3411, %v5005, %v5001
    %v5007 = vlaneseq
    %v5008 = vshrl.u32 %v5007, 7
    %v5009 = vsub.s32 %v3413, %v5008
    %v5010 = vrot.slane %v2393, %v5009
    %v5011 = vsel %vm3418, %v5010, %v5006
    %v5012 = vlaneseq
    %v5013 = vshrl.u32 %v5012, 7
    %v5014 = vsub.s32 %v3420, %v5013
    %v5015 = vrot.slane %v2394, %v5014
    %v5016 = vsel %vm3425, %v5015, %v5011
    %v5017 = vlaneseq
    %v5018 = vshrl.u32 %v5017, 7
    %v5019 = vsub.s32 %v3427, %v5018
    %v5020 = vrot.slane %v2395, %v5019
    %v5021 = vsel %vm3432, %v5020, %v5016
    %v5022 = vlaneseq
    %v5023 = vshrl.u32 %v5022, 7
    %v5024 = vsub.s32 %v3434, %v5023
    %v5025 = vrot.slane %v2396, %v5024
    %v5026 = vsel %vm3439, %v5025, %v5021
    %v5027 = vlaneseq
    %v5028 = vshrl.u32 %v5027, 7
    %v5029 = vsub.s32 %v3441, %v5028
    %v5030 = vrot.slane %v2397, %v5029
    %v5031 = vsel %vm3446, %v5030, %v5026
    %v5032 = vlaneseq
    %v5033 = vshrl.u32 %v5032, 7
    %v5034 = vsub.s32 %v3448, %v5033
    %v5035 = vrot.slane %v2398, %v5034
    %v5036 = vsel %vm3453, %v5035, %v5031
    %v5037 = vlaneseq
    %v5038 = vshrl.u32 %v5037, 7
    %v5039 = vsub.s32 %v3455, %v5038
    %v5040 = vrot.slane %v2399, %v5039
    %v5041 = vsel %vm3460, %v5040, %v5036
    %v5042 = vlaneseq
    %v5043 = vshrl.u32 %v5042, 7
    %v5044 = vsub.s32 %v3352, %v5043
    %v5045 = vrot.slane %v2400, %v5044
    %v5046 = vlaneseq
    %v5047 = vshrl.u32 %v5046, 7
    %v5048 = vsub.s32 %v3357, %v5047
    %v5049 = vrot.slane %v2401, %v5048
    %v5050 = vsel %vm3362, %v5049, %v5045
    %v5051 = vlaneseq
    %v5052 = vshrl.u32 %v5051, 7
    %v5053 = vsub.s32 %v3364, %v5052
    %v5054 = vrot.slane %v2402, %v5053
    %v5055 = vsel %vm3369, %v5054, %v5050
    %v5056 = vlaneseq
    %v5057 = vshrl.u32 %v5056, 7
    %v5058 = vsub.s32 %v3371, %v5057
    %v5059 = vrot.slane %v2403, %v5058
    %v5060 = vsel %vm3376, %v5059, %v5055
    %v5061 = vlaneseq
    %v5062 = vshrl.u32 %v5061, 7
    %v5063 = vsub.s32 %v3378, %v5062
    %v5064 = vrot.slane %v2404, %v5063
    %v5065 = vsel %vm3383, %v5064, %v5060
    %v5066 = vlaneseq
    %v5067 = vshrl.u32 %v5066, 7
    %v5068 = vsub.s32 %v3385, %v5067
    %v5069 = vrot.slane %v2405, %v5068
    %v5070 = vsel %vm3390, %v5069, %v5065
    %v5071 = vlaneseq
    %v5072 = vshrl.u32 %v5071, 7
    %v5073 = vsub.s32 %v3392, %v5072
    %v5074 = vrot.slane %v2406, %v5073
    %v5075 = vsel %vm3397, %v5074, %v5070
    %v5076 = vlaneseq
    %v5077 = vshrl.u32 %v5076, 7
    %v5078 = vsub.s32 %v3399, %v5077
    %v5079 = vrot.slane %v2407, %v5078
    %v5080 = vsel %vm3404, %v5079, %v5075
    %v5081 = vlaneseq
    %v5082 = vshrl.u32 %v5081, 7
    %v5083 = vsub.s32 %v3406, %v5082
    %v5084 = vrot.slane %v2408, %v5083
    %v5085 = vsel %vm3411, %v5084, %v5080
    %v5086 = vlaneseq
    %v5087 = vshrl.u32 %v5086, 7
    %v5088 = vsub.s32 %v3413, %v5087
    %v5089 = vrot.slane %v2409, %v5088
    %v5090 = vsel %vm3418, %v5089, %v5085
    %v5091 = vlaneseq
    %v5092 = vshrl.u32 %v5091, 7
    %v5093 = vsub.s32 %v3420, %v5092
    %v5094 = vrot.slane %v2410, %v5093
    %v5095 = vsel %vm3425, %v5094, %v5090
    %v5096 = vlaneseq
    %v5097 = vshrl.u32 %v5096, 7
    %v5098 = vsub.s32 %v3427, %v5097
    %v5099 = vrot.slane %v2411, %v5098
    %v5100 = vsel %vm3432, %v5099, %v5095
    %v5101 = vlaneseq
    %v5102 = vshrl.u32 %v5101, 7
    %v5103 = vsub.s32 %v3434, %v5102
    %v5104 = vrot.slane %v2412, %v5103
    %v5105 = vsel %vm3439, %v5104, %v5100
    %v5106 = vlaneseq
    %v5107 = vshrl.u32 %v5106, 7
    %v5108 = vsub.s32 %v3441, %v5107
    %v5109 = vrot.slane %v2413, %v5108
    %v5110 = vsel %vm3446, %v5109, %v5105
    %v5111 = vlaneseq
    %v5112 = vshrl.u32 %v5111, 7
    %v5113 = vsub.s32 %v3448, %v5112
    %v5114 = vrot.slane %v2414, %v5113
    %v5115 = vsel %vm3453, %v5114, %v5110
    %v5116 = vlaneseq
    %v5117 = vshrl.u32 %v5116, 7
    %v5118 = vsub.s32 %v3455, %v5117
    %v5119 = vrot.slane %v2415, %v5118
    %v5120 = vsel %vm3460, %v5119, %v5115
    %v5121 = vlaneseq
    %v5122 = vshrl.u32 %v5121, 7
    %v5123 = vsub.s32 %v3352, %v5122
    %v5124 = vrot.slane %v2416, %v5123
    %v5125 = vlaneseq
    %v5126 = vshrl.u32 %v5125, 7
    %v5127 = vsub.s32 %v3357, %v5126
    %v5128 = vrot.slane %v2417, %v5127
    %v5129 = vsel %vm3362, %v5128, %v5124
    %v5130 = vlaneseq
    %v5131 = vshrl.u32 %v5130, 7
    %v5132 = vsub.s32 %v3364, %v5131
    %v5133 = vrot.slane %v2418, %v5132
    %v5134 = vsel %vm3369, %v5133, %v5129
    %v5135 = vlaneseq
    %v5136 = vshrl.u32 %v5135, 7
    %v5137 = vsub.s32 %v3371, %v5136
    %v5138 = vrot.slane %v2419, %v5137
    %v5139 = vsel %vm3376, %v5138, %v5134
    %v5140 = vlaneseq
    %v5141 = vshrl.u32 %v5140, 7
    %v5142 = vsub.s32 %v3378, %v5141
    %v5143 = vrot.slane %v2420, %v5142
    %v5144 = vsel %vm3383, %v5143, %v5139
    %v5145 = vlaneseq
    %v5146 = vshrl.u32 %v5145, 7
    %v5147 = vsub.s32 %v3385, %v5146
    %v5148 = vrot.slane %v2421, %v5147
    %v5149 = vsel %vm3390, %v5148, %v5144
    %v5150 = vlaneseq
    %v5151 = vshrl.u32 %v5150, 7
    %v5152 = vsub.s32 %v3392, %v5151
    %v5153 = vrot.slane %v2422, %v5152
    %v5154 = vsel %vm3397, %v5153, %v5149
    %v5155 = vlaneseq
    %v5156 = vshrl.u32 %v5155, 7
    %v5157 = vsub.s32 %v3399, %v5156
    %v5158 = vrot.slane %v2423, %v5157
    %v5159 = vsel %vm3404, %v5158, %v5154
    %v5160 = vlaneseq
    %v5161 = vshrl.u32 %v5160, 7
    %v5162 = vsub.s32 %v3406, %v5161
    %v5163 = vrot.slane %v2424, %v5162
    %v5164 = vsel %vm3411, %v5163, %v5159
    %v5165 = vlaneseq
    %v5166 = vshrl.u32 %v5165, 7
    %v5167 = vsub.s32 %v3413, %v5166
    %v5168 = vrot.slane %v2425, %v5167
    %v5169 = vsel %vm3418, %v5168, %v5164
    %v5170 = vlaneseq
    %v5171 = vshrl.u32 %v5170, 7
    %v5172 = vsub.s32 %v3420, %v5171
    %v5173 = vrot.slane %v2426, %v5172
    %v5174 = vsel %vm3425, %v5173, %v5169
    %v5175 = vlaneseq
    %v5176 = vshrl.u32 %v5175, 7
    %v5177 = vsub.s32 %v3427, %v5176
    %v5178 = vrot.slane %v2427, %v5177
    %v5179 = vsel %vm3432, %v5178, %v5174
    %v5180 = vlaneseq
    %v5181 = vshrl.u32 %v5180, 7
    %v5182 = vsub.s32 %v3434, %v5181
    %v5183 = vrot.slane %v2428, %v5182
    %v5184 = vsel %vm3439, %v5183, %v5179
    %v5185 = vlaneseq
    %v5186 = vshrl.u32 %v5185, 7
    %v5187 = vsub.s32 %v3441, %v5186
    %v5188 = vrot.slane %v2429, %v5187
    %v5189 = vsel %vm3446, %v5188, %v5184
    %v5190 = vlaneseq
    %v5191 = vshrl.u32 %v5190, 7
    %v5192 = vsub.s32 %v3448, %v5191
    %v5193 = vrot.slane %v2430, %v5192
    %v5194 = vsel %vm3453, %v5193, %v5189
    %v5195 = vlaneseq
    %v5196 = vshrl.u32 %v5195, 7
    %v5197 = vsub.s32 %v3455, %v5196
    %v5198 = vrot.slane %v2431, %v5197
    %v5199 = vsel %vm3460, %v5198, %v5194
    %v5200 = vlaneseq
    %v5201 = vshrl.u32 %v5200, 7
    %v5202 = vsub.s32 %v3352, %v5201
    %v5203 = vrot.slane %v2432, %v5202
    %v5204 = vlaneseq
    %v5205 = vshrl.u32 %v5204, 7
    %v5206 = vsub.s32 %v3357, %v5205
    %v5207 = vrot.slane %v2433, %v5206
    %v5208 = vsel %vm3362, %v5207, %v5203
    %v5209 = vlaneseq
    %v5210 = vshrl.u32 %v5209, 7
    %v5211 = vsub.s32 %v3364, %v5210
    %v5212 = vrot.slane %v2434, %v5211
    %v5213 = vsel %vm3369, %v5212, %v5208
    %v5214 = vlaneseq
    %v5215 = vshrl.u32 %v5214, 7
    %v5216 = vsub.s32 %v3371, %v5215
    %v5217 = vrot.slane %v2435, %v5216
    %v5218 = vsel %vm3376, %v5217, %v5213
    %v5219 = vlaneseq
    %v5220 = vshrl.u32 %v5219, 7
    %v5221 = vsub.s32 %v3378, %v5220
    %v5222 = vrot.slane %v2436, %v5221
    %v5223 = vsel %vm3383, %v5222, %v5218
    %v5224 = vlaneseq
    %v5225 = vshrl.u32 %v5224, 7
    %v5226 = vsub.s32 %v3385, %v5225
    %v5227 = vrot.slane %v2437, %v5226
    %v5228 = vsel %vm3390, %v5227, %v5223
    %v5229 = vlaneseq
    %v5230 = vshrl.u32 %v5229, 7
    %v5231 = vsub.s32 %v3392, %v5230
    %v5232 = vrot.slane %v2438, %v5231
    %v5233 = vsel %vm3397, %v5232, %v5228
    %v5234 = vlaneseq
    %v5235 = vshrl.u32 %v5234, 7
    %v5236 = vsub.s32 %v3399, %v5235
    %v5237 = vrot.slane %v2439, %v5236
    %v5238 = vsel %vm3404, %v5237, %v5233
    %v5239 = vlaneseq
    %v5240 = vshrl.u32 %v5239, 7
    %v5241 = vsub.s32 %v3406, %v5240
    %v5242 = vrot.slane %v2440, %v5241
    %v5243 = vsel %vm3411, %v5242, %v5238
    %v5244 = vlaneseq
    %v5245 = vshrl.u32 %v5244, 7
    %v5246 = vsub.s32 %v3413, %v5245
    %v5247 = vrot.slane %v2441, %v5246
    %v5248 = vsel %vm3418, %v5247, %v5243
    %v5249 = vlaneseq
    %v5250 = vshrl.u32 %v5249, 7
    %v5251 = vsub.s32 %v3420, %v5250
    %v5252 = vrot.slane %v2442, %v5251
    %v5253 = vsel %vm3425, %v5252, %v5248
    %v5254 = vlaneseq
    %v5255 = vshrl.u32 %v5254, 7
    %v5256 = vsub.s32 %v3427, %v5255
    %v5257 = vrot.slane %v2443, %v5256
    %v5258 = vsel %vm3432, %v5257, %v5253
    %v5259 = vlaneseq
    %v5260 = vshrl.u32 %v5259, 7
    %v5261 = vsub.s32 %v3434, %v5260
    %v5262 = vrot.slane %v2444, %v5261
    %v5263 = vsel %vm3439, %v5262, %v5258
    %v5264 = vlaneseq
    %v5265 = vshrl.u32 %v5264, 7
    %v5266 = vsub.s32 %v3441, %v5265
    %v5267 = vrot.slane %v2445, %v5266
    %v5268 = vsel %vm3446, %v5267, %v5263
    %v5269 = vlaneseq
    %v5270 = vshrl.u32 %v5269, 7
    %v5271 = vsub.s32 %v3448, %v5270
    %v5272 = vrot.slane %v2446, %v5271
    %v5273 = vsel %vm3453, %v5272, %v5268
    %v5274 = vlaneseq
    %v5275 = vshrl.u32 %v5274, 7
    %v5276 = vsub.s32 %v3455, %v5275
    %v5277 = vrot.slane %v2447, %v5276
    %v5278 = vsel %vm3460, %v5277, %v5273
    %v5279 = vlaneseq
    %v5280 = vshrl.u32 %v5279, 7
    %v5281 = vsub.s32 %v3352, %v5280
    %v5282 = vrot.slane %v2448, %v5281
    %v5283 = vlaneseq
    %v5284 = vshrl.u32 %v5283, 7
    %v5285 = vsub.s32 %v3357, %v5284
    %v5286 = vrot.slane %v2449, %v5285
    %v5287 = vsel %vm3362, %v5286, %v5282
    %v5288 = vlaneseq
    %v5289 = vshrl.u32 %v5288, 7
    %v5290 = vsub.s32 %v3364, %v5289
    %v5291 = vrot.slane %v2450, %v5290
    %v5292 = vsel %vm3369, %v5291, %v5287
    %v5293 = vlaneseq
    %v5294 = vshrl.u32 %v5293, 7
    %v5295 = vsub.s32 %v3371, %v5294
    %v5296 = vrot.slane %v2451, %v5295
    %v5297 = vsel %vm3376, %v5296, %v5292
    %v5298 = vlaneseq
    %v5299 = vshrl.u32 %v5298, 7
    %v5300 = vsub.s32 %v3378, %v5299
    %v5301 = vrot.slane %v2452, %v5300
    %v5302 = vsel %vm3383, %v5301, %v5297
    %v5303 = vlaneseq
    %v5304 = vshrl.u32 %v5303, 7
    %v5305 = vsub.s32 %v3385, %v5304
    %v5306 = vrot.slane %v2453, %v5305
    %v5307 = vsel %vm3390, %v5306, %v5302
    %v5308 = vlaneseq
    %v5309 = vshrl.u32 %v5308, 7
    %v5310 = vsub.s32 %v3392, %v5309
    %v5311 = vrot.slane %v2454, %v5310
    %v5312 = vsel %vm3397, %v5311, %v5307
    %v5313 = vlaneseq
    %v5314 = vshrl.u32 %v5313, 7
    %v5315 = vsub.s32 %v3399, %v5314
    %v5316 = vrot.slane %v2455, %v5315
    %v5317 = vsel %vm3404, %v5316, %v5312
    %v5318 = vlaneseq
    %v5319 = vshrl.u32 %v5318, 7
    %v5320 = vsub.s32 %v3406, %v5319
    %v5321 = vrot.slane %v2456, %v5320
    %v5322 = vsel %vm3411, %v5321, %v5317
    %v5323 = vlaneseq
    %v5324 = vshrl.u32 %v5323, 7
    %v5325 = vsub.s32 %v3413, %v5324
    %v5326 = vrot.slane %v2457, %v5325
    %v5327 = vsel %vm3418, %v5326, %v5322
    %v5328 = vlaneseq
    %v5329 = vshrl.u32 %v5328, 7
    %v5330 = vsub.s32 %v3420, %v5329
    %v5331 = vrot.slane %v2458, %v5330
    %v5332 = vsel %vm3425, %v5331, %v5327
    %v5333 = vlaneseq
    %v5334 = vshrl.u32 %v5333, 7
    %v5335 = vsub.s32 %v3427, %v5334
    %v5336 = vrot.slane %v2459, %v5335
    %v5337 = vsel %vm3432, %v5336, %v5332
    %v5338 = vlaneseq
    %v5339 = vshrl.u32 %v5338, 7
    %v5340 = vsub.s32 %v3434, %v5339
    %v5341 = vrot.slane %v2460, %v5340
    %v5342 = vsel %vm3439, %v5341, %v5337
    %v5343 = vlaneseq
    %v5344 = vshrl.u32 %v5343, 7
    %v5345 = vsub.s32 %v3441, %v5344
    %v5346 = vrot.slane %v2461, %v5345
    %v5347 = vsel %vm3446, %v5346, %v5342
    %v5348 = vlaneseq
    %v5349 = vshrl.u32 %v5348, 7
    %v5350 = vsub.s32 %v3448, %v5349
    %v5351 = vrot.slane %v2462, %v5350
    %v5352 = vsel %vm3453, %v5351, %v5347
    %v5353 = vlaneseq
    %v5354 = vshrl.u32 %v5353, 7
    %v5355 = vsub.s32 %v3455, %v5354
    %v5356 = vrot.slane %v2463, %v5355
    %v5357 = vsel %vm3460, %v5356, %v5352
    %v5358 = vlaneseq
    %v5359 = vshrl.u32 %v5358, 7
    %v5360 = vsub.s32 %v3352, %v5359
    %v5361 = vrot.slane %v2464, %v5360
    %v5362 = vlaneseq
    %v5363 = vshrl.u32 %v5362, 7
    %v5364 = vsub.s32 %v3357, %v5363
    %v5365 = vrot.slane %v2465, %v5364
    %v5366 = vsel %vm3362, %v5365, %v5361
    %v5367 = vlaneseq
    %v5368 = vshrl.u32 %v5367, 7
    %v5369 = vsub.s32 %v3364, %v5368
    %v5370 = vrot.slane %v2466, %v5369
    %v5371 = vsel %vm3369, %v5370, %v5366
    %v5372 = vlaneseq
    %v5373 = vshrl.u32 %v5372, 7
    %v5374 = vsub.s32 %v3371, %v5373
    %v5375 = vrot.slane %v2467, %v5374
    %v5376 = vsel %vm3376, %v5375, %v5371
    %v5377 = vlaneseq
    %v5378 = vshrl.u32 %v5377, 7
    %v5379 = vsub.s32 %v3378, %v5378
    %v5380 = vrot.slane %v2468, %v5379
    %v5381 = vsel %vm3383, %v5380, %v5376
    %v5382 = vlaneseq
    %v5383 = vshrl.u32 %v5382, 7
    %v5384 = vsub.s32 %v3385, %v5383
    %v5385 = vrot.slane %v2469, %v5384
    %v5386 = vsel %vm3390, %v5385, %v5381
    %v5387 = vlaneseq
    %v5388 = vshrl.u32 %v5387, 7
    %v5389 = vsub.s32 %v3392, %v5388
    %v5390 = vrot.slane %v2470, %v5389
    %v5391 = vsel %vm3397, %v5390, %v5386
    %v5392 = vlaneseq
    %v5393 = vshrl.u32 %v5392, 7
    %v5394 = vsub.s32 %v3399, %v5393
    %v5395 = vrot.slane %v2471, %v5394
    %v5396 = vsel %vm3404, %v5395, %v5391
    %v5397 = vlaneseq
    %v5398 = vshrl.u32 %v5397, 7
    %v5399 = vsub.s32 %v3406, %v5398
    %v5400 = vrot.slane %v2472, %v5399
    %v5401 = vsel %vm3411, %v5400, %v5396
    %v5402 = vlaneseq
    %v5403 = vshrl.u32 %v5402, 7
    %v5404 = vsub.s32 %v3413, %v5403
    %v5405 = vrot.slane %v2473, %v5404
    %v5406 = vsel %vm3418, %v5405, %v5401
    %v5407 = vlaneseq
    %v5408 = vshrl.u32 %v5407, 7
    %v5409 = vsub.s32 %v3420, %v5408
    %v5410 = vrot.slane %v2474, %v5409
    %v5411 = vsel %vm3425, %v5410, %v5406
    %v5412 = vlaneseq
    %v5413 = vshrl.u32 %v5412, 7
    %v5414 = vsub.s32 %v3427, %v5413
    %v5415 = vrot.slane %v2475, %v5414
    %v5416 = vsel %vm3432, %v5415, %v5411
    %v5417 = vlaneseq
    %v5418 = vshrl.u32 %v5417, 7
    %v5419 = vsub.s32 %v3434, %v5418
    %v5420 = vrot.slane %v2476, %v5419
    %v5421 = vsel %vm3439, %v5420, %v5416
    %v5422 = vlaneseq
    %v5423 = vshrl.u32 %v5422, 7
    %v5424 = vsub.s32 %v3441, %v5423
    %v5425 = vrot.slane %v2477, %v5424
    %v5426 = vsel %vm3446, %v5425, %v5421
    %v5427 = vlaneseq
    %v5428 = vshrl.u32 %v5427, 7
    %v5429 = vsub.s32 %v3448, %v5428
    %v5430 = vrot.slane %v2478, %v5429
    %v5431 = vsel %vm3453, %v5430, %v5426
    %v5432 = vlaneseq
    %v5433 = vshrl.u32 %v5432, 7
    %v5434 = vsub.s32 %v3455, %v5433
    %v5435 = vrot.slane %v2479, %v5434
    %v5436 = vsel %vm3460, %v5435, %v5431
    %v5437 = vlaneseq
    %v5438 = vshrl.u32 %v5437, 7
    %v5439 = vsub.s32 %v3352, %v5438
    %v5440 = vrot.slane %v2480, %v5439
    %v5441 = vlaneseq
    %v5442 = vshrl.u32 %v5441, 7
    %v5443 = vsub.s32 %v3357, %v5442
    %v5444 = vrot.slane %v2481, %v5443
    %v5445 = vsel %vm3362, %v5444, %v5440
    %v5446 = vlaneseq
    %v5447 = vshrl.u32 %v5446, 7
    %v5448 = vsub.s32 %v3364, %v5447
    %v5449 = vrot.slane %v2482, %v5448
    %v5450 = vsel %vm3369, %v5449, %v5445
    %v5451 = vlaneseq
    %v5452 = vshrl.u32 %v5451, 7
    %v5453 = vsub.s32 %v3371, %v5452
    %v5454 = vrot.slane %v2483, %v5453
    %v5455 = vsel %vm3376, %v5454, %v5450
    %v5456 = vlaneseq
    %v5457 = vshrl.u32 %v5456, 7
    %v5458 = vsub.s32 %v3378, %v5457
    %v5459 = vrot.slane %v2484, %v5458
    %v5460 = vsel %vm3383, %v5459, %v5455
    %v5461 = vlaneseq
    %v5462 = vshrl.u32 %v5461, 7
    %v5463 = vsub.s32 %v3385, %v5462
    %v5464 = vrot.slane %v2485, %v5463
    %v5465 = vsel %vm3390, %v5464, %v5460
    %v5466 = vlaneseq
    %v5467 = vshrl.u32 %v5466, 7
    %v5468 = vsub.s32 %v3392, %v5467
    %v5469 = vrot.slane %v2486, %v5468
    %v5470 = vsel %vm3397, %v5469, %v5465
    %v5471 = vlaneseq
    %v5472 = vshrl.u32 %v5471, 7
    %v5473 = vsub.s32 %v3399, %v5472
    %v5474 = vrot.slane %v2487, %v5473
    %v5475 = vsel %vm3404, %v5474, %v5470
    %v5476 = vlaneseq
    %v5477 = vshrl.u32 %v5476, 7
    %v5478 = vsub.s32 %v3406, %v5477
    %v5479 = vrot.slane %v2488, %v5478
    %v5480 = vsel %vm3411, %v5479, %v5475
    %v5481 = vlaneseq
    %v5482 = vshrl.u32 %v5481, 7
    %v5483 = vsub.s32 %v3413, %v5482
    %v5484 = vrot.slane %v2489, %v5483
    %v5485 = vsel %vm3418, %v5484, %v5480
    %v5486 = vlaneseq
    %v5487 = vshrl.u32 %v5486, 7
    %v5488 = vsub.s32 %v3420, %v5487
    %v5489 = vrot.slane %v2490, %v5488
    %v5490 = vsel %vm3425, %v5489, %v5485
    %v5491 = vlaneseq
    %v5492 = vshrl.u32 %v5491, 7
    %v5493 = vsub.s32 %v3427, %v5492
    %v5494 = vrot.slane %v2491, %v5493
    %v5495 = vsel %vm3432, %v5494, %v5490
    %v5496 = vlaneseq
    %v5497 = vshrl.u32 %v5496, 7
    %v5498 = vsub.s32 %v3434, %v5497
    %v5499 = vrot.slane %v2492, %v5498
    %v5500 = vsel %vm3439, %v5499, %v5495
    %v5501 = vlaneseq
    %v5502 = vshrl.u32 %v5501, 7
    %v5503 = vsub.s32 %v3441, %v5502
    %v5504 = vrot.slane %v2493, %v5503
    %v5505 = vsel %vm3446, %v5504, %v5500
    %v5506 = vlaneseq
    %v5507 = vshrl.u32 %v5506, 7
    %v5508 = vsub.s32 %v3448, %v5507
    %v5509 = vrot.slane %v2494, %v5508
    %v5510 = vsel %vm3453, %v5509, %v5505
    %v5511 = vlaneseq
    %v5512 = vshrl.u32 %v5511, 7
    %v5513 = vsub.s32 %v3455, %v5512
    %v5514 = vrot.slane %v2495, %v5513
    %v5515 = vsel %vm3460, %v5514, %v5510
    %v5516 = vlaneseq
    %v5517 = vshrl.u32 %v5516, 7
    %v5518 = vsub.s32 %v3352, %v5517
    %v5519 = vrot.slane %v2496, %v5518
    %v5520 = vlaneseq
    %v5521 = vshrl.u32 %v5520, 7
    %v5522 = vsub.s32 %v3357, %v5521
    %v5523 = vrot.slane %v2497, %v5522
    %v5524 = vsel %vm3362, %v5523, %v5519
    %v5525 = vlaneseq
    %v5526 = vshrl.u32 %v5525, 7
    %v5527 = vsub.s32 %v3364, %v5526
    %v5528 = vrot.slane %v2498, %v5527
    %v5529 = vsel %vm3369, %v5528, %v5524
    %v5530 = vlaneseq
    %v5531 = vshrl.u32 %v5530, 7
    %v5532 = vsub.s32 %v3371, %v5531
    %v5533 = vrot.slane %v2499, %v5532
    %v5534 = vsel %vm3376, %v5533, %v5529
    %v5535 = vlaneseq
    %v5536 = vshrl.u32 %v5535, 7
    %v5537 = vsub.s32 %v3378, %v5536
    %v5538 = vrot.slane %v2500, %v5537
    %v5539 = vsel %vm3383, %v5538, %v5534
    %v5540 = vlaneseq
    %v5541 = vshrl.u32 %v5540, 7
    %v5542 = vsub.s32 %v3385, %v5541
    %v5543 = vrot.slane %v2501, %v5542
    %v5544 = vsel %vm3390, %v5543, %v5539
    %v5545 = vlaneseq
    %v5546 = vshrl.u32 %v5545, 7
    %v5547 = vsub.s32 %v3392, %v5546
    %v5548 = vrot.slane %v2502, %v5547
    %v5549 = vsel %vm3397, %v5548, %v5544
    %v5550 = vlaneseq
    %v5551 = vshrl.u32 %v5550, 7
    %v5552 = vsub.s32 %v3399, %v5551
    %v5553 = vrot.slane %v2503, %v5552
    %v5554 = vsel %vm3404, %v5553, %v5549
    %v5555 = vlaneseq
    %v5556 = vshrl.u32 %v5555, 7
    %v5557 = vsub.s32 %v3406, %v5556
    %v5558 = vrot.slane %v2504, %v5557
    %v5559 = vsel %vm3411, %v5558, %v5554
    %v5560 = vlaneseq
    %v5561 = vshrl.u32 %v5560, 7
    %v5562 = vsub.s32 %v3413, %v5561
    %v5563 = vrot.slane %v2505, %v5562
    %v5564 = vsel %vm3418, %v5563, %v5559
    %v5565 = vlaneseq
    %v5566 = vshrl.u32 %v5565, 7
    %v5567 = vsub.s32 %v3420, %v5566
    %v5568 = vrot.slane %v2506, %v5567
    %v5569 = vsel %vm3425, %v5568, %v5564
    %v5570 = vlaneseq
    %v5571 = vshrl.u32 %v5570, 7
    %v5572 = vsub.s32 %v3427, %v5571
    %v5573 = vrot.slane %v2507, %v5572
    %v5574 = vsel %vm3432, %v5573, %v5569
    %v5575 = vlaneseq
    %v5576 = vshrl.u32 %v5575, 7
    %v5577 = vsub.s32 %v3434, %v5576
    %v5578 = vrot.slane %v2508, %v5577
    %v5579 = vsel %vm3439, %v5578, %v5574
    %v5580 = vlaneseq
    %v5581 = vshrl.u32 %v5580, 7
    %v5582 = vsub.s32 %v3441, %v5581
    %v5583 = vrot.slane %v2509, %v5582
    %v5584 = vsel %vm3446, %v5583, %v5579
    %v5585 = vlaneseq
    %v5586 = vshrl.u32 %v5585, 7
    %v5587 = vsub.s32 %v3448, %v5586
    %v5588 = vrot.slane %v2510, %v5587
    %v5589 = vsel %vm3453, %v5588, %v5584
    %v5590 = vlaneseq
    %v5591 = vshrl.u32 %v5590, 7
    %v5592 = vsub.s32 %v3455, %v5591
    %v5593 = vrot.slane %v2511, %v5592
    %v5594 = vsel %vm3460, %v5593, %v5589
    %v5595 = vlaneseq
    %v5596 = vshrl.u32 %v5595, 7
    %v5597 = vsub.s32 %v3352, %v5596
    %v5598 = vrot.slane %v2512, %v5597
    %v5599 = vlaneseq
    %v5600 = vshrl.u32 %v5599, 7
    %v5601 = vsub.s32 %v3357, %v5600
    %v5602 = vrot.slane %v2513, %v5601
    %v5603 = vsel %vm3362, %v5602, %v5598
    %v5604 = vlaneseq
    %v5605 = vshrl.u32 %v5604, 7
    %v5606 = vsub.s32 %v3364, %v5605
    %v5607 = vrot.slane %v2514, %v5606
    %v5608 = vsel %vm3369, %v5607, %v5603
    %v5609 = vlaneseq
    %v5610 = vshrl.u32 %v5609, 7
    %v5611 = vsub.s32 %v3371, %v5610
    %v5612 = vrot.slane %v2515, %v5611
    %v5613 = vsel %vm3376, %v5612, %v5608
    %v5614 = vlaneseq
    %v5615 = vshrl.u32 %v5614, 7
    %v5616 = vsub.s32 %v3378, %v5615
    %v5617 = vrot.slane %v2516, %v5616
    %v5618 = vsel %vm3383, %v5617, %v5613
    %v5619 = vlaneseq
    %v5620 = vshrl.u32 %v5619, 7
    %v5621 = vsub.s32 %v3385, %v5620
    %v5622 = vrot.slane %v2517, %v5621
    %v5623 = vsel %vm3390, %v5622, %v5618
    %v5624 = vlaneseq
    %v5625 = vshrl.u32 %v5624, 7
    %v5626 = vsub.s32 %v3392, %v5625
    %v5627 = vrot.slane %v2518, %v5626
    %v5628 = vsel %vm3397, %v5627, %v5623
    %v5629 = vlaneseq
    %v5630 = vshrl.u32 %v5629, 7
    %v5631 = vsub.s32 %v3399, %v5630
    %v5632 = vrot.slane %v2519, %v5631
    %v5633 = vsel %vm3404, %v5632, %v5628
    %v5634 = vlaneseq
    %v5635 = vshrl.u32 %v5634, 7
    %v5636 = vsub.s32 %v3406, %v5635
    %v5637 = vrot.slane %v2520, %v5636
    %v5638 = vsel %vm3411, %v5637, %v5633
    %v5639 = vlaneseq
    %v5640 = vshrl.u32 %v5639, 7
    %v5641 = vsub.s32 %v3413, %v5640
    %v5642 = vrot.slane %v2521, %v5641
    %v5643 = vsel %vm3418, %v5642, %v5638
    %v5644 = vlaneseq
    %v5645 = vshrl.u32 %v5644, 7
    %v5646 = vsub.s32 %v3420, %v5645
    %v5647 = vrot.slane %v2522, %v5646
    %v5648 = vsel %vm3425, %v5647, %v5643
    %v5649 = vlaneseq
    %v5650 = vshrl.u32 %v5649, 7
    %v5651 = vsub.s32 %v3427, %v5650
    %v5652 = vrot.slane %v2523, %v5651
    %v5653 = vsel %vm3432, %v5652, %v5648
    %v5654 = vlaneseq
    %v5655 = vshrl.u32 %v5654, 7
    %v5656 = vsub.s32 %v3434, %v5655
    %v5657 = vrot.slane %v2524, %v5656
    %v5658 = vsel %vm3439, %v5657, %v5653
    %v5659 = vlaneseq
    %v5660 = vshrl.u32 %v5659, 7
    %v5661 = vsub.s32 %v3441, %v5660
    %v5662 = vrot.slane %v2525, %v5661
    %v5663 = vsel %vm3446, %v5662, %v5658
    %v5664 = vlaneseq
    %v5665 = vshrl.u32 %v5664, 7
    %v5666 = vsub.s32 %v3448, %v5665
    %v5667 = vrot.slane %v2526, %v5666
    %v5668 = vsel %vm3453, %v5667, %v5663
    %v5669 = vlaneseq
    %v5670 = vshrl.u32 %v5669, 7
    %v5671 = vsub.s32 %v3455, %v5670
    %v5672 = vrot.slane %v2527, %v5671
    %v5673 = vsel %vm3460, %v5672, %v5668
    %v5674 = vlaneseq
    %v5675 = vshrl.u32 %v5674, 7
    %v5676 = vsub.s32 %v3352, %v5675
    %v5677 = vrot.slane %v2528, %v5676
    %v5678 = vlaneseq
    %v5679 = vshrl.u32 %v5678, 7
    %v5680 = vsub.s32 %v3357, %v5679
    %v5681 = vrot.slane %v2529, %v5680
    %v5682 = vsel %vm3362, %v5681, %v5677
    %v5683 = vlaneseq
    %v5684 = vshrl.u32 %v5683, 7
    %v5685 = vsub.s32 %v3364, %v5684
    %v5686 = vrot.slane %v2530, %v5685
    %v5687 = vsel %vm3369, %v5686, %v5682
    %v5688 = vlaneseq
    %v5689 = vshrl.u32 %v5688, 7
    %v5690 = vsub.s32 %v3371, %v5689
    %v5691 = vrot.slane %v2531, %v5690
    %v5692 = vsel %vm3376, %v5691, %v5687
    %v5693 = vlaneseq
    %v5694 = vshrl.u32 %v5693, 7
    %v5695 = vsub.s32 %v3378, %v5694
    %v5696 = vrot.slane %v2532, %v5695
    %v5697 = vsel %vm3383, %v5696, %v5692
    %v5698 = vlaneseq
    %v5699 = vshrl.u32 %v5698, 7
    %v5700 = vsub.s32 %v3385, %v5699
    %v5701 = vrot.slane %v2533, %v5700
    %v5702 = vsel %vm3390, %v5701, %v5697
    %v5703 = vlaneseq
    %v5704 = vshrl.u32 %v5703, 7
    %v5705 = vsub.s32 %v3392, %v5704
    %v5706 = vrot.slane %v2534, %v5705
    %v5707 = vsel %vm3397, %v5706, %v5702
    %v5708 = vlaneseq
    %v5709 = vshrl.u32 %v5708, 7
    %v5710 = vsub.s32 %v3399, %v5709
    %v5711 = vrot.slane %v2535, %v5710
    %v5712 = vsel %vm3404, %v5711, %v5707
    %v5713 = vlaneseq
    %v5714 = vshrl.u32 %v5713, 7
    %v5715 = vsub.s32 %v3406, %v5714
    %v5716 = vrot.slane %v2536, %v5715
    %v5717 = vsel %vm3411, %v5716, %v5712
    %v5718 = vlaneseq
    %v5719 = vshrl.u32 %v5718, 7
    %v5720 = vsub.s32 %v3413, %v5719
    %v5721 = vrot.slane %v2537, %v5720
    %v5722 = vsel %vm3418, %v5721, %v5717
    %v5723 = vlaneseq
    %v5724 = vshrl.u32 %v5723, 7
    %v5725 = vsub.s32 %v3420, %v5724
    %v5726 = vrot.slane %v2538, %v5725
    %v5727 = vsel %vm3425, %v5726, %v5722
    %v5728 = vlaneseq
    %v5729 = vshrl.u32 %v5728, 7
    %v5730 = vsub.s32 %v3427, %v5729
    %v5731 = vrot.slane %v2539, %v5730
    %v5732 = vsel %vm3432, %v5731, %v5727
    %v5733 = vlaneseq
    %v5734 = vshrl.u32 %v5733, 7
    %v5735 = vsub.s32 %v3434, %v5734
    %v5736 = vrot.slane %v2540, %v5735
    %v5737 = vsel %vm3439, %v5736, %v5732
    %v5738 = vlaneseq
    %v5739 = vshrl.u32 %v5738, 7
    %v5740 = vsub.s32 %v3441, %v5739
    %v5741 = vrot.slane %v2541, %v5740
    %v5742 = vsel %vm3446, %v5741, %v5737
    %v5743 = vlaneseq
    %v5744 = vshrl.u32 %v5743, 7
    %v5745 = vsub.s32 %v3448, %v5744
    %v5746 = vrot.slane %v2542, %v5745
    %v5747 = vsel %vm3453, %v5746, %v5742
    %v5748 = vlaneseq
    %v5749 = vshrl.u32 %v5748, 7
    %v5750 = vsub.s32 %v3455, %v5749
    %v5751 = vrot.slane %v2543, %v5750
    %v5752 = vsel %vm3460, %v5751, %v5747
    %v5753 = vlaneseq
    %v5754 = vshrl.u32 %v5753, 7
    %v5755 = vsub.s32 %v3352, %v5754
    %v5756 = vrot.slane %v2544, %v5755
    %v5757 = vlaneseq
    %v5758 = vshrl.u32 %v5757, 7
    %v5759 = vsub.s32 %v3357, %v5758
    %v5760 = vrot.slane %v2545, %v5759
    %v5761 = vsel %vm3362, %v5760, %v5756
    %v5762 = vlaneseq
    %v5763 = vshrl.u32 %v5762, 7
    %v5764 = vsub.s32 %v3364, %v5763
    %v5765 = vrot.slane %v2546, %v5764
    %v5766 = vsel %vm3369, %v5765, %v5761
    %v5767 = vlaneseq
    %v5768 = vshrl.u32 %v5767, 7
    %v5769 = vsub.s32 %v3371, %v5768
    %v5770 = vrot.slane %v2547, %v5769
    %v5771 = vsel %vm3376, %v5770, %v5766
    %v5772 = vlaneseq
    %v5773 = vshrl.u32 %v5772, 7
    %v5774 = vsub.s32 %v3378, %v5773
    %v5775 = vrot.slane %v2548, %v5774
    %v5776 = vsel %vm3383, %v5775, %v5771
    %v5777 = vlaneseq
    %v5778 = vshrl.u32 %v5777, 7
    %v5779 = vsub.s32 %v3385, %v5778
    %v5780 = vrot.slane %v2549, %v5779
    %v5781 = vsel %vm3390, %v5780, %v5776
    %v5782 = vlaneseq
    %v5783 = vshrl.u32 %v5782, 7
    %v5784 = vsub.s32 %v3392, %v5783
    %v5785 = vrot.slane %v2550, %v5784
    %v5786 = vsel %vm3397, %v5785, %v5781
    %v5787 = vlaneseq
    %v5788 = vshrl.u32 %v5787, 7
    %v5789 = vsub.s32 %v3399, %v5788
    %v5790 = vrot.slane %v2551, %v5789
    %v5791 = vsel %vm3404, %v5790, %v5786
    %v5792 = vlaneseq
    %v5793 = vshrl.u32 %v5792, 7
    %v5794 = vsub.s32 %v3406, %v5793
    %v5795 = vrot.slane %v2552, %v5794
    %v5796 = vsel %vm3411, %v5795, %v5791
    %v5797 = vlaneseq
    %v5798 = vshrl.u32 %v5797, 7
    %v5799 = vsub.s32 %v3413, %v5798
    %v5800 = vrot.slane %v2553, %v5799
    %v5801 = vsel %vm3418, %v5800, %v5796
    %v5802 = vlaneseq
    %v5803 = vshrl.u32 %v5802, 7
    %v5804 = vsub.s32 %v3420, %v5803
    %v5805 = vrot.slane %v2554, %v5804
    %v5806 = vsel %vm3425, %v5805, %v5801
    %v5807 = vlaneseq
    %v5808 = vshrl.u32 %v5807, 7
    %v5809 = vsub.s32 %v3427, %v5808
    %v5810 = vrot.slane %v2555, %v5809
    %v5811 = vsel %vm3432, %v5810, %v5806
    %v5812 = vlaneseq
    %v5813 = vshrl.u32 %v5812, 7
    %v5814 = vsub.s32 %v3434, %v5813
    %v5815 = vrot.slane %v2556, %v5814
    %v5816 = vsel %vm3439, %v5815, %v5811
    %v5817 = vlaneseq
    %v5818 = vshrl.u32 %v5817, 7
    %v5819 = vsub.s32 %v3441, %v5818
    %v5820 = vrot.slane %v2557, %v5819
    %v5821 = vsel %vm3446, %v5820, %v5816
    %v5822 = vlaneseq
    %v5823 = vshrl.u32 %v5822, 7
    %v5824 = vsub.s32 %v3448, %v5823
    %v5825 = vrot.slane %v2558, %v5824
    %v5826 = vsel %vm3453, %v5825, %v5821
    %v5827 = vlaneseq
    %v5828 = vshrl.u32 %v5827, 7
    %v5829 = vsub.s32 %v3455, %v5828
    %v5830 = vrot.slane %v2559, %v5829
    %v5831 = vsel %vm3460, %v5830, %v5826
    %v5832 = vlaneseq
    %v5833 = vshrl.u32 %v5832, 7
    %v5834 = vsub.s32 %v3352, %v5833
    %v5835 = vrot.slane %v2560, %v5834
    %v5836 = vlaneseq
    %v5837 = vshrl.u32 %v5836, 7
    %v5838 = vsub.s32 %v3357, %v5837
    %v5839 = vrot.slane %v2561, %v5838
    %v5840 = vsel %vm3362, %v5839, %v5835
    %v5841 = vlaneseq
    %v5842 = vshrl.u32 %v5841, 7
    %v5843 = vsub.s32 %v3364, %v5842
    %v5844 = vrot.slane %v2562, %v5843
    %v5845 = vsel %vm3369, %v5844, %v5840
    %v5846 = vlaneseq
    %v5847 = vshrl.u32 %v5846, 7
    %v5848 = vsub.s32 %v3371, %v5847
    %v5849 = vrot.slane %v2563, %v5848
    %v5850 = vsel %vm3376, %v5849, %v5845
    %v5851 = vlaneseq
    %v5852 = vshrl.u32 %v5851, 7
    %v5853 = vsub.s32 %v3378, %v5852
    %v5854 = vrot.slane %v2564, %v5853
    %v5855 = vsel %vm3383, %v5854, %v5850
    %v5856 = vlaneseq
    %v5857 = vshrl.u32 %v5856, 7
    %v5858 = vsub.s32 %v3385, %v5857
    %v5859 = vrot.slane %v2565, %v5858
    %v5860 = vsel %vm3390, %v5859, %v5855
    %v5861 = vlaneseq
    %v5862 = vshrl.u32 %v5861, 7
    %v5863 = vsub.s32 %v3392, %v5862
    %v5864 = vrot.slane %v2566, %v5863
    %v5865 = vsel %vm3397, %v5864, %v5860
    %v5866 = vlaneseq
    %v5867 = vshrl.u32 %v5866, 7
    %v5868 = vsub.s32 %v3399, %v5867
    %v5869 = vrot.slane %v2567, %v5868
    %v5870 = vsel %vm3404, %v5869, %v5865
    %v5871 = vlaneseq
    %v5872 = vshrl.u32 %v5871, 7
    %v5873 = vsub.s32 %v3406, %v5872
    %v5874 = vrot.slane %v2568, %v5873
    %v5875 = vsel %vm3411, %v5874, %v5870
    %v5876 = vlaneseq
    %v5877 = vshrl.u32 %v5876, 7
    %v5878 = vsub.s32 %v3413, %v5877
    %v5879 = vrot.slane %v2569, %v5878
    %v5880 = vsel %vm3418, %v5879, %v5875
    %v5881 = vlaneseq
    %v5882 = vshrl.u32 %v5881, 7
    %v5883 = vsub.s32 %v3420, %v5882
    %v5884 = vrot.slane %v2570, %v5883
    %v5885 = vsel %vm3425, %v5884, %v5880
    %v5886 = vlaneseq
    %v5887 = vshrl.u32 %v5886, 7
    %v5888 = vsub.s32 %v3427, %v5887
    %v5889 = vrot.slane %v2571, %v5888
    %v5890 = vsel %vm3432, %v5889, %v5885
    %v5891 = vlaneseq
    %v5892 = vshrl.u32 %v5891, 7
    %v5893 = vsub.s32 %v3434, %v5892
    %v5894 = vrot.slane %v2572, %v5893
    %v5895 = vsel %vm3439, %v5894, %v5890
    %v5896 = vlaneseq
    %v5897 = vshrl.u32 %v5896, 7
    %v5898 = vsub.s32 %v3441, %v5897
    %v5899 = vrot.slane %v2573, %v5898
    %v5900 = vsel %vm3446, %v5899, %v5895
    %v5901 = vlaneseq
    %v5902 = vshrl.u32 %v5901, 7
    %v5903 = vsub.s32 %v3448, %v5902
    %v5904 = vrot.slane %v2574, %v5903
    %v5905 = vsel %vm3453, %v5904, %v5900
    %v5906 = vlaneseq
    %v5907 = vshrl.u32 %v5906, 7
    %v5908 = vsub.s32 %v3455, %v5907
    %v5909 = vrot.slane %v2575, %v5908
    %v5910 = vsel %vm3460, %v5909, %v5905
    %vm5911 = vcmask 1041409
    %v5912 = vsel %vm5911, %v4725, %v3461
    %v5913 = vsel %vm5911, %v4804, %v3540
    %v5914 = vsel %vm5911, %v4883, %v3619
    %v5915 = vsel %vm5911, %v4962, %v3698
    %v5916 = vsel %vm5911, %v5041, %v3777
    %v5917 = vsel %vm5911, %v5120, %v3856
    %v5918 = vsel %vm5911, %v5199, %v3935
    %v5919 = vsel %vm5911, %v5278, %v4014
    %v5920 = vsel %vm5911, %v5357, %v4093
    %v5921 = vsel %vm5911, %v5436, %v4172
    %v5922 = vsel %vm5911, %v5515, %v4251
    %v5923 = vsel %vm5911, %v5594, %v4330
    %v5924 = vsel %vm5911, %v5673, %v4409
    %v5925 = vsel %vm5911, %v5752, %v4488
    %v5926 = vsel %vm5911, %v5831, %v4567
    %v5927 = vsel %vm5911, %v5910, %v4646
    %5944 = vmatprep.subr.mxu0 0.0
    %5945 = vmatpush1.msra.mxu0 %v2576
    %5946 = vmatprep.subr.mxu0 0.0
    %5947 = vmatpush1.msra.mxu0 %v2577
    %5948 = vmatprep.subr.mxu0 0.0
    %5949 = vmatpush1.msra.mxu0 %v2578
    %5950 = vmatprep.subr.mxu0 0.0
    %5951 = vmatpush1.msra.mxu0 %v2579
    %5952 = vmatprep.subr.mxu0 0.0
    %5953 = vmatpush1.msra.mxu0 %v2580
    %5954 = vmatprep.subr.mxu0 0.0
    %5955 = vmatpush1.msra.mxu0 %v2581
    %5956 = vmatprep.subr.mxu0 0.0
    %5957 = vmatpush1.msra.mxu0 %v2582
    %5958 = vmatprep.subr.mxu0 0.0
    %5959 = vmatpush1.msra.mxu0 %v2583
    %5960 = vmatprep.subr.mxu0 0.0
    %5961 = vmatpush1.msra.mxu0 %v2584
    %5962 = vmatprep.subr.mxu0 0.0
    %5963 = vmatpush1.msra.mxu0 %v2585
    %5964 = vmatprep.subr.mxu0 0.0
    %5965 = vmatpush1.msra.mxu0 %v2586
    %5966 = vmatprep.subr.mxu0 0.0
    %5967 = vmatpush1.msra.mxu0 %v2587
    %5968 = vmatprep.subr.mxu0 0.0
    %5969 = vmatpush1.msra.mxu0 %v2588
    %5970 = vmatprep.subr.mxu0 0.0
    %5971 = vmatpush1.msra.mxu0 %v2589
    %5972 = vmatprep.subr.mxu0 0.0
    %5973 = vmatpush1.msra.mxu0 %v2590
    %5974 = vmatprep.subr.mxu0 0.0
    %5975 = vmatpush1.msra.mxu0 %v2591
    %5976 = vmatprep.subr.mxu0 0.0
    %5977 = vmatpush1.msra.mxu0 %v2592
    %5978 = vmatprep.subr.mxu0 0.0
    %5979 = vmatpush1.msra.mxu0 %v2593
    %5980 = vmatprep.subr.mxu0 0.0
    %5981 = vmatpush1.msra.mxu0 %v2594
    %5982 = vmatprep.subr.mxu0 0.0
    %5983 = vmatpush1.msra.mxu0 %v2595
    %5984 = vmatprep.subr.mxu0 0.0
    %5985 = vmatpush1.msra.mxu0 %v2596
    %5986 = vmatprep.subr.mxu0 0.0
    %5987 = vmatpush1.msra.mxu0 %v2597
    %5988 = vmatprep.subr.mxu0 0.0
    %5989 = vmatpush1.msra.mxu0 %v2598
    %5990 = vmatprep.subr.mxu0 0.0
    %5991 = vmatpush1.msra.mxu0 %v2599
    %5992 = vmatprep.subr.mxu0 0.0
    %5993 = vmatpush1.msra.mxu0 %v2600
    %5994 = vmatprep.subr.mxu0 0.0
    %5995 = vmatpush1.msra.mxu0 %v2601
    %5996 = vmatprep.subr.mxu0 0.0
    %5997 = vmatpush1.msra.mxu0 %v2602
    %5998 = vmatprep.subr.mxu0 0.0
    %5999 = vmatpush1.msra.mxu0 %v2603
    %6000 = vmatprep.subr.mxu0 0.0
    %6001 = vmatpush1.msra.mxu0 %v2604
    %6002 = vmatprep.subr.mxu0 0.0
    %6003 = vmatpush1.msra.mxu0 %v2605
    %6004 = vmatprep.subr.mxu0 0.0
    %6005 = vmatpush1.msra.mxu0 %v2606
    %6006 = vmatprep.subr.mxu0 0.0
    %6007 = vmatpush1.msra.mxu0 %v2607
    %6008 = vmatprep.mubr.f32.mxu0 %v5913
    %6009 = vmatmul.mubr.f32.gmra.mrb[0].mxu0 %v5912
    %v6010 = vpop.f32.mrb[0].mxu0
    %v6011 = vadd.f32 %v2837, %v6010
    %v6012 = vpop.f32.mrb[0].mxu0
    %6013 = vdwg.mxu0
    %6014 = vmatprep.subr.mxu0 0.0
    %6015 = vmatpush1.msra.mxu0 %v2608
    %6016 = vmatprep.subr.mxu0 0.0
    %6017 = vmatpush1.msra.mxu0 %v2609
    %6018 = vmatprep.subr.mxu0 0.0
    %6019 = vmatpush1.msra.mxu0 %v2610
    %6020 = vmatprep.subr.mxu0 0.0
    %6021 = vmatpush1.msra.mxu0 %v2611
    %6022 = vmatprep.subr.mxu0 0.0
    %6023 = vmatpush1.msra.mxu0 %v2612
    %6024 = vmatprep.subr.mxu0 0.0
    %6025 = vmatpush1.msra.mxu0 %v2613
    %6026 = vmatprep.subr.mxu0 0.0
    %6027 = vmatpush1.msra.mxu0 %v2614
    %6028 = vmatprep.subr.mxu0 0.0
    %6029 = vmatpush1.msra.mxu0 %v2615
    %6030 = vmatprep.subr.mxu0 0.0
    %6031 = vmatpush1.msra.mxu0 %v2616
    %6032 = vmatprep.subr.mxu0 0.0
    %6033 = vmatpush1.msra.mxu0 %v2617
    %6034 = vmatprep.subr.mxu0 0.0
    %6035 = vmatpush1.msra.mxu0 %v2618
    %6036 = vmatprep.subr.mxu0 0.0
    %6037 = vmatpush1.msra.mxu0 %v2619
    %6038 = vmatprep.subr.mxu0 0.0
    %6039 = vmatpush1.msra.mxu0 %v2620
    %6040 = vmatprep.subr.mxu0 0.0
    %6041 = vmatpush1.msra.mxu0 %v2621
    %6042 = vmatprep.subr.mxu0 0.0
    %6043 = vmatpush1.msra.mxu0 %v2622
    %6044 = vmatprep.subr.mxu0 0.0
    %6045 = vmatpush1.msra.mxu0 %v2623
    %6046 = vmatprep.subr.mxu0 0.0
    %6047 = vmatpush1.msra.mxu0 %v2624
    %6048 = vmatprep.subr.mxu0 0.0
    %6049 = vmatpush1.msra.mxu0 %v2625
    %6050 = vmatprep.subr.mxu0 0.0
    %6051 = vmatpush1.msra.mxu0 %v2626
    %6052 = vmatprep.subr.mxu0 0.0
    %6053 = vmatpush1.msra.mxu0 %v2627
    %6054 = vmatprep.subr.mxu0 0.0
    %6055 = vmatpush1.msra.mxu0 %v2628
    %6056 = vmatprep.subr.mxu0 0.0
    %6057 = vmatpush1.msra.mxu0 %v2629
    %6058 = vmatprep.subr.mxu0 0.0
    %6059 = vmatpush1.msra.mxu0 %v2630
    %6060 = vmatprep.subr.mxu0 0.0
    %6061 = vmatpush1.msra.mxu0 %v2631
    %6062 = vmatprep.subr.mxu0 0.0
    %6063 = vmatpush1.msra.mxu0 %v2632
    %6064 = vmatprep.subr.mxu0 0.0
    %6065 = vmatpush1.msra.mxu0 %v2633
    %6066 = vmatprep.subr.mxu0 0.0
    %6067 = vmatpush1.msra.mxu0 %v2634
    %6068 = vmatprep.subr.mxu0 0.0
    %6069 = vmatpush1.msra.mxu0 %v2635
    %6070 = vmatprep.subr.mxu0 0.0
    %6071 = vmatpush1.msra.mxu0 %v2636
    %6072 = vmatprep.subr.mxu0 0.0
    %6073 = vmatpush1.msra.mxu0 %v2637
    %6074 = vmatprep.subr.mxu0 0.0
    %6075 = vmatpush1.msra.mxu0 %v2638
    %6076 = vmatprep.subr.mxu0 0.0
    %6077 = vmatpush1.msra.mxu0 %v2639
    %6078 = vmatprep.mubr.f32.mxu0 %v5915
    %6079 = vmatmul.mubr.f32.gmra.mrb[0].mxu0 %v5914
    %v6080 = vpop.f32.mrb[0].mxu0
    %v6081 = vadd.f32 %v6011, %v6080
    %v6082 = vpop.f32.mrb[0].mxu0
    %6083 = vdwg.mxu0
    %6084 = vmatprep.subr.mxu0 0.0
    %6085 = vmatpush1.msra.mxu0 %v2640
    %6086 = vmatprep.subr.mxu0 0.0
    %6087 = vmatpush1.msra.mxu0 %v2641
    %6088 = vmatprep.subr.mxu0 0.0
    %6089 = vmatpush1.msra.mxu0 %v2642
    %6090 = vmatprep.subr.mxu0 0.0
    %6091 = vmatpush1.msra.mxu0 %v2643
    %6092 = vmatprep.subr.mxu0 0.0
    %6093 = vmatpush1.msra.mxu0 %v2644
    %6094 = vmatprep.subr.mxu0 0.0
    %6095 = vmatpush1.msra.mxu0 %v2645
    %6096 = vmatprep.subr.mxu0 0.0
    %6097 = vmatpush1.msra.mxu0 %v2646
    %6098 = vmatprep.subr.mxu0 0.0
    %6099 = vmatpush1.msra.mxu0 %v2647
    %6100 = vmatprep.subr.mxu0 0.0
    %6101 = vmatpush1.msra.mxu0 %v2648
    %6102 = vmatprep.subr.mxu0 0.0
    %6103 = vmatpush1.msra.mxu0 %v2649
    %6104 = vmatprep.subr.mxu0 0.0
    %6105 = vmatpush1.msra.mxu0 %v2650
    %6106 = vmatprep.subr.mxu0 0.0
    %6107 = vmatpush1.msra.mxu0 %v2651
    %6108 = vmatprep.subr.mxu0 0.0
    %6109 = vmatpush1.msra.mxu0 %v2652
    %6110 = vmatprep.subr.mxu0 0.0
    %6111 = vmatpush1.msra.mxu0 %v2653
    %6112 = vmatprep.subr.mxu0 0.0
    %6113 = vmatpush1.msra.mxu0 %v2654
    %6114 = vmatprep.subr.mxu0 0.0
    %6115 = vmatpush1.msra.mxu0 %v2655
    %6116 = vmatprep.subr.mxu0 0.0
    %6117 = vmatpush1.msra.mxu0 %v2656
    %6118 = vmatprep.subr.mxu0 0.0
    %6119 = vmatpush1.msra.mxu0 %v2657
    %6120 = vmatprep.subr.mxu0 0.0
    %6121 = vmatpush1.msra.mxu0 %v2658
    %6122 = vmatprep.subr.mxu0 0.0
    %6123 = vmatpush1.msra.mxu0 %v2659
    %6124 = vmatprep.subr.mxu0 0.0
    %6125 = vmatpush1.msra.mxu0 %v2660
    %6126 = vmatprep.subr.mxu0 0.0
    %6127 = vmatpush1.msra.mxu0 %v2661
    %6128 = vmatprep.subr.mxu0 0.0
    %6129 = vmatpush1.msra.mxu0 %v2662
    %6130 = vmatprep.subr.mxu0 0.0
    %6131 = vmatpush1.msra.mxu0 %v2663
    %6132 = vmatprep.subr.mxu0 0.0
    %6133 = vmatpush1.msra.mxu0 %v2664
    %6134 = vmatprep.subr.mxu0 0.0
    %6135 = vmatpush1.msra.mxu0 %v2665
    %6136 = vmatprep.subr.mxu0 0.0
    %6137 = vmatpush1.msra.mxu0 %v2666
    %6138 = vmatprep.subr.mxu0 0.0
    %6139 = vmatpush1.msra.mxu0 %v2667
    %6140 = vmatprep.subr.mxu0 0.0
    %6141 = vmatpush1.msra.mxu0 %v2668
    %6142 = vmatprep.subr.mxu0 0.0
    %6143 = vmatpush1.msra.mxu0 %v2669
    %6144 = vmatprep.subr.mxu0 0.0
    %6145 = vmatpush1.msra.mxu0 %v2670
    %6146 = vmatprep.subr.mxu0 0.0
    %6147 = vmatpush1.msra.mxu0 %v2671
    %6148 = vmatprep.mubr.f32.mxu0 %v5917
    %6149 = vmatmul.mubr.f32.gmra.mrb[0].mxu0 %v5916
    %v6150 = vpop.f32.mrb[0].mxu0
    %v6151 = vadd.f32 %v6081, %v6150
    %v6152 = vpop.f32.mrb[0].mxu0
    %6153 = vdwg.mxu0
    %6154 = vmatprep.subr.mxu0 0.0
    %6155 = vmatpush1.msra.mxu0 %v2672
    %6156 = vmatprep.subr.mxu0 0.0
    %6157 = vmatpush1.msra.mxu0 %v2673
    %6158 = vmatprep.subr.mxu0 0.0
    %6159 = vmatpush1.msra.mxu0 %v2674
    %6160 = vmatprep.subr.mxu0 0.0
    %6161 = vmatpush1.msra.mxu0 %v2675
    %6162 = vmatprep.subr.mxu0 0.0
    %6163 = vmatpush1.msra.mxu0 %v2676
    %6164 = vmatprep.subr.mxu0 0.0
    %6165 = vmatpush1.msra.mxu0 %v2677
    %6166 = vmatprep.subr.mxu0 0.0
    %6167 = vmatpush1.msra.mxu0 %v2678
    %6168 = vmatprep.subr.mxu0 0.0
    %6169 = vmatpush1.msra.mxu0 %v2679
    %6170 = vmatprep.subr.mxu0 0.0
    %6171 = vmatpush1.msra.mxu0 %v2680
    %6172 = vmatprep.subr.mxu0 0.0
    %6173 = vmatpush1.msra.mxu0 %v2681
    %6174 = vmatprep.subr.mxu0 0.0
    %6175 = vmatpush1.msra.mxu0 %v2682
    %6176 = vmatprep.subr.mxu0 0.0
    %6177 = vmatpush1.msra.mxu0 %v2683
    %6178 = vmatprep.subr.mxu0 0.0
    %6179 = vmatpush1.msra.mxu0 %v2684
    %6180 = vmatprep.subr.mxu0 0.0
    %6181 = vmatpush1.msra.mxu0 %v2685
    %6182 = vmatprep.subr.mxu0 0.0
    %6183 = vmatpush1.msra.mxu0 %v2686
    %6184 = vmatprep.subr.mxu0 0.0
    %6185 = vmatpush1.msra.mxu0 %v2687
    %6186 = vmatprep.subr.mxu0 0.0
    %6187 = vmatpush1.msra.mxu0 %v2688
    %6188 = vmatprep.subr.mxu0 0.0
    %6189 = vmatpush1.msra.mxu0 %v2689
    %6190 = vmatprep.subr.mxu0 0.0
    %6191 = vmatpush1.msra.mxu0 %v2690
    %6192 = vmatprep.subr.mxu0 0.0
    %6193 = vmatpush1.msra.mxu0 %v2691
    %6194 = vmatprep.subr.mxu0 0.0
    %6195 = vmatpush1.msra.mxu0 %v2692
    %6196 = vmatprep.subr.mxu0 0.0
    %6197 = vmatpush1.msra.mxu0 %v2693
    %6198 = vmatprep.subr.mxu0 0.0
    %6199 = vmatpush1.msra.mxu0 %v2694
    %6200 = vmatprep.subr.mxu0 0.0
    %6201 = vmatpush1.msra.mxu0 %v2695
    %6202 = vmatprep.subr.mxu0 0.0
    %6203 = vmatpush1.msra.mxu0 %v2696
    %6204 = vmatprep.subr.mxu0 0.0
    %6205 = vmatpush1.msra.mxu0 %v2697
    %6206 = vmatprep.subr.mxu0 0.0
    %6207 = vmatpush1.msra.mxu0 %v2698
    %6208 = vmatprep.subr.mxu0 0.0
    %6209 = vmatpush1.msra.mxu0 %v2699
    %6210 = vmatprep.subr.mxu0 0.0
    %6211 = vmatpush1.msra.mxu0 %v2700
    %6212 = vmatprep.subr.mxu0 0.0
    %6213 = vmatpush1.msra.mxu0 %v2701
    %6214 = vmatprep.subr.mxu0 0.0
    %6215 = vmatpush1.msra.mxu0 %v2702
    %6216 = vmatprep.subr.mxu0 0.0
    %6217 = vmatpush1.msra.mxu0 %v2703
    %6218 = vmatprep.mubr.f32.mxu0 %v5919
    %6219 = vmatmul.mubr.f32.gmra.mrb[0].mxu0 %v5918
    %v6220 = vpop.f32.mrb[0].mxu0
    %v6221 = vadd.f32 %v6151, %v6220
    %v6222 = vpop.f32.mrb[0].mxu0
    %6223 = vdwg.mxu0
    %6224 = vmatprep.subr.mxu0 0.0
    %6225 = vmatpush1.msra.mxu0 %v2704
    %6226 = vmatprep.subr.mxu0 0.0
    %6227 = vmatpush1.msra.mxu0 %v2705
    %6228 = vmatprep.subr.mxu0 0.0
    %6229 = vmatpush1.msra.mxu0 %v2706
    %6230 = vmatprep.subr.mxu0 0.0
    %6231 = vmatpush1.msra.mxu0 %v2707
    %6232 = vmatprep.subr.mxu0 0.0
    %6233 = vmatpush1.msra.mxu0 %v2708
    %6234 = vmatprep.subr.mxu0 0.0
    %6235 = vmatpush1.msra.mxu0 %v2709
    %6236 = vmatprep.subr.mxu0 0.0
    %6237 = vmatpush1.msra.mxu0 %v2710
    %6238 = vmatprep.subr.mxu0 0.0
    %6239 = vmatpush1.msra.mxu0 %v2711
    %6240 = vmatprep.subr.mxu0 0.0
    %6241 = vmatpush1.msra.mxu0 %v2712
    %6242 = vmatprep.subr.mxu0 0.0
    %6243 = vmatpush1.msra.mxu0 %v2713
    %6244 = vmatprep.subr.mxu0 0.0
    %6245 = vmatpush1.msra.mxu0 %v2714
    %6246 = vmatprep.subr.mxu0 0.0
    %6247 = vmatpush1.msra.mxu0 %v2715
    %6248 = vmatprep.subr.mxu0 0.0
    %6249 = vmatpush1.msra.mxu0 %v2716
    %6250 = vmatprep.subr.mxu0 0.0
    %6251 = vmatpush1.msra.mxu0 %v2717
    %6252 = vmatprep.subr.mxu0 0.0
    %6253 = vmatpush1.msra.mxu0 %v2718
    %6254 = vmatprep.subr.mxu0 0.0
    %6255 = vmatpush1.msra.mxu0 %v2719
    %6256 = vmatprep.subr.mxu0 0.0
    %6257 = vmatpush1.msra.mxu0 %v2720
    %6258 = vmatprep.subr.mxu0 0.0
    %6259 = vmatpush1.msra.mxu0 %v2721
    %6260 = vmatprep.subr.mxu0 0.0
    %6261 = vmatpush1.msra.mxu0 %v2722
    %6262 = vmatprep.subr.mxu0 0.0
    %6263 = vmatpush1.msra.mxu0 %v2723
    %6264 = vmatprep.subr.mxu0 0.0
    %6265 = vmatpush1.msra.mxu0 %v2724
    %6266 = vmatprep.subr.mxu0 0.0
    %6267 = vmatpush1.msra.mxu0 %v2725
    %6268 = vmatprep.subr.mxu0 0.0
    %6269 = vmatpush1.msra.mxu0 %v2726
    %6270 = vmatprep.subr.mxu0 0.0
    %6271 = vmatpush1.msra.mxu0 %v2727
    %6272 = vmatprep.subr.mxu0 0.0
    %6273 = vmatpush1.msra.mxu0 %v2728
    %6274 = vmatprep.subr.mxu0 0.0
    %6275 = vmatpush1.msra.mxu0 %v2729
    %6276 = vmatprep.subr.mxu0 0.0
    %6277 = vmatpush1.msra.mxu0 %v2730
    %6278 = vmatprep.subr.mxu0 0.0
    %6279 = vmatpush1.msra.mxu0 %v2731
    %6280 = vmatprep.subr.mxu0 0.0
    %6281 = vmatpush1.msra.mxu0 %v2732
    %6282 = vmatprep.subr.mxu0 0.0
    %6283 = vmatpush1.msra.mxu0 %v2733
    %6284 = vmatprep.subr.mxu0 0.0
    %6285 = vmatpush1.msra.mxu0 %v2734
    %6286 = vmatprep.subr.mxu0 0.0
    %6287 = vmatpush1.msra.mxu0 %v2735
    %6288 = vmatprep.mubr.f32.mxu0 %v5921
    %6289 = vmatmul.mubr.f32.gmra.mrb[0].mxu0 %v5920
    %v6290 = vpop.f32.mrb[0].mxu0
    %v6291 = vadd.f32 %v6221, %v6290
    %v6292 = vpop.f32.mrb[0].mxu0
    %6293 = vdwg.mxu0
    %6294 = vmatprep.subr.mxu0 0.0
    %6295 = vmatpush1.msra.mxu0 %v2736
    %6296 = vmatprep.subr.mxu0 0.0
    %6297 = vmatpush1.msra.mxu0 %v2737
    %6298 = vmatprep.subr.mxu0 0.0
    %6299 = vmatpush1.msra.mxu0 %v2738
    %6300 = vmatprep.subr.mxu0 0.0
    %6301 = vmatpush1.msra.mxu0 %v2739
    %6302 = vmatprep.subr.mxu0 0.0
    %6303 = vmatpush1.msra.mxu0 %v2740
    %6304 = vmatprep.subr.mxu0 0.0
    %6305 = vmatpush1.msra.mxu0 %v2741
    %6306 = vmatprep.subr.mxu0 0.0
    %6307 = vmatpush1.msra.mxu0 %v2742
    %6308 = vmatprep.subr.mxu0 0.0
    %6309 = vmatpush1.msra.mxu0 %v2743
    %6310 = vmatprep.subr.mxu0 0.0
    %6311 = vmatpush1.msra.mxu0 %v2744
    %6312 = vmatprep.subr.mxu0 0.0
    %6313 = vmatpush1.msra.mxu0 %v2745
    %6314 = vmatprep.subr.mxu0 0.0
    %6315 = vmatpush1.msra.mxu0 %v2746
    %6316 = vmatprep.subr.mxu0 0.0
    %6317 = vmatpush1.msra.mxu0 %v2747
    %6318 = vmatprep.subr.mxu0 0.0
    %6319 = vmatpush1.msra.mxu0 %v2748
    %6320 = vmatprep.subr.mxu0 0.0
    %6321 = vmatpush1.msra.mxu0 %v2749
    %6322 = vmatprep.subr.mxu0 0.0
    %6323 = vmatpush1.msra.mxu0 %v2750
    %6324 = vmatprep.subr.mxu0 0.0
    %6325 = vmatpush1.msra.mxu0 %v2751
    %6326 = vmatprep.subr.mxu0 0.0
    %6327 = vmatpush1.msra.mxu0 %v2752
    %6328 = vmatprep.subr.mxu0 0.0
    %6329 = vmatpush1.msra.mxu0 %v2753
    %6330 = vmatprep.subr.mxu0 0.0
    %6331 = vmatpush1.msra.mxu0 %v2754
    %6332 = vmatprep.subr.mxu0 0.0
    %6333 = vmatpush1.msra.mxu0 %v2755
    %6334 = vmatprep.subr.mxu0 0.0
    %6335 = vmatpush1.msra.mxu0 %v2756
    %6336 = vmatprep.subr.mxu0 0.0
    %6337 = vmatpush1.msra.mxu0 %v2757
    %6338 = vmatprep.subr.mxu0 0.0
    %6339 = vmatpush1.msra.mxu0 %v2758
    %6340 = vmatprep.subr.mxu0 0.0
    %6341 = vmatpush1.msra.mxu0 %v2759
    %6342 = vmatprep.subr.mxu0 0.0
    %6343 = vmatpush1.msra.mxu0 %v2760
    %6344 = vmatprep.subr.mxu0 0.0
    %6345 = vmatpush1.msra.mxu0 %v2761
    %6346 = vmatprep.subr.mxu0 0.0
    %6347 = vmatpush1.msra.mxu0 %v2762
    %6348 = vmatprep.subr.mxu0 0.0
    %6349 = vmatpush1.msra.mxu0 %v2763
    %6350 = vmatprep.subr.mxu0 0.0
    %6351 = vmatpush1.msra.mxu0 %v2764
    %6352 = vmatprep.subr.mxu0 0.0
    %6353 = vmatpush1.msra.mxu0 %v2765
    %6354 = vmatprep.subr.mxu0 0.0
    %6355 = vmatpush1.msra.mxu0 %v2766
    %6356 = vmatprep.subr.mxu0 0.0
    %6357 = vmatpush1.msra.mxu0 %v2767
    %6358 = vmatprep.mubr.f32.mxu0 %v5923
    %6359 = vmatmul.mubr.f32.gmra.mrb[0].mxu0 %v5922
    %v6360 = vpop.f32.mrb[0].mxu0
    %v6361 = vadd.f32 %v6291, %v6360
    %v6362 = vpop.f32.mrb[0].mxu0
    %6363 = vdwg.mxu0
    %6364 = vmatprep.subr.mxu0 0.0
    %6365 = vmatpush1.msra.mxu0 %v2768
    %6366 = vmatprep.subr.mxu0 0.0
    %6367 = vmatpush1.msra.mxu0 %v2769
    %6368 = vmatprep.subr.mxu0 0.0
    %6369 = vmatpush1.msra.mxu0 %v2770
    %6370 = vmatprep.subr.mxu0 0.0
    %6371 = vmatpush1.msra.mxu0 %v2771
    %6372 = vmatprep.subr.mxu0 0.0
    %6373 = vmatpush1.msra.mxu0 %v2772
    %6374 = vmatprep.subr.mxu0 0.0
    %6375 = vmatpush1.msra.mxu0 %v2773
    %6376 = vmatprep.subr.mxu0 0.0
    %6377 = vmatpush1.msra.mxu0 %v2774
    %6378 = vmatprep.subr.mxu0 0.0
    %6379 = vmatpush1.msra.mxu0 %v2775
    %6380 = vmatprep.subr.mxu0 0.0
    %6381 = vmatpush1.msra.mxu0 %v2776
    %6382 = vmatprep.subr.mxu0 0.0
    %6383 = vmatpush1.msra.mxu0 %v2777
    %6384 = vmatprep.subr.mxu0 0.0
    %6385 = vmatpush1.msra.mxu0 %v2778
    %6386 = vmatprep.subr.mxu0 0.0
    %6387 = vmatpush1.msra.mxu0 %v2779
    %6388 = vmatprep.subr.mxu0 0.0
    %6389 = vmatpush1.msra.mxu0 %v2780
    %6390 = vmatprep.subr.mxu0 0.0
    %6391 = vmatpush1.msra.mxu0 %v2781
    %6392 = vmatprep.subr.mxu0 0.0
    %6393 = vmatpush1.msra.mxu0 %v2782
    %6394 = vmatprep.subr.mxu0 0.0
    %6395 = vmatpush1.msra.mxu0 %v2783
    %6396 = vmatprep.subr.mxu0 0.0
    %6397 = vmatpush1.msra.mxu0 %v2784
    %6398 = vmatprep.subr.mxu0 0.0
    %6399 = vmatpush1.msra.mxu0 %v2785
    %6400 = vmatprep.subr.mxu0 0.0
    %6401 = vmatpush1.msra.mxu0 %v2786
    %6402 = vmatprep.subr.mxu0 0.0
    %6403 = vmatpush1.msra.mxu0 %v2787
    %6404 = vmatprep.subr.mxu0 0.0
    %6405 = vmatpush1.msra.mxu0 %v2788
    %6406 = vmatprep.subr.mxu0 0.0
    %6407 = vmatpush1.msra.mxu0 %v2789
    %6408 = vmatprep.subr.mxu0 0.0
    %6409 = vmatpush1.msra.mxu0 %v2790
    %6410 = vmatprep.subr.mxu0 0.0
    %6411 = vmatpush1.msra.mxu0 %v2791
    %6412 = vmatprep.subr.mxu0 0.0
    %6413 = vmatpush1.msra.mxu0 %v2792
    %6414 = vmatprep.subr.mxu0 0.0
    %6415 = vmatpush1.msra.mxu0 %v2793
    %6416 = vmatprep.subr.mxu0 0.0
    %6417 = vmatpush1.msra.mxu0 %v2794
    %6418 = vmatprep.subr.mxu0 0.0
    %6419 = vmatpush1.msra.mxu0 %v2795
    %6420 = vmatprep.subr.mxu0 0.0
    %6421 = vmatpush1.msra.mxu0 %v2796
    %6422 = vmatprep.subr.mxu0 0.0
    %6423 = vmatpush1.msra.mxu0 %v2797
    %6424 = vmatprep.subr.mxu0 0.0
    %6425 = vmatpush1.msra.mxu0 %v2798
    %6426 = vmatprep.subr.mxu0 0.0
    %6427 = vmatpush1.msra.mxu0 %v2799
    %6428 = vmatprep.mubr.f32.mxu0 %v5925
    %6429 = vmatmul.mubr.f32.gmra.mrb[0].mxu0 %v5924
    %v6430 = vpop.f32.mrb[0].mxu0
    %v6431 = vadd.f32 %v6361, %v6430
    %v6432 = vpop.f32.mrb[0].mxu0
    %6433 = vdwg.mxu0
    %6434 = vmatprep.subr.mxu0 0.0
    %6435 = vmatpush1.msra.mxu0 %v2800
    %6436 = vmatprep.subr.mxu0 0.0
    %6437 = vmatpush1.msra.mxu0 %v2801
    %6438 = vmatprep.subr.mxu0 0.0
    %6439 = vmatpush1.msra.mxu0 %v2802
    %6440 = vmatprep.subr.mxu0 0.0
    %6441 = vmatpush1.msra.mxu0 %v2803
    %6442 = vmatprep.subr.mxu0 0.0
    %6443 = vmatpush1.msra.mxu0 %v2804
    %6444 = vmatprep.subr.mxu0 0.0
    %6445 = vmatpush1.msra.mxu0 %v2805
    %6446 = vmatprep.subr.mxu0 0.0
    %6447 = vmatpush1.msra.mxu0 %v2806
    %6448 = vmatprep.subr.mxu0 0.0
    %6449 = vmatpush1.msra.mxu0 %v2807
    %6450 = vmatprep.subr.mxu0 0.0
    %6451 = vmatpush1.msra.mxu0 %v2808
    %6452 = vmatprep.subr.mxu0 0.0
    %6453 = vmatpush1.msra.mxu0 %v2809
    %6454 = vmatprep.subr.mxu0 0.0
    %6455 = vmatpush1.msra.mxu0 %v2810
    %6456 = vmatprep.subr.mxu0 0.0
    %6457 = vmatpush1.msra.mxu0 %v2811
    %6458 = vmatprep.subr.mxu0 0.0
    %6459 = vmatpush1.msra.mxu0 %v2812
    %6460 = vmatprep.subr.mxu0 0.0
    %6461 = vmatpush1.msra.mxu0 %v2813
    %6462 = vmatprep.subr.mxu0 0.0
    %6463 = vmatpush1.msra.mxu0 %v2814
    %6464 = vmatprep.subr.mxu0 0.0
    %6465 = vmatpush1.msra.mxu0 %v2815
    %6466 = vmatprep.subr.mxu0 0.0
    %6467 = vmatpush1.msra.mxu0 %v2816
    %6468 = vmatprep.subr.mxu0 0.0
    %6469 = vmatpush1.msra.mxu0 %v2817
    %6470 = vmatprep.subr.mxu0 0.0
    %6471 = vmatpush1.msra.mxu0 %v2818
    %6472 = vmatprep.subr.mxu0 0.0
    %6473 = vmatpush1.msra.mxu0 %v2819
    %6474 = vmatprep.subr.mxu0 0.0
    %6475 = vmatpush1.msra.mxu0 %v2820
    %6476 = vmatprep.subr.mxu0 0.0
    %6477 = vmatpush1.msra.mxu0 %v2821
    %6478 = vmatprep.subr.mxu0 0.0
    %6479 = vmatpush1.msra.mxu0 %v2822
    %6480 = vmatprep.subr.mxu0 0.0
    %6481 = vmatpush1.msra.mxu0 %v2823
    %6482 = vmatprep.subr.mxu0 0.0
    %6483 = vmatpush1.msra.mxu0 %v2824
    %6484 = vmatprep.subr.mxu0 0.0
    %6485 = vmatpush1.msra.mxu0 %v2825
    %6486 = vmatprep.subr.mxu0 0.0
    %6487 = vmatpush1.msra.mxu0 %v2826
    %6488 = vmatprep.subr.mxu0 0.0
    %6489 = vmatpush1.msra.mxu0 %v2827
    %6490 = vmatprep.subr.mxu0 0.0
    %6491 = vmatpush1.msra.mxu0 %v2828
    %6492 = vmatprep.subr.mxu0 0.0
    %6493 = vmatpush1.msra.mxu0 %v2829
    %6494 = vmatprep.subr.mxu0 0.0
    %6495 = vmatpush1.msra.mxu0 %v2830
    %6496 = vmatprep.subr.mxu0 0.0
    %6497 = vmatpush1.msra.mxu0 %v2831
    %6498 = vmatprep.mubr.f32.mxu0 %v5927
    %6499 = vmatmul.mubr.f32.gmra.mrb[0].mxu0 %v5926
    %v6500 = vpop.f32.mrb[0].mxu0
    %v6501 = vadd.f32 %v6431, %v6500
    %v6502 = vpop.f32.mrb[0].mxu0
    %6503 = vdwg.mxu0
    %6504 = vst [vmem:[#allocation2] sm:$0x3] %v6501
    // Predicated region
    $region14: #{tpu_custom_call.1} parent=1 // pred_check
      _
    $region15: #{tpu_custom_call.1} parent=1 // pred_check_branch
      %6506 = sbr.rel (0) target = $region17
    $region16: #{tpu_custom_call.1} parent=1 // pred_region
      %s6508 = ssub.s32 32, 32
      %6509 = vsyncadd [#allocation3], %s6508
      %s6511 = sshll.u32 [#allocation2], 4
      %s6512 = int_to_ptr.vmem [resolvable:$true] %s6511
      %6514 = dma.vmem_to_hbm [thread:$0]  %s6512, 32, %s3, [#allocation3]
    $region17: #{tpu_custom_call.1} parent=1 // pred_fallthru
      _
    // Predicated region
    $region18: #{tpu_custom_call.1} parent=1 // pred_check
      _
    $region19: #{tpu_custom_call.1} parent=1 // pred_check_branch
      %6516 = sbr.rel (0) target = $region21
    $region20: #{tpu_custom_call.1} parent=1 // pred_region
      %6517 = dma.done [#allocation3], 32
    $region21: #{tpu_custom_call.1} parent=1 // pred_fallthru
      _
    %6518 = vsyncpa [#allocation3], 1

</llo_original>
